<compile_context>
chip_gen: v5e
topology: v5e:2x2
jax: 0.10.0
libtpu: 0.0.40
codegen_flags: <defaults>
</compile_context>

<pallas_src>
import functools

import jax
import jax.numpy as jnp
from jax.experimental import pallas as pl
from jax.experimental.pallas import tpu as pltpu

# ---- configuration ----------------------------------------------------------
SRC_LEN, TGT_LEN = 10, 8
BATCH = 8
EMB = 16
HID = 32                    # 4*HID == 128 -> packed gates fill one lane group
SRC_VOCAB = 20
TGT_VOCAB = 24
VPAD = 128                  # logits lane-padded to a full 128-lane group


# ---- Pallas kernels ---------------------------------------------------------
def _encoder_kernel(emb_ref, wx_ref, wh_ref, b_ref, h_ref):
    """Full GRU recurrence for ONE encoder direction (grid axis d).

    emb_ref: (S, B, E) time-major embedded inputs for this direction
             (already time-reversed for the backward direction).
    wx_ref : (E, 4H)   packed input->gates  weights [ r | z | n_x | 0   ]
    wh_ref : (H, 4H)   packed hidden->gates weights [ r | z | 0   | n_h ]
    b_ref  : (1, 4H)   merged biases
    h_ref  : (B, H)    output = final hidden state (also the recurrent carry).
    """
    H = h_ref.shape[-1]
    h_ref[...] = jnp.zeros_like(h_ref)
    wx = wx_ref[...]          # weights loaded once, resident for all timesteps
    wh = wh_ref[...]
    b = b_ref[...]

    @pl.loop(0, emb_ref.shape[0], unroll=True)
    def _(t):
        x = emb_ref[t]                                  # (B, E)
        h = h_ref[...]                                  # (B, H)
        g = (jnp.dot(x, wx, preferred_element_type=jnp.float32)
             + jnp.dot(h, wh, preferred_element_type=jnp.float32)
             + b)                                       # (B, 4H) one lane group
        r = jax.nn.sigmoid(g[:, 0:H])
        z = jax.nn.sigmoid(g[:, H:2 * H])
        n = jnp.tanh(g[:, 2 * H:3 * H] + r * g[:, 3 * H:4 * H])
        h_ref[...] = (1.0 - z) * n + z * h


def _decoder_kernel(tfx_ref, h0_ref, emb_ref, wx_ref, wh_ref, b_ref,
                    wo_ref, bo_ref, logits_ref, h_scr, x_scr, *, teacher_force):
    """Fused decoder: (T-1) x (GRU step + vocab projection) in ONE kernel.

    tfx_ref   : (T-1, B, E)    teacher-forced input embeddings (embed(tgt[:-1]))
    h0_ref    : (B, H)         initial hidden (averaged encoder directions)
    emb_ref   : (VPAD, E)      padded decoder embedding table (greedy-feed path)
    wx/wh/b   : packed GRU weights, same layout as the encoder
    wo_ref    : (H, VPAD)      output projection (vocab padded to 128 lanes)
    bo_ref    : (1, VPAD)      output bias (-1e9 in padding lanes)
    logits_ref: (T-1, B, VPAD) output slab, one lane-dense store per step
    h_scr     : VMEM (B, H)    recurrent hidden state
    x_scr     : VMEM (B, E)    next input embedding (greedy-feed path only)
    """
    H = h_scr.shape[-1]
    h_scr[...] = h0_ref[...]
    if not teacher_force:
        x_scr[...] = tfx_ref[0]          # first decoder input is always tgt[0]
    wx = wx_ref[...]
    wh = wh_ref[...]
    b = b_ref[...]
    wo = wo_ref[...]
    bo = bo_ref[...]

    @pl.loop(0, tfx_ref.shape[0], unroll=True)
    def _(t):
        x = tfx_ref[t] if teacher_force else x_scr[...]
        h = h_scr[...]
        g = (jnp.dot(x, wx, preferred_element_type=jnp.float32)
             + jnp.dot(h, wh, preferred_element_type=jnp.float32)
             + b)
        r = jax.nn.sigmoid(g[:, 0:H])
        z = jax.nn.sigmoid(g[:, H:2 * H])
        n = jnp.tanh(g[:, 2 * H:3 * H] + r * g[:, 3 * H:4 * H])
        h_new = (1.0 - z) * n + z * h
        h_scr[...] = h_new
        logits = jnp.dot(h_new, wo, preferred_element_type=jnp.float32) + bo
        logits_ref[t] = logits                           # (B, VPAD) dense store
        if not teacher_force:
            # greedy feed: embedding of the (first) argmax via one-hot @ table.
            lane = jax.lax.broadcasted_iota(jnp.int32, logits.shape, 1)
            mx = jnp.max(logits, axis=-1, keepdims=True)
            first = jnp.min(jnp.where(logits == mx, lane, logits.shape[-1]),
                            axis=-1, keepdims=True)
            onehot = (lane == first).astype(jnp.float32)
            x_scr[...] = jnp.dot(onehot, emb_ref[...],
                                 preferred_element_type=jnp.float32)


# ---- pallas_call wrappers ---------------------------------------------------
def _run_encoder(emb_bi, wx, wh, b):
    """emb_bi: (2, S, B, E); weights stacked per direction."""
    D, S, B, E = emb_bi.shape
    H = wh.shape[1]
    G = wx.shape[-1]
    return pl.pallas_call(
        _encoder_kernel,
        grid=(D,),
        out_shape=jax.ShapeDtypeStruct((D, B, H), jnp.float32),
        in_specs=[
            pl.BlockSpec((None, S, B, E), lambda d: (d, 0, 0, 0)),
            pl.BlockSpec((None, E, G), lambda d: (d, 0, 0)),
            pl.BlockSpec((None, H, G), lambda d: (d, 0, 0)),
            pl.BlockSpec((None, 1, G), lambda d: (d, 0, 0)),
        ],
        out_specs=pl.BlockSpec((None, B, H), lambda d: (d, 0, 0)),
        compiler_params=pltpu.CompilerParams(dimension_semantics=("parallel",)),
    )(emb_bi, wx, wh, b)


def _run_decoder(tfx, h0, emb_pad, wx, wh, b, wo, bo, teacher_force):
    T1, B, E = tfx.shape
    H = h0.shape[-1]
    VP = wo.shape[-1]
    return pl.pallas_call(
        functools.partial(_decoder_kernel, teacher_force=teacher_force),
        out_shape=jax.ShapeDtypeStruct((T1, B, VP), jnp.float32),
        scratch_shapes=[pltpu.VMEM((B, H), jnp.float32),
                        pltpu.VMEM((B, E), jnp.float32)],
    )(tfx, h0, emb_pad, wx, wh, b, wo, bo)


# ---- parameter init + packing ----------------------------------------------
def _pack_gru(wih, whh, bih, bhh):
    """Pack PyTorch-layout GRU weights (gate order r,z,n; wih:(E,3H), whh:(H,3H))
    into the 4-gate kernel layout [ r | z | n_x | n_h ] (width 4H == 128)."""
    E, H = wih.shape[0], whh.shape[0]
    G = 4 * H
    wx = jnp.zeros((E, G), jnp.float32).at[:, :3 * H].set(wih)
    wh = (jnp.zeros((H, G), jnp.float32)
          .at[:, :2 * H].set(whh[:, :2 * H])
          .at[:, 3 * H:].set(whh[:, 2 * H:]))
    b = (jnp.zeros((1, G), jnp.float32)
         .at[:, :2 * H].set(bih[:, :2 * H] + bhh[:, :2 * H])
         .at[:, 2 * H:3 * H].set(bih[:, 2 * H:])
         .at[:, 3 * H:].set(bhh[:, 2 * H:]))
    return wx, wh, b


def init_params(key):
    """Returns (kernel_params, natural_params); natural_params feed the
    pure-JAX reference used for the correctness check."""
    ks = jax.random.split(key, 12)
    s = 0.1
    nat = {}
    nat["enc_emb"] = (jax.random.normal(ks[0], (SRC_VOCAB, EMB)) * s).astype(jnp.float32)
    nat["dec_emb"] = (jax.random.normal(ks[1], (TGT_VOCAB, EMB)) * s).astype(jnp.float32)
    for i, name in enumerate(["enc_f", "enc_b", "dec"]):
        nat[f"{name}_wih"] = (jax.random.normal(ks[2 + 3 * i], (EMB, 3 * HID)) * s).astype(jnp.float32)
        nat[f"{name}_whh"] = (jax.random.normal(ks[3 + 3 * i], (HID, 3 * HID)) * s).astype(jnp.float32)
        nat[f"{name}_bih"] = jnp.zeros((1, 3 * HID), jnp.float32)
        nat[f"{name}_bhh"] = jnp.zeros((1, 3 * HID), jnp.float32)
    nat["out_w"] = (jax.random.normal(ks[11], (HID, TGT_VOCAB)) * s).astype(jnp.float32)
    nat["out_b"] = jnp.zeros((1, TGT_VOCAB), jnp.float32)

    packed = {n: _pack_gru(nat[f"{n}_wih"], nat[f"{n}_whh"],
                           nat[f"{n}_bih"], nat[f"{n}_bhh"])
              for n in ["enc_f", "enc_b", "dec"]}
    params = {
        "enc_emb": nat["enc_emb"],
        "dec_emb": nat["dec_emb"],
        "dec_emb_pad": jnp.zeros((VPAD, EMB), jnp.float32).at[:TGT_VOCAB].set(nat["dec_emb"]),
        "enc_wx": jnp.stack([packed["enc_f"][0], packed["enc_b"][0]], axis=0),
        "enc_wh": jnp.stack([packed["enc_f"][1], packed["enc_b"][1]], axis=0),
        "enc_b": jnp.stack([packed["enc_f"][2], packed["enc_b"][2]], axis=0),
        "dec_wx": packed["dec"][0],
        "dec_wh": packed["dec"][1],
        "dec_b": packed["dec"][2],
        "out_w_pad": jnp.zeros((HID, VPAD), jnp.float32).at[:, :TGT_VOCAB].set(nat["out_w"]),
        # -1e9 in padding lanes so the in-kernel greedy argmax never picks them
        "out_b_pad": jnp.full((1, VPAD), -1e9, jnp.float32).at[:, :TGT_VOCAB].set(nat["out_b"]),
    }
    return params, nat


# ---- forward pass (2 pallas_calls total) ------------------------------------
@functools.partial(jax.jit, static_argnames=("teacher_forcing_ratio",))
def encoder_decoder_forward(src, tgt, params, teacher_forcing_ratio=1.0):
    """Mirrors EncoderDecoder.forward: returns (tgt_len, batch, tgt_vocab)."""
    S, B = src.shape
    T, _ = tgt.shape

    # encoder: one fused call over the direction axis
    emb = jnp.take(params["enc_emb"], src, axis=0)           # (S, B, E)
    emb_bi = jnp.stack([emb, emb[::-1]], axis=0)             # (2, S, B, E)
    enc_h = _run_encoder(emb_bi, params["enc_wx"], params["enc_wh"],
                         params["enc_b"])                    # (2, B, H)
    # bidirectional + non-LSTM branch: average fwd/bwd final hidden states
    dec_h0 = (enc_h[0] + enc_h[1]) * 0.5                     # (B, H)

    # decoder: one fused call over all T-1 steps
    # TODO(synk): torch.rand(1) teacher-forcing coin flip replaced by a static
    # comparison against 0.5 (ratio=1.0 -> always teacher force).
    teacher_force = teacher_forcing_ratio > 0.5
    tfx = jnp.take(params["dec_emb"], tgt[:-1], axis=0)      # (T-1, B, E)
    logits_pad = _run_decoder(tfx, dec_h0, params["dec_emb_pad"],
                              params["dec_wx"], params["dec_wh"], params["dec_b"],
                              params["out_w_pad"], params["out_b_pad"],
                              teacher_force)                 # (T-1, B, VPAD)
    logits = logits_pad[:, :, :TGT_VOCAB]
    out0 = jnp.zeros((1, B, TGT_VOCAB), jnp.float32)         # outputs[0] stays 0
    return jnp.concatenate([out0, logits], axis=0)


# ---- pure-JAX reference (PyTorch GRU semantics) for the correctness check ---
def _gru_cell_ref(x, h, wih, whh, bih, bhh):
    H = h.shape[-1]
    gi = x @ wih + bih
    gh = h @ whh + bhh
    r = jax.nn.sigmoid(gi[:, :H] + gh[:, :H])
    z = jax.nn.sigmoid(gi[:, H:2 * H] + gh[:, H:2 * H])
    n = jnp.tanh(gi[:, 2 * H:] + r * gh[:, 2 * H:])
    return (1.0 - z) * n + z * h


def forward_reference(src, tgt, nat, teacher_forcing_ratio=1.0):
    emb = jnp.take(nat["enc_emb"], src, axis=0)
    B = src.shape[1]
    h_f = jnp.zeros((B, HID), jnp.float32)
    h_b = jnp.zeros((B, HID), jnp.float32)
    for t in range(src.shape[0]):
        h_f = _gru_cell_ref(emb[t], h_f, nat["enc_f_wih"], nat["enc_f_whh"],
                            nat["enc_f_bih"], nat["enc_f_bhh"])
    for t in reversed(range(src.shape[0])):
        h_b = _gru_cell_ref(emb[t], h_b, nat["enc_b_wih"], nat["enc_b_whh"],
                            nat["enc_b_bih"], nat["enc_b_bhh"])
    h = (h_f + h_b) * 0.5
    outs = [jnp.zeros((B, TGT_VOCAB), jnp.float32)]
    tok = tgt[0]
    teacher_force = teacher_forcing_ratio > 0.5
    for t in range(1, tgt.shape[0]):
        x = jnp.take(nat["dec_emb"], tok, axis=0)
        h = _gru_cell_ref(x, h, nat["dec_wih"], nat["dec_whh"],
                          nat["dec_bih"], nat["dec_bhh"])
        logits = h @ nat["out_w"] + nat["out_b"]
        outs.append(logits)
        tok = tgt[t] if teacher_force else jnp.argmax(logits, -1).astype(tgt.dtype)
    return jnp.stack(outs, axis=0)


# ---- main -------------------------------------------------------------------
if __name__ == "__main__":
    key = jax.random.PRNGKey(0)
    kp, ks, kt = jax.random.split(key, 3)
    params, nat = init_params(kp)
    src = jax.random.randint(ks, (SRC_LEN, BATCH), 0, SRC_VOCAB, dtype=jnp.int32)
    tgt = jax.random.randint(kt, (TGT_LEN, BATCH), 0, TGT_VOCAB, dtype=jnp.int32)

    out = encoder_decoder_forward(src, tgt, params, teacher_forcing_ratio=1.0)
    jax.block_until_ready(out)
    assert out.shape == (TGT_LEN, BATCH, TGT_VOCAB), out.shape
    assert bool(jnp.all(out[0] == 0.0))            # outputs[0] never written
    assert bool(jnp.all(jnp.isfinite(out)))

    ref = forward_reference(src, tgt, nat, teacher_forcing_ratio=1.0)
    assert bool(jnp.allclose(out, ref, rtol=5e-2, atol=5e-3)), \
        float(jnp.max(jnp.abs(out - ref)))
    print("KERNEL_OK")
</pallas_src>

<mosaic_0001>
module attributes {stable_mosaic.version = 11 : i64} {
  func.func @_encoder_kernel(%arg0: i32, %arg1: memref<1x10x8x16xf32, #tpu.memory_space<vmem>>, %arg2: memref<1x16x128xf32, #tpu.memory_space<vmem>>, %arg3: memref<1x32x128xf32, #tpu.memory_space<vmem>>, %arg4: memref<1x1x128xf32, #tpu.memory_space<vmem>>, %arg5: memref<1x8x32xf32, #tpu.memory_space<vmem>>) attributes {dimension_semantics = [#tpu.dimension_semantics<parallel>], iteration_bounds = array<i64: 2>, scalar_prefetch = 0 : i64, scratch_operands = 0 : i64, tpu.core_type = #tpu.core_type<tc>, window_params = [{transform_indices = @transform_0, window_bounds = array<i64: 1, 10, 8, 16>}, {transform_indices = @transform_1, window_bounds = array<i64: 1, 16, 128>}, {transform_indices = @transform_2, window_bounds = array<i64: 1, 32, 128>}, {transform_indices = @transform_3, window_bounds = array<i64: 1, 1, 128>}, {transform_indices = @transform_4, window_bounds = array<i64: 1, 8, 32>}]} {
    %cst = arith.constant 0.000000e+00 : f32
    %0 = vector.broadcast %cst : f32 to vector<8x32xf32>
    %c0 = arith.constant 0 : index
    %c0_0 = arith.constant 0 : index
    %c0_1 = arith.constant 0 : index
    %1 = vector.load %arg5[%c0, %c0_0, %c0_1] : memref<1x8x32xf32, #tpu.memory_space<vmem>>, vector<1x8x32xf32>
    %2 = vector.shape_cast %1 : vector<1x8x32xf32> to vector<8x32xf32>
    %3 = vector.shape_cast %0 : vector<8x32xf32> to vector<1x8x32xf32>
    tpu.vector_store %arg5[%c0, %c0_0, %c0_1], %3 {strides = array<i32>} : memref<1x8x32xf32, #tpu.memory_space<vmem>>, vector<1x8x32xf32>,
    %c0_2 = arith.constant 0 : index
    %c0_3 = arith.constant 0 : index
    %c0_4 = arith.constant 0 : index
    %4 = vector.load %arg2[%c0_2, %c0_3, %c0_4] : memref<1x16x128xf32, #tpu.memory_space<vmem>>, vector<1x16x128xf32>
    %5 = vector.shape_cast %4 : vector<1x16x128xf32> to vector<16x128xf32>
    %c0_5 = arith.constant 0 : index
    %c0_6 = arith.constant 0 : index
    %c0_7 = arith.constant 0 : index
    %6 = vector.load %arg3[%c0_5, %c0_6, %c0_7] : memref<1x32x128xf32, #tpu.memory_space<vmem>>, vector<1x32x128xf32>
    %7 = vector.shape_cast %6 : vector<1x32x128xf32> to vector<32x128xf32>
    %c0_8 = arith.constant 0 : index
    %c0_9 = arith.constant 0 : index
    %c0_10 = arith.constant 0 : index
    %8 = vector.load %arg4[%c0_8, %c0_9, %c0_10] : memref<1x1x128xf32, #tpu.memory_space<vmem>>, vector<1x1x128xf32>
    %9 = vector.shape_cast %8 : vector<1x1x128xf32> to vector<1x128xf32>
    %c0_i32 = arith.constant 0 : i32
    %c1_i32 = arith.constant 1 : i32
    %10 = arith.muli %c0_i32, %c1_i32 : i32
    %c0_i32_11 = arith.constant 0 : i32
    %11 = arith.addi %c0_i32_11, %10 : i32
    %c0_12 = arith.constant 0 : index
    %12 = arith.index_cast %11 : i32 to index
    %c0_13 = arith.constant 0 : index
    %c0_14 = arith.constant 0 : index
    %13 = vector.load %arg1[%c0_12, %12, %c0_13, %c0_14] : memref<1x10x8x16xf32, #tpu.memory_space<vmem>>, vector<1x1x8x16xf32>
    %14 = vector.shape_cast %13 : vector<1x1x8x16xf32> to vector<8x16xf32>
    %c0_15 = arith.constant 0 : index
    %c0_16 = arith.constant 0 : index
    %c0_17 = arith.constant 0 : index
    %15 = vector.load %arg5[%c0_15, %c0_16, %c0_17] : memref<1x8x32xf32, #tpu.memory_space<vmem>>, vector<1x8x32xf32>
    %16 = vector.shape_cast %15 : vector<1x8x32xf32> to vector<8x32xf32>
    %cst_18 = arith.constant dense<0.000000e+00> : vector<8x128xf32>
    %17 = tpu.matmul %14, %5, %cst_18 {dimension_numbers = #tpu.dot_dimension_numbers<[1], [0], [0], [1], [0, 0, 1, 1], [], []>} : vector<8x16xf32>, vector<16x128xf32>, vector<8x128xf32> -> vector<8x128xf32>
    %cst_19 = arith.constant dense<0.000000e+00> : vector<8x128xf32>
    %18 = tpu.matmul %16, %7, %cst_19 {dimension_numbers = #tpu.dot_dimension_numbers<[1], [0], [0], [1], [0, 0, 1, 1], [], []>} : vector<8x32xf32>, vector<32x128xf32>, vector<8x128xf32> -> vector<8x128xf32>
    %19 = arith.addf %17, %18 : vector<8x128xf32>
    %20 = vector.broadcast %9 : vector<1x128xf32> to vector<8x128xf32>
    %21 = arith.addf %19, %20 : vector<8x128xf32>
    %22 = vector.extract_strided_slice %21 {offsets = [0, 0], sizes = [8, 32], strides = [1, 1]} : vector<8x128xf32> to vector<8x32xf32>
    %23 = arith.negf %22 : vector<8x32xf32>
    %24 = math.exp %23 : vector<8x32xf32>
    %cst_20 = arith.constant 1.000000e+00 : f32
    %25 = vector.broadcast %cst_20 : f32 to vector<8x32xf32>
    %26 = arith.addf %25, %24 : vector<8x32xf32>
    %27 = arith.divf %25, %26 : vector<8x32xf32>
    %28 = vector.extract_strided_slice %21 {offsets = [0, 32], sizes = [8, 32], strides = [1, 1]} : vector<8x128xf32> to vector<8x32xf32>
    %29 = arith.negf %28 : vector<8x32xf32>
    %30 = math.exp %29 : vector<8x32xf32>
    %cst_21 = arith.constant 1.000000e+00 : f32
    %31 = vector.broadcast %cst_21 : f32 to vector<8x32xf32>
    %32 = arith.addf %31, %30 : vector<8x32xf32>
    %33 = arith.divf %31, %32 : vector<8x32xf32>
    %34 = vector.extract_strided_slice %21 {offsets = [0, 64], sizes = [8, 32], strides = [1, 1]} : vector<8x128xf32> to vector<8x32xf32>
    %35 = vector.extract_strided_slice %21 {offsets = [0, 96], sizes = [8, 32], strides = [1, 1]} : vector<8x128xf32> to vector<8x32xf32>
    %36 = arith.mulf %27, %35 : vector<8x32xf32>
    %37 = arith.addf %34, %36 : vector<8x32xf32>
    %38 = math.tanh %37 : vector<8x32xf32>
    %cst_22 = arith.constant 1.000000e+00 : f32
    %39 = vector.broadcast %cst_22 : f32 to vector<8x32xf32>
    %40 = arith.subf %39, %33 : vector<8x32xf32>
    %41 = arith.mulf %40, %38 : vector<8x32xf32>
    %42 = arith.mulf %33, %16 : vector<8x32xf32>
    %43 = arith.addf %41, %42 : vector<8x32xf32>
    %c0_23 = arith.constant 0 : index
    %c0_24 = arith.constant 0 : index
    %c0_25 = arith.constant 0 : index
    %44 = vector.load %arg5[%c0_23, %c0_24, %c0_25] : memref<1x8x32xf32, #tpu.memory_space<vmem>>, vector<1x8x32xf32>
    %45 = vector.shape_cast %44 : vector<1x8x32xf32> to vector<8x32xf32>
    %46 = vector.shape_cast %43 : vector<8x32xf32> to vector<1x8x32xf32>
    tpu.vector_store %arg5[%c0_23, %c0_24, %c0_25], %46 {strides = array<i32>} : memref<1x8x32xf32, #tpu.memory_space<vmem>>, vector<1x8x32xf32>,
    %c1_i32_26 = arith.constant 1 : i32
    %c1_i32_27 = arith.constant 1 : i32
    %47 = arith.muli %c1_i32_26, %c1_i32_27 : i32
    %c0_i32_28 = arith.constant 0 : i32
    %48 = arith.addi %c0_i32_28, %47 : i32
    %c0_29 = arith.constant 0 : index
    %49 = arith.index_cast %48 : i32 to index
    %c0_30 = arith.constant 0 : index
    %c0_31 = arith.constant 0 : index
    %50 = vector.load %arg1[%c0_29, %49, %c0_30, %c0_31] : memref<1x10x8x16xf32, #tpu.memory_space<vmem>>, vector<1x1x8x16xf32>
    %51 = vector.shape_cast %50 : vector<1x1x8x16xf32> to vector<8x16xf32>
    %c0_32 = arith.constant 0 : index
    %c0_33 = arith.constant 0 : index
    %c0_34 = arith.constant 0 : index
    %52 = vector.load %arg5[%c0_32, %c0_33, %c0_34] : memref<1x8x32xf32, #tpu.memory_space<vmem>>, vector<1x8x32xf32>
    %53 = vector.shape_cast %52 : vector<1x8x32xf32> to vector<8x32xf32>
    %cst_35 = arith.constant dense<0.000000e+00> : vector<8x128xf32>
    %54 = tpu.matmul %51, %5, %cst_35 {dimension_numbers = #tpu.dot_dimension_numbers<[1], [0], [0], [1], [0, 0, 1, 1], [], []>} : vector<8x16xf32>, vector<16x128xf32>, vector<8x128xf32> -> vector<8x128xf32>
    %cst_36 = arith.constant dense<0.000000e+00> : vector<8x128xf32>
    %55 = tpu.matmul %53, %7, %cst_36 {dimension_numbers = #tpu.dot_dimension_numbers<[1], [0], [0], [1], [0, 0, 1, 1], [], []>} : vector<8x32xf32>, vector<32x128xf32>, vector<8x128xf32> -> vector<8x128xf32>
    %56 = arith.addf %54, %55 : vector<8x128xf32>
    %57 = vector.broadcast %9 : vector<1x128xf32> to vector<8x128xf32>
    %58 = arith.addf %56, %57 : vector<8x128xf32>
    %59 = vector.extract_strided_slice %58 {offsets = [0, 0], sizes = [8, 32], strides = [1, 1]} : vector<8x128xf32> to vector<8x32xf32>
    %60 = arith.negf %59 : vector<8x32xf32>
    %61 = math.exp %60 : vector<8x32xf32>
    %cst_37 = arith.constant 1.000000e+00 : f32
    %62 = vector.broadcast %cst_37 : f32 to vector<8x32xf32>
    %63 = arith.addf %62, %61 : vector<8x32xf32>
    %64 = arith.divf %62, %63 : vector<8x32xf32>
    %65 = vector.extract_strided_slice %58 {offsets = [0, 32], sizes = [8, 32], strides = [1, 1]} : vector<8x128xf32> to vector<8x32xf32>
    %66 = arith.negf %65 : vector<8x32xf32>
    %67 = math.exp %66 : vector<8x32xf32>
    %cst_38 = arith.constant 1.000000e+00 : f32
    %68 = vector.broadcast %cst_38 : f32 to vector<8x32xf32>
    %69 = arith.addf %68, %67 : vector<8x32xf32>
    %70 = arith.divf %68, %69 : vector<8x32xf32>
    %71 = vector.extract_strided_slice %58 {offsets = [0, 64], sizes = [8, 32], strides = [1, 1]} : vector<8x128xf32> to vector<8x32xf32>
    %72 = vector.extract_strided_slice %58 {offsets = [0, 96], sizes = [8, 32], strides = [1, 1]} : vector<8x128xf32> to vector<8x32xf32>
    %73 = arith.mulf %64, %72 : vector<8x32xf32>
    %74 = arith.addf %71, %73 : vector<8x32xf32>
    %75 = math.tanh %74 : vector<8x32xf32>
    %cst_39 = arith.constant 1.000000e+00 : f32
    %76 = vector.broadcast %cst_39 : f32 to vector<8x32xf32>
    %77 = arith.subf %76, %70 : vector<8x32xf32>
    %78 = arith.mulf %77, %75 : vector<8x32xf32>
    %79 = arith.mulf %70, %53 : vector<8x32xf32>
    %80 = arith.addf %78, %79 : vector<8x32xf32>
    %c0_40 = arith.constant 0 : index
    %c0_41 = arith.constant 0 : index
    %c0_42 = arith.constant 0 : index
    %81 = vector.load %arg5[%c0_40, %c0_41, %c0_42] : memref<1x8x32xf32, #tpu.memory_space<vmem>>, vector<1x8x32xf32>
    %82 = vector.shape_cast %81 : vector<1x8x32xf32> to vector<8x32xf32>
    %83 = vector.shape_cast %80 : vector<8x32xf32> to vector<1x8x32xf32>
    tpu.vector_store %arg5[%c0_40, %c0_41, %c0_42], %83 {strides = array<i32>} : memref<1x8x32xf32, #tpu.memory_space<vmem>>, vector<1x8x32xf32>,
    %c2_i32 = arith.constant 2 : i32
    %c1_i32_43 = arith.constant 1 : i32
    %84 = arith.muli %c2_i32, %c1_i32_43 : i32
    %c0_i32_44 = arith.constant 0 : i32
    %85 = arith.addi %c0_i32_44, %84 : i32
    %c0_45 = arith.constant 0 : index
    %86 = arith.index_cast %85 : i32 to index
    %c0_46 = arith.constant 0 : index
    %c0_47 = arith.constant 0 : index
    %87 = vector.load %arg1[%c0_45, %86, %c0_46, %c0_47] : memref<1x10x8x16xf32, #tpu.memory_space<vmem>>, vector<1x1x8x16xf32>
    %88 = vector.shape_cast %87 : vector<1x1x8x16xf32> to vector<8x16xf32>
    %c0_48 = arith.constant 0 : index
    %c0_49 = arith.constant 0 : index
    %c0_50 = arith.constant 0 : index
    %89 = vector.load %arg5[%c0_48, %c0_49, %c0_50] : memref<1x8x32xf32, #tpu.memory_space<vmem>>, vector<1x8x32xf32>
    %90 = vector.shape_cast %89 : vector<1x8x32xf32> to vector<8x32xf32>
    %cst_51 = arith.constant dense<0.000000e+00> : vector<8x128xf32>
    %91 = tpu.matmul %88, %5, %cst_51 {dimension_numbers = #tpu.dot_dimension_numbers<[1], [0], [0], [1], [0, 0, 1, 1], [], []>} : vector<8x16xf32>, vector<16x128xf32>, vector<8x128xf32> -> vector<8x128xf32>
    %cst_52 = arith.constant dense<0.000000e+00> : vector<8x128xf32>
    %92 = tpu.matmul %90, %7, %cst_52 {dimension_numbers = #tpu.dot_dimension_numbers<[1], [0], [0], [1], [0, 0, 1, 1], [], []>} : vector<8x32xf32>, vector<32x128xf32>, vector<8x128xf32> -> vector<8x128xf32>
    %93 = arith.addf %91, %92 : vector<8x128xf32>
    %94 = vector.broadcast %9 : vector<1x128xf32> to vector<8x128xf32>
    %95 = arith.addf %93, %94 : vector<8x128xf32>
    %96 = vector.extract_strided_slice %95 {offsets = [0, 0], sizes = [8, 32], strides = [1, 1]} : vector<8x128xf32> to vector<8x32xf32>
    %97 = arith.negf %96 : vector<8x32xf32>
    %98 = math.exp %97 : vector<8x32xf32>
    %cst_53 = arith.constant 1.000000e+00 : f32
    %99 = vector.broadcast %cst_53 : f32 to vector<8x32xf32>
    %100 = arith.addf %99, %98 : vector<8x32xf32>
    %101 = arith.divf %99, %100 : vector<8x32xf32>
    %102 = vector.extract_strided_slice %95 {offsets = [0, 32], sizes = [8, 32], strides = [1, 1]} : vector<8x128xf32> to vector<8x32xf32>
    %103 = arith.negf %102 : vector<8x32xf32>
    %104 = math.exp %103 : vector<8x32xf32>
    %cst_54 = arith.constant 1.000000e+00 : f32
    %105 = vector.broadcast %cst_54 : f32 to vector<8x32xf32>
    %106 = arith.addf %105, %104 : vector<8x32xf32>
    %107 = arith.divf %105, %106 : vector<8x32xf32>
    %108 = vector.extract_strided_slice %95 {offsets = [0, 64], sizes = [8, 32], strides = [1, 1]} : vector<8x128xf32> to vector<8x32xf32>
    %109 = vector.extract_strided_slice %95 {offsets = [0, 96], sizes = [8, 32], strides = [1, 1]} : vector<8x128xf32> to vector<8x32xf32>
    %110 = arith.mulf %101, %109 : vector<8x32xf32>
    %111 = arith.addf %108, %110 : vector<8x32xf32>
    %112 = math.tanh %111 : vector<8x32xf32>
    %cst_55 = arith.constant 1.000000e+00 : f32
    %113 = vector.broadcast %cst_55 : f32 to vector<8x32xf32>
    %114 = arith.subf %113, %107 : vector<8x32xf32>
    %115 = arith.mulf %114, %112 : vector<8x32xf32>
    %116 = arith.mulf %107, %90 : vector<8x32xf32>
    %117 = arith.addf %115, %116 : vector<8x32xf32>
    %c0_56 = arith.constant 0 : index
    %c0_57 = arith.constant 0 : index
    %c0_58 = arith.constant 0 : index
    %118 = vector.load %arg5[%c0_56, %c0_57, %c0_58] : memref<1x8x32xf32, #tpu.memory_space<vmem>>, vector<1x8x32xf32>
    %119 = vector.shape_cast %118 : vector<1x8x32xf32> to vector<8x32xf32>
    %120 = vector.shape_cast %117 : vector<8x32xf32> to vector<1x8x32xf32>
    tpu.vector_store %arg5[%c0_56, %c0_57, %c0_58], %120 {strides = array<i32>} : memref<1x8x32xf32, #tpu.memory_space<vmem>>, vector<1x8x32xf32>,
    %c3_i32 = arith.constant 3 : i32
    %c1_i32_59 = arith.constant 1 : i32
    %121 = arith.muli %c3_i32, %c1_i32_59 : i32
    %c0_i32_60 = arith.constant 0 : i32
    %122 = arith.addi %c0_i32_60, %121 : i32
    %c0_61 = arith.constant 0 : index
    %123 = arith.index_cast %122 : i32 to index
    %c0_62 = arith.constant 0 : index
    %c0_63 = arith.constant 0 : index
    %124 = vector.load %arg1[%c0_61, %123, %c0_62, %c0_63] : memref<1x10x8x16xf32, #tpu.memory_space<vmem>>, vector<1x1x8x16xf32>
    %125 = vector.shape_cast %124 : vector<1x1x8x16xf32> to vector<8x16xf32>
    %c0_64 = arith.constant 0 : index
    %c0_65 = arith.constant 0 : index
    %c0_66 = arith.constant 0 : index
    %126 = vector.load %arg5[%c0_64, %c0_65, %c0_66] : memref<1x8x32xf32, #tpu.memory_space<vmem>>, vector<1x8x32xf32>
    %127 = vector.shape_cast %126 : vector<1x8x32xf32> to vector<8x32xf32>
    %cst_67 = arith.constant dense<0.000000e+00> : vector<8x128xf32>
    %128 = tpu.matmul %125, %5, %cst_67 {dimension_numbers = #tpu.dot_dimension_numbers<[1], [0], [0], [1], [0, 0, 1, 1], [], []>} : vector<8x16xf32>, vector<16x128xf32>, vector<8x128xf32> -> vector<8x128xf32>
    %cst_68 = arith.constant dense<0.000000e+00> : vector<8x128xf32>
    %129 = tpu.matmul %127, %7, %cst_68 {dimension_numbers = #tpu.dot_dimension_numbers<[1], [0], [0], [1], [0, 0, 1, 1], [], []>} : vector<8x32xf32>, vector<32x128xf32>, vector<8x128xf32> -> vector<8x128xf32>
    %130 = arith.addf %128, %129 : vector<8x128xf32>
    %131 = vector.broadcast %9 : vector<1x128xf32> to vector<8x128xf32>
    %132 = arith.addf %130, %131 : vector<8x128xf32>
    %133 = vector.extract_strided_slice %132 {offsets = [0, 0], sizes = [8, 32], strides = [1, 1]} : vector<8x128xf32> to vector<8x32xf32>
    %134 = arith.negf %133 : vector<8x32xf32>
    %135 = math.exp %134 : vector<8x32xf32>
    %cst_69 = arith.constant 1.000000e+00 : f32
    %136 = vector.broadcast %cst_69 : f32 to vector<8x32xf32>
    %137 = arith.addf %136, %135 : vector<8x32xf32>
    %138 = arith.divf %136, %137 : vector<8x32xf32>
    %139 = vector.extract_strided_slice %132 {offsets = [0, 32], sizes = [8, 32], strides = [1, 1]} : vector<8x128xf32> to vector<8x32xf32>
    %140 = arith.negf %139 : vector<8x32xf32>
    %141 = math.exp %140 : vector<8x32xf32>
    %cst_70 = arith.constant 1.000000e+00 : f32
    %142 = vector.broadcast %cst_70 : f32 to vector<8x32xf32>
    %143 = arith.addf %142, %141 : vector<8x32xf32>
    %144 = arith.divf %142, %143 : vector<8x32xf32>
    %145 = vector.extract_strided_slice %132 {offsets = [0, 64], sizes = [8, 32], strides = [1, 1]} : vector<8x128xf32> to vector<8x32xf32>
    %146 = vector.extract_strided_slice %132 {offsets = [0, 96], sizes = [8, 32], strides = [1, 1]} : vector<8x128xf32> to vector<8x32xf32>
    %147 = arith.mulf %138, %146 : vector<8x32xf32>
    %148 = arith.addf %145, %147 : vector<8x32xf32>
    %149 = math.tanh %148 : vector<8x32xf32>
    %cst_71 = arith.constant 1.000000e+00 : f32
    %150 = vector.broadcast %cst_71 : f32 to vector<8x32xf32>
    %151 = arith.subf %150, %144 : vector<8x32xf32>
    %152 = arith.mulf %151, %149 : vector<8x32xf32>
    %153 = arith.mulf %144, %127 : vector<8x32xf32>
    %154 = arith.addf %152, %153 : vector<8x32xf32>
    %c0_72 = arith.constant 0 : index
    %c0_73 = arith.constant 0 : index
    %c0_74 = arith.constant 0 : index
    %155 = vector.load %arg5[%c0_72, %c0_73, %c0_74] : memref<1x8x32xf32, #tpu.memory_space<vmem>>, vector<1x8x32xf32>
    %156 = vector.shape_cast %155 : vector<1x8x32xf32> to vector<8x32xf32>
    %157 = vector.shape_cast %154 : vector<8x32xf32> to vector<1x8x32xf32>
    tpu.vector_store %arg5[%c0_72, %c0_73, %c0_74], %157 {strides = array<i32>} : memref<1x8x32xf32, #tpu.memory_space<vmem>>, vector<1x8x32xf32>,
    %c4_i32 = arith.constant 4 : i32
    %c1_i32_75 = arith.constant 1 : i32
    %158 = arith.muli %c4_i32, %c1_i32_75 : i32
    %c0_i32_76 = arith.constant 0 : i32
    %159 = arith.addi %c0_i32_76, %158 : i32
    %c0_77 = arith.constant 0 : index
    %160 = arith.index_cast %159 : i32 to index
    %c0_78 = arith.constant 0 : index
    %c0_79 = arith.constant 0 : index
    %161 = vector.load %arg1[%c0_77, %160, %c0_78, %c0_79] : memref<1x10x8x16xf32, #tpu.memory_space<vmem>>, vector<1x1x8x16xf32>
    %162 = vector.shape_cast %161 : vector<1x1x8x16xf32> to vector<8x16xf32>
    %c0_80 = arith.constant 0 : index
    %c0_81 = arith.constant 0 : index
    %c0_82 = arith.constant 0 : index
    %163 = vector.load %arg5[%c0_80, %c0_81, %c0_82] : memref<1x8x32xf32, #tpu.memory_space<vmem>>, vector<1x8x32xf32>
    %164 = vector.shape_cast %163 : vector<1x8x32xf32> to vector<8x32xf32>
    %cst_83 = arith.constant dense<0.000000e+00> : vector<8x128xf32>
    %165 = tpu.matmul %162, %5, %cst_83 {dimension_numbers = #tpu.dot_dimension_numbers<[1], [0], [0], [1], [0, 0, 1, 1], [], []>} : vector<8x16xf32>, vector<16x128xf32>, vector<8x128xf32> -> vector<8x128xf32>
    %cst_84 = arith.constant dense<0.000000e+00> : vector<8x128xf32>
    %166 = tpu.matmul %164, %7, %cst_84 {dimension_numbers = #tpu.dot_dimension_numbers<[1], [0], [0], [1], [0, 0, 1, 1], [], []>} : vector<8x32xf32>, vector<32x128xf32>, vector<8x128xf32> -> vector<8x128xf32>
    %167 = arith.addf %165, %166 : vector<8x128xf32>
    %168 = vector.broadcast %9 : vector<1x128xf32> to vector<8x128xf32>
    %169 = arith.addf %167, %168 : vector<8x128xf32>
    %170 = vector.extract_strided_slice %169 {offsets = [0, 0], sizes = [8, 32], strides = [1, 1]} : vector<8x128xf32> to vector<8x32xf32>
    %171 = arith.negf %170 : vector<8x32xf32>
    %172 = math.exp %171 : vector<8x32xf32>
    %cst_85 = arith.constant 1.000000e+00 : f32
    %173 = vector.broadcast %cst_85 : f32 to vector<8x32xf32>
    %174 = arith.addf %173, %172 : vector<8x32xf32>
    %175 = arith.divf %173, %174 : vector<8x32xf32>
    %176 = vector.extract_strided_slice %169 {offsets = [0, 32], sizes = [8, 32], strides = [1, 1]} : vector<8x128xf32> to vector<8x32xf32>
    %177 = arith.negf %176 : vector<8x32xf32>
    %178 = math.exp %177 : vector<8x32xf32>
    %cst_86 = arith.constant 1.000000e+00 : f32
    %179 = vector.broadcast %cst_86 : f32 to vector<8x32xf32>
    %180 = arith.addf %179, %178 : vector<8x32xf32>
    %181 = arith.divf %179, %180 : vector<8x32xf32>
    %182 = vector.extract_strided_slice %169 {offsets = [0, 64], sizes = [8, 32], strides = [1, 1]} : vector<8x128xf32> to vector<8x32xf32>
    %183 = vector.extract_strided_slice %169 {offsets = [0, 96], sizes = [8, 32], strides = [1, 1]} : vector<8x128xf32> to vector<8x32xf32>
    %184 = arith.mulf %175, %183 : vector<8x32xf32>
    %185 = arith.addf %182, %184 : vector<8x32xf32>
    %186 = math.tanh %185 : vector<8x32xf32>
    %cst_87 = arith.constant 1.000000e+00 : f32
    %187 = vector.broadcast %cst_87 : f32 to vector<8x32xf32>
    %188 = arith.subf %187, %181 : vector<8x32xf32>
    %189 = arith.mulf %188, %186 : vector<8x32xf32>
    %190 = arith.mulf %181, %164 : vector<8x32xf32>
    %191 = arith.addf %189, %190 : vector<8x32xf32>
    %c0_88 = arith.constant 0 : index
    %c0_89 = arith.constant 0 : index
    %c0_90 = arith.constant 0 : index
    %192 = vector.load %arg5[%c0_88, %c0_89, %c0_90] : memref<1x8x32xf32, #tpu.memory_space<vmem>>, vector<1x8x32xf32>
    %193 = vector.shape_cast %192 : vector<1x8x32xf32> to vector<8x32xf32>
    %194 = vector.shape_cast %191 : vector<8x32xf32> to vector<1x8x32xf32>
    tpu.vector_store %arg5[%c0_88, %c0_89, %c0_90], %194 {strides = array<i32>} : memref<1x8x32xf32, #tpu.memory_space<vmem>>, vector<1x8x32xf32>,
    %c5_i32 = arith.constant 5 : i32
    %c1_i32_91 = arith.constant 1 : i32
    %195 = arith.muli %c5_i32, %c1_i32_91 : i32
    %c0_i32_92 = arith.constant 0 : i32
    %196 = arith.addi %c0_i32_92, %195 : i32
    %c0_93 = arith.constant 0 : index
    %197 = arith.index_cast %196 : i32 to index
    %c0_94 = arith.constant 0 : index
    %c0_95 = arith.constant 0 : index
    %198 = vector.load %arg1[%c0_93, %197, %c0_94, %c0_95] : memref<1x10x8x16xf32, #tpu.memory_space<vmem>>, vector<1x1x8x16xf32>
    %199 = vector.shape_cast %198 : vector<1x1x8x16xf32> to vector<8x16xf32>
    %c0_96 = arith.constant 0 : index
    %c0_97 = arith.constant 0 : index
    %c0_98 = arith.constant 0 : index
    %200 = vector.load %arg5[%c0_96, %c0_97, %c0_98] : memref<1x8x32xf32, #tpu.memory_space<vmem>>, vector<1x8x32xf32>
    %201 = vector.shape_cast %200 : vector<1x8x32xf32> to vector<8x32xf32>
    %cst_99 = arith.constant dense<0.000000e+00> : vector<8x128xf32>
    %202 = tpu.matmul %199, %5, %cst_99 {dimension_numbers = #tpu.dot_dimension_numbers<[1], [0], [0], [1], [0, 0, 1, 1], [], []>} : vector<8x16xf32>, vector<16x128xf32>, vector<8x128xf32> -> vector<8x128xf32>
    %cst_100 = arith.constant dense<0.000000e+00> : vector<8x128xf32>
    %203 = tpu.matmul %201, %7, %cst_100 {dimension_numbers = #tpu.dot_dimension_numbers<[1], [0], [0], [1], [0, 0, 1, 1], [], []>} : vector<8x32xf32>, vector<32x128xf32>, vector<8x128xf32> -> vector<8x128xf32>
    %204 = arith.addf %202, %203 : vector<8x128xf32>
    %205 = vector.broadcast %9 : vector<1x128xf32> to vector<8x128xf32>
    %206 = arith.addf %204, %205 : vector<8x128xf32>
    %207 = vector.extract_strided_slice %206 {offsets = [0, 0], sizes = [8, 32], strides = [1, 1]} : vector<8x128xf32> to vector<8x32xf32>
    %208 = arith.negf %207 : vector<8x32xf32>
    %209 = math.exp %208 : vector<8x32xf32>
    %cst_101 = arith.constant 1.000000e+00 : f32
    %210 = vector.broadcast %cst_101 : f32 to vector<8x32xf32>
    %211 = arith.addf %210, %209 : vector<8x32xf32>
    %212 = arith.divf %210, %211 : vector<8x32xf32>
    %213 = vector.extract_strided_slice %206 {offsets = [0, 32], sizes = [8, 32], strides = [1, 1]} : vector<8x128xf32> to vector<8x32xf32>
    %214 = arith.negf %213 : vector<8x32xf32>
    %215 = math.exp %214 : vector<8x32xf32>
    %cst_102 = arith.constant 1.000000e+00 : f32
    %216 = vector.broadcast %cst_102 : f32 to vector<8x32xf32>
    %217 = arith.addf %216, %215 : vector<8x32xf32>
    %218 = arith.divf %216, %217 : vector<8x32xf32>
    %219 = vector.extract_strided_slice %206 {offsets = [0, 64], sizes = [8, 32], strides = [1, 1]} : vector<8x128xf32> to vector<8x32xf32>
    %220 = vector.extract_strided_slice %206 {offsets = [0, 96], sizes = [8, 32], strides = [1, 1]} : vector<8x128xf32> to vector<8x32xf32>
    %221 = arith.mulf %212, %220 : vector<8x32xf32>
    %222 = arith.addf %219, %221 : vector<8x32xf32>
    %223 = math.tanh %222 : vector<8x32xf32>
    %cst_103 = arith.constant 1.000000e+00 : f32
    %224 = vector.broadcast %cst_103 : f32 to vector<8x32xf32>
    %225 = arith.subf %224, %218 : vector<8x32xf32>
    %226 = arith.mulf %225, %223 : vector<8x32xf32>
    %227 = arith.mulf %218, %201 : vector<8x32xf32>
    %228 = arith.addf %226, %227 : vector<8x32xf32>
    %c0_104 = arith.constant 0 : index
    %c0_105 = arith.constant 0 : index
    %c0_106 = arith.constant 0 : index
    %229 = vector.load %arg5[%c0_104, %c0_105, %c0_106] : memref<1x8x32xf32, #tpu.memory_space<vmem>>, vector<1x8x32xf32>
    %230 = vector.shape_cast %229 : vector<1x8x32xf32> to vector<8x32xf32>
    %231 = vector.shape_cast %228 : vector<8x32xf32> to vector<1x8x32xf32>
    tpu.vector_store %arg5[%c0_104, %c0_105, %c0_106], %231 {strides = array<i32>} : memref<1x8x32xf32, #tpu.memory_space<vmem>>, vector<1x8x32xf32>,
    %c6_i32 = arith.constant 6 : i32
    %c1_i32_107 = arith.constant 1 : i32
    %232 = arith.muli %c6_i32, %c1_i32_107 : i32
    %c0_i32_108 = arith.constant 0 : i32
    %233 = arith.addi %c0_i32_108, %232 : i32
    %c0_109 = arith.constant 0 : index
    %234 = arith.index_cast %233 : i32 to index
    %c0_110 = arith.constant 0 : index
    %c0_111 = arith.constant 0 : index
    %235 = vector.load %arg1[%c0_109, %234, %c0_110, %c0_111] : memref<1x10x8x16xf32, #tpu.memory_space<vmem>>, vector<1x1x8x16xf32>
    %236 = vector.shape_cast %235 : vector<1x1x8x16xf32> to vector<8x16xf32>
    %c0_112 = arith.constant 0 : index
    %c0_113 = arith.constant 0 : index
    %c0_114 = arith.constant 0 : index
    %237 = vector.load %arg5[%c0_112, %c0_113, %c0_114] : memref<1x8x32xf32, #tpu.memory_space<vmem>>, vector<1x8x32xf32>
    %238 = vector.shape_cast %237 : vector<1x8x32xf32> to vector<8x32xf32>
    %cst_115 = arith.constant dense<0.000000e+00> : vector<8x128xf32>
    %239 = tpu.matmul %236, %5, %cst_115 {dimension_numbers = #tpu.dot_dimension_numbers<[1], [0], [0], [1], [0, 0, 1, 1], [], []>} : vector<8x16xf32>, vector<16x128xf32>, vector<8x128xf32> -> vector<8x128xf32>
    %cst_116 = arith.constant dense<0.000000e+00> : vector<8x128xf32>
    %240 = tpu.matmul %238, %7, %cst_116 {dimension_numbers = #tpu.dot_dimension_numbers<[1], [0], [0], [1], [0, 0, 1, 1], [], []>} : vector<8x32xf32>, vector<32x128xf32>, vector<8x128xf32> -> vector<8x128xf32>
    %241 = arith.addf %239, %240 : vector<8x128xf32>
    %242 = vector.broadcast %9 : vector<1x128xf32> to vector<8x128xf32>
    %243 = arith.addf %241, %242 : vector<8x128xf32>
    %244 = vector.extract_strided_slice %243 {offsets = [0, 0], sizes = [8, 32], strides = [1, 1]} : vector<8x128xf32> to vector<8x32xf32>
    %245 = arith.negf %244 : vector<8x32xf32>
    %246 = math.exp %245 : vector<8x32xf32>
    %cst_117 = arith.constant 1.000000e+00 : f32
    %247 = vector.broadcast %cst_117 : f32 to vector<8x32xf32>
    %248 = arith.addf %247, %246 : vector<8x32xf32>
    %249 = arith.divf %247, %248 : vector<8x32xf32>
    %250 = vector.extract_strided_slice %243 {offsets = [0, 32], sizes = [8, 32], strides = [1, 1]} : vector<8x128xf32> to vector<8x32xf32>
    %251 = arith.negf %250 : vector<8x32xf32>
    %252 = math.exp %251 : vector<8x32xf32>
    %cst_118 = arith.constant 1.000000e+00 : f32
    %253 = vector.broadcast %cst_118 : f32 to vector<8x32xf32>
    %254 = arith.addf %253, %252 : vector<8x32xf32>
    %255 = arith.divf %253, %254 : vector<8x32xf32>
    %256 = vector.extract_strided_slice %243 {offsets = [0, 64], sizes = [8, 32], strides = [1, 1]} : vector<8x128xf32> to vector<8x32xf32>
    %257 = vector.extract_strided_slice %243 {offsets = [0, 96], sizes = [8, 32], strides = [1, 1]} : vector<8x128xf32> to vector<8x32xf32>
    %258 = arith.mulf %249, %257 : vector<8x32xf32>
    %259 = arith.addf %256, %258 : vector<8x32xf32>
    %260 = math.tanh %259 : vector<8x32xf32>
    %cst_119 = arith.constant 1.000000e+00 : f32
    %261 = vector.broadcast %cst_119 : f32 to vector<8x32xf32>
    %262 = arith.subf %261, %255 : vector<8x32xf32>
    %263 = arith.mulf %262, %260 : vector<8x32xf32>
    %264 = arith.mulf %255, %238 : vector<8x32xf32>
    %265 = arith.addf %263, %264 : vector<8x32xf32>
    %c0_120 = arith.constant 0 : index
    %c0_121 = arith.constant 0 : index
    %c0_122 = arith.constant 0 : index
    %266 = vector.load %arg5[%c0_120, %c0_121, %c0_122] : memref<1x8x32xf32, #tpu.memory_space<vmem>>, vector<1x8x32xf32>
    %267 = vector.shape_cast %266 : vector<1x8x32xf32> to vector<8x32xf32>
    %268 = vector.shape_cast %265 : vector<8x32xf32> to vector<1x8x32xf32>
    tpu.vector_store %arg5[%c0_120, %c0_121, %c0_122], %268 {strides = array<i32>} : memref<1x8x32xf32, #tpu.memory_space<vmem>>, vector<1x8x32xf32>,
    %c7_i32 = arith.constant 7 : i32
    %c1_i32_123 = arith.constant 1 : i32
    %269 = arith.muli %c7_i32, %c1_i32_123 : i32
    %c0_i32_124 = arith.constant 0 : i32
    %270 = arith.addi %c0_i32_124, %269 : i32
    %c0_125 = arith.constant 0 : index
    %271 = arith.index_cast %270 : i32 to index
    %c0_126 = arith.constant 0 : index
    %c0_127 = arith.constant 0 : index
    %272 = vector.load %arg1[%c0_125, %271, %c0_126, %c0_127] : memref<1x10x8x16xf32, #tpu.memory_space<vmem>>, vector<1x1x8x16xf32>
    %273 = vector.shape_cast %272 : vector<1x1x8x16xf32> to vector<8x16xf32>
    %c0_128 = arith.constant 0 : index
    %c0_129 = arith.constant 0 : index
    %c0_130 = arith.constant 0 : index
    %274 = vector.load %arg5[%c0_128, %c0_129, %c0_130] : memref<1x8x32xf32, #tpu.memory_space<vmem>>, vector<1x8x32xf32>
    %275 = vector.shape_cast %274 : vector<1x8x32xf32> to vector<8x32xf32>
    %cst_131 = arith.constant dense<0.000000e+00> : vector<8x128xf32>
    %276 = tpu.matmul %273, %5, %cst_131 {dimension_numbers = #tpu.dot_dimension_numbers<[1], [0], [0], [1], [0, 0, 1, 1], [], []>} : vector<8x16xf32>, vector<16x128xf32>, vector<8x128xf32> -> vector<8x128xf32>
    %cst_132 = arith.constant dense<0.000000e+00> : vector<8x128xf32>
    %277 = tpu.matmul %275, %7, %cst_132 {dimension_numbers = #tpu.dot_dimension_numbers<[1], [0], [0], [1], [0, 0, 1, 1], [], []>} : vector<8x32xf32>, vector<32x128xf32>, vector<8x128xf32> -> vector<8x128xf32>
    %278 = arith.addf %276, %277 : vector<8x128xf32>
    %279 = vector.broadcast %9 : vector<1x128xf32> to vector<8x128xf32>
    %280 = arith.addf %278, %279 : vector<8x128xf32>
    %281 = vector.extract_strided_slice %280 {offsets = [0, 0], sizes = [8, 32], strides = [1, 1]} : vector<8x128xf32> to vector<8x32xf32>
    %282 = arith.negf %281 : vector<8x32xf32>
    %283 = math.exp %282 : vector<8x32xf32>
    %cst_133 = arith.constant 1.000000e+00 : f32
    %284 = vector.broadcast %cst_133 : f32 to vector<8x32xf32>
    %285 = arith.addf %284, %283 : vector<8x32xf32>
    %286 = arith.divf %284, %285 : vector<8x32xf32>
    %287 = vector.extract_strided_slice %280 {offsets = [0, 32], sizes = [8, 32], strides = [1, 1]} : vector<8x128xf32> to vector<8x32xf32>
    %288 = arith.negf %287 : vector<8x32xf32>
    %289 = math.exp %288 : vector<8x32xf32>
    %cst_134 = arith.constant 1.000000e+00 : f32
    %290 = vector.broadcast %cst_134 : f32 to vector<8x32xf32>
    %291 = arith.addf %290, %289 : vector<8x32xf32>
    %292 = arith.divf %290, %291 : vector<8x32xf32>
    %293 = vector.extract_strided_slice %280 {offsets = [0, 64], sizes = [8, 32], strides = [1, 1]} : vector<8x128xf32> to vector<8x32xf32>
    %294 = vector.extract_strided_slice %280 {offsets = [0, 96], sizes = [8, 32], strides = [1, 1]} : vector<8x128xf32> to vector<8x32xf32>
    %295 = arith.mulf %286, %294 : vector<8x32xf32>
    %296 = arith.addf %293, %295 : vector<8x32xf32>
    %297 = math.tanh %296 : vector<8x32xf32>
    %cst_135 = arith.constant 1.000000e+00 : f32
    %298 = vector.broadcast %cst_135 : f32 to vector<8x32xf32>
    %299 = arith.subf %298, %292 : vector<8x32xf32>
    %300 = arith.mulf %299, %297 : vector<8x32xf32>
    %301 = arith.mulf %292, %275 : vector<8x32xf32>
    %302 = arith.addf %300, %301 : vector<8x32xf32>
    %c0_136 = arith.constant 0 : index
    %c0_137 = arith.constant 0 : index
    %c0_138 = arith.constant 0 : index
    %303 = vector.load %arg5[%c0_136, %c0_137, %c0_138] : memref<1x8x32xf32, #tpu.memory_space<vmem>>, vector<1x8x32xf32>
    %304 = vector.shape_cast %303 : vector<1x8x32xf32> to vector<8x32xf32>
    %305 = vector.shape_cast %302 : vector<8x32xf32> to vector<1x8x32xf32>
    tpu.vector_store %arg5[%c0_136, %c0_137, %c0_138], %305 {strides = array<i32>} : memref<1x8x32xf32, #tpu.memory_space<vmem>>, vector<1x8x32xf32>,
    %c8_i32 = arith.constant 8 : i32
    %c1_i32_139 = arith.constant 1 : i32
    %306 = arith.muli %c8_i32, %c1_i32_139 : i32
    %c0_i32_140 = arith.constant 0 : i32
    %307 = arith.addi %c0_i32_140, %306 : i32
    %c0_141 = arith.constant 0 : index
    %308 = arith.index_cast %307 : i32 to index
    %c0_142 = arith.constant 0 : index
    %c0_143 = arith.constant 0 : index
    %309 = vector.load %arg1[%c0_141, %308, %c0_142, %c0_143] : memref<1x10x8x16xf32, #tpu.memory_space<vmem>>, vector<1x1x8x16xf32>
    %310 = vector.shape_cast %309 : vector<1x1x8x16xf32> to vector<8x16xf32>
    %c0_144 = arith.constant 0 : index
    %c0_145 = arith.constant 0 : index
    %c0_146 = arith.constant 0 : index
    %311 = vector.load %arg5[%c0_144, %c0_145, %c0_146] : memref<1x8x32xf32, #tpu.memory_space<vmem>>, vector<1x8x32xf32>
    %312 = vector.shape_cast %311 : vector<1x8x32xf32> to vector<8x32xf32>
    %cst_147 = arith.constant dense<0.000000e+00> : vector<8x128xf32>
    %313 = tpu.matmul %310, %5, %cst_147 {dimension_numbers = #tpu.dot_dimension_numbers<[1], [0], [0], [1], [0, 0, 1, 1], [], []>} : vector<8x16xf32>, vector<16x128xf32>, vector<8x128xf32> -> vector<8x128xf32>
    %cst_148 = arith.constant dense<0.000000e+00> : vector<8x128xf32>
    %314 = tpu.matmul %312, %7, %cst_148 {dimension_numbers = #tpu.dot_dimension_numbers<[1], [0], [0], [1], [0, 0, 1, 1], [], []>} : vector<8x32xf32>, vector<32x128xf32>, vector<8x128xf32> -> vector<8x128xf32>
    %315 = arith.addf %313, %314 : vector<8x128xf32>
    %316 = vector.broadcast %9 : vector<1x128xf32> to vector<8x128xf32>
    %317 = arith.addf %315, %316 : vector<8x128xf32>
    %318 = vector.extract_strided_slice %317 {offsets = [0, 0], sizes = [8, 32], strides = [1, 1]} : vector<8x128xf32> to vector<8x32xf32>
    %319 = arith.negf %318 : vector<8x32xf32>
    %320 = math.exp %319 : vector<8x32xf32>
    %cst_149 = arith.constant 1.000000e+00 : f32
    %321 = vector.broadcast %cst_149 : f32 to vector<8x32xf32>
    %322 = arith.addf %321, %320 : vector<8x32xf32>
    %323 = arith.divf %321, %322 : vector<8x32xf32>
    %324 = vector.extract_strided_slice %317 {offsets = [0, 32], sizes = [8, 32], strides = [1, 1]} : vector<8x128xf32> to vector<8x32xf32>
    %325 = arith.negf %324 : vector<8x32xf32>
    %326 = math.exp %325 : vector<8x32xf32>
    %cst_150 = arith.constant 1.000000e+00 : f32
    %327 = vector.broadcast %cst_150 : f32 to vector<8x32xf32>
    %328 = arith.addf %327, %326 : vector<8x32xf32>
    %329 = arith.divf %327, %328 : vector<8x32xf32>
    %330 = vector.extract_strided_slice %317 {offsets = [0, 64], sizes = [8, 32], strides = [1, 1]} : vector<8x128xf32> to vector<8x32xf32>
    %331 = vector.extract_strided_slice %317 {offsets = [0, 96], sizes = [8, 32], strides = [1, 1]} : vector<8x128xf32> to vector<8x32xf32>
    %332 = arith.mulf %323, %331 : vector<8x32xf32>
    %333 = arith.addf %330, %332 : vector<8x32xf32>
    %334 = math.tanh %333 : vector<8x32xf32>
    %cst_151 = arith.constant 1.000000e+00 : f32
    %335 = vector.broadcast %cst_151 : f32 to vector<8x32xf32>
    %336 = arith.subf %335, %329 : vector<8x32xf32>
    %337 = arith.mulf %336, %334 : vector<8x32xf32>
    %338 = arith.mulf %329, %312 : vector<8x32xf32>
    %339 = arith.addf %337, %338 : vector<8x32xf32>
    %c0_152 = arith.constant 0 : index
    %c0_153 = arith.constant 0 : index
    %c0_154 = arith.constant 0 : index
    %340 = vector.load %arg5[%c0_152, %c0_153, %c0_154] : memref<1x8x32xf32, #tpu.memory_space<vmem>>, vector<1x8x32xf32>
    %341 = vector.shape_cast %340 : vector<1x8x32xf32> to vector<8x32xf32>
    %342 = vector.shape_cast %339 : vector<8x32xf32> to vector<1x8x32xf32>
    tpu.vector_store %arg5[%c0_152, %c0_153, %c0_154], %342 {strides = array<i32>} : memref<1x8x32xf32, #tpu.memory_space<vmem>>, vector<1x8x32xf32>,
    %c9_i32 = arith.constant 9 : i32
    %c1_i32_155 = arith.constant 1 : i32
    %343 = arith.muli %c9_i32, %c1_i32_155 : i32
    %c0_i32_156 = arith.constant 0 : i32
    %344 = arith.addi %c0_i32_156, %343 : i32
    %c0_157 = arith.constant 0 : index
    %345 = arith.index_cast %344 : i32 to index
    %c0_158 = arith.constant 0 : index
    %c0_159 = arith.constant 0 : index
    %346 = vector.load %arg1[%c0_157, %345, %c0_158, %c0_159] : memref<1x10x8x16xf32, #tpu.memory_space<vmem>>, vector<1x1x8x16xf32>
    %347 = vector.shape_cast %346 : vector<1x1x8x16xf32> to vector<8x16xf32>
    %c0_160 = arith.constant 0 : index
    %c0_161 = arith.constant 0 : index
    %c0_162 = arith.constant 0 : index
    %348 = vector.load %arg5[%c0_160, %c0_161, %c0_162] : memref<1x8x32xf32, #tpu.memory_space<vmem>>, vector<1x8x32xf32>
    %349 = vector.shape_cast %348 : vector<1x8x32xf32> to vector<8x32xf32>
    %cst_163 = arith.constant dense<0.000000e+00> : vector<8x128xf32>
    %350 = tpu.matmul %347, %5, %cst_163 {dimension_numbers = #tpu.dot_dimension_numbers<[1], [0], [0], [1], [0, 0, 1, 1], [], []>} : vector<8x16xf32>, vector<16x128xf32>, vector<8x128xf32> -> vector<8x128xf32>
    %cst_164 = arith.constant dense<0.000000e+00> : vector<8x128xf32>
    %351 = tpu.matmul %349, %7, %cst_164 {dimension_numbers = #tpu.dot_dimension_numbers<[1], [0], [0], [1], [0, 0, 1, 1], [], []>} : vector<8x32xf32>, vector<32x128xf32>, vector<8x128xf32> -> vector<8x128xf32>
    %352 = arith.addf %350, %351 : vector<8x128xf32>
    %353 = vector.broadcast %9 : vector<1x128xf32> to vector<8x128xf32>
    %354 = arith.addf %352, %353 : vector<8x128xf32>
    %355 = vector.extract_strided_slice %354 {offsets = [0, 0], sizes = [8, 32], strides = [1, 1]} : vector<8x128xf32> to vector<8x32xf32>
    %356 = arith.negf %355 : vector<8x32xf32>
    %357 = math.exp %356 : vector<8x32xf32>
    %cst_165 = arith.constant 1.000000e+00 : f32
    %358 = vector.broadcast %cst_165 : f32 to vector<8x32xf32>
    %359 = arith.addf %358, %357 : vector<8x32xf32>
    %360 = arith.divf %358, %359 : vector<8x32xf32>
    %361 = vector.extract_strided_slice %354 {offsets = [0, 32], sizes = [8, 32], strides = [1, 1]} : vector<8x128xf32> to vector<8x32xf32>
    %362 = arith.negf %361 : vector<8x32xf32>
    %363 = math.exp %362 : vector<8x32xf32>
    %cst_166 = arith.constant 1.000000e+00 : f32
    %364 = vector.broadcast %cst_166 : f32 to vector<8x32xf32>
    %365 = arith.addf %364, %363 : vector<8x32xf32>
    %366 = arith.divf %364, %365 : vector<8x32xf32>
    %367 = vector.extract_strided_slice %354 {offsets = [0, 64], sizes = [8, 32], strides = [1, 1]} : vector<8x128xf32> to vector<8x32xf32>
    %368 = vector.extract_strided_slice %354 {offsets = [0, 96], sizes = [8, 32], strides = [1, 1]} : vector<8x128xf32> to vector<8x32xf32>
    %369 = arith.mulf %360, %368 : vector<8x32xf32>
    %370 = arith.addf %367, %369 : vector<8x32xf32>
    %371 = math.tanh %370 : vector<8x32xf32>
    %cst_167 = arith.constant 1.000000e+00 : f32
    %372 = vector.broadcast %cst_167 : f32 to vector<8x32xf32>
    %373 = arith.subf %372, %366 : vector<8x32xf32>
    %374 = arith.mulf %373, %371 : vector<8x32xf32>
    %375 = arith.mulf %366, %349 : vector<8x32xf32>
    %376 = arith.addf %374, %375 : vector<8x32xf32>
    %c0_168 = arith.constant 0 : index
    %c0_169 = arith.constant 0 : index
    %c0_170 = arith.constant 0 : index
    %377 = vector.load %arg5[%c0_168, %c0_169, %c0_170] : memref<1x8x32xf32, #tpu.memory_space<vmem>>, vector<1x8x32xf32>
    %378 = vector.shape_cast %377 : vector<1x8x32xf32> to vector<8x32xf32>
    %379 = vector.shape_cast %376 : vector<8x32xf32> to vector<1x8x32xf32>
    tpu.vector_store %arg5[%c0_168, %c0_169, %c0_170], %379 {strides = array<i32>} : memref<1x8x32xf32, #tpu.memory_space<vmem>>, vector<1x8x32xf32>,
    %c10_i32 = arith.constant 10 : i32
    return
  }
  func.func @transform_0(%arg0: i32) -> (i32, i32, i32, i32) {
    %c0_i32 = arith.constant 0 : i32
    %c0_i32_0 = arith.constant 0 : i32
    %c0_i32_1 = arith.constant 0 : i32
    %c0_i32_2 = arith.constant 0 : i32
    return %arg0, %c0_i32, %c0_i32_0, %c0_i32_1 : i32, i32, i32, i32
  }
  func.func @transform_1(%arg0: i32) -> (i32, i32, i32) {
    %c0_i32 = arith.constant 0 : i32
    %c0_i32_0 = arith.constant 0 : i32
    %c0_i32_1 = arith.constant 0 : i32
    return %arg0, %c0_i32, %c0_i32_0 : i32, i32, i32
  }
  func.func @transform_2(%arg0: i32) -> (i32, i32, i32) {
    %c0_i32 = arith.constant 0 : i32
    %c0_i32_0 = arith.constant 0 : i32
    %c0_i32_1 = arith.constant 0 : i32
    return %arg0, %c0_i32, %c0_i32_0 : i32, i32, i32
  }
  func.func @transform_3(%arg0: i32) -> (i32, i32, i32) {
    %c0_i32 = arith.constant 0 : i32
    %c0_i32_0 = arith.constant 0 : i32
    %c0_i32_1 = arith.constant 0 : i32
    return %arg0, %c0_i32, %c0_i32_0 : i32, i32, i32
  }
  func.func @transform_4(%arg0: i32) -> (i32, i32, i32) {
    %c0_i32 = arith.constant 0 : i32
    %c0_i32_0 = arith.constant 0 : i32
    %c0_i32_1 = arith.constant 0 : i32
    return %arg0, %c0_i32, %c0_i32_0 : i32, i32, i32
  }
}

module attributes {stable_mosaic.version = 11 : i64} {
  func.func @_decoder_kernel(%arg0: memref<7x8x16xf32, #tpu.memory_space<vmem>>, %arg1: memref<8x32xf32, #tpu.memory_space<vmem>>, %arg2: memref<128x16xf32, #tpu.memory_space<vmem>>, %arg3: memref<16x128xf32, #tpu.memory_space<vmem>>, %arg4: memref<32x128xf32, #tpu.memory_space<vmem>>, %arg5: memref<1x128xf32, #tpu.memory_space<vmem>>, %arg6: memref<32x128xf32, #tpu.memory_space<vmem>>, %arg7: memref<1x128xf32, #tpu.memory_space<vmem>>, %arg8: memref<7x8x128xf32, #tpu.memory_space<vmem>>, %arg9: memref<8x32xf32, #tpu.memory_space<vmem>>, %arg10: memref<8x16xf32, #tpu.memory_space<vmem>>) attributes {dimension_semantics = [], scalar_prefetch = 0 : i64, scratch_operands = 2 : i64, tpu.core_type = #tpu.core_type<tc>} {
    %c0 = arith.constant 0 : index
    %c0_0 = arith.constant 0 : index
    %0 = vector.load %arg1[%c0, %c0_0] : memref<8x32xf32, #tpu.memory_space<vmem>>, vector<8x32xf32>
    %c0_1 = arith.constant 0 : index
    %c0_2 = arith.constant 0 : index
    %1 = vector.load %arg9[%c0_1, %c0_2] : memref<8x32xf32, #tpu.memory_space<vmem>>, vector<8x32xf32>
    tpu.vector_store %arg9[%c0_1, %c0_2], %0 {strides = array<i32>} : memref<8x32xf32, #tpu.memory_space<vmem>>, vector<8x32xf32>,
    %c0_3 = arith.constant 0 : index
    %c0_4 = arith.constant 0 : index
    %2 = vector.load %arg3[%c0_3, %c0_4] : memref<16x128xf32, #tpu.memory_space<vmem>>, vector<16x128xf32>
    %c0_5 = arith.constant 0 : index
    %c0_6 = arith.constant 0 : index
    %3 = vector.load %arg4[%c0_5, %c0_6] : memref<32x128xf32, #tpu.memory_space<vmem>>, vector<32x128xf32>
    %c0_7 = arith.constant 0 : index
    %c0_8 = arith.constant 0 : index
    %4 = vector.load %arg5[%c0_7, %c0_8] : memref<1x128xf32, #tpu.memory_space<vmem>>, vector<1x128xf32>
    %c0_9 = arith.constant 0 : index
    %c0_10 = arith.constant 0 : index
    %5 = vector.load %arg6[%c0_9, %c0_10] : memref<32x128xf32, #tpu.memory_space<vmem>>, vector<32x128xf32>
    %c0_11 = arith.constant 0 : index
    %c0_12 = arith.constant 0 : index
    %6 = vector.load %arg7[%c0_11, %c0_12] : memref<1x128xf32, #tpu.memory_space<vmem>>, vector<1x128xf32>
    %c0_i32 = arith.constant 0 : i32
    %c1_i32 = arith.constant 1 : i32
    %7 = arith.muli %c0_i32, %c1_i32 : i32
    %c0_i32_13 = arith.constant 0 : i32
    %8 = arith.addi %c0_i32_13, %7 : i32
    %9 = arith.index_cast %8 : i32 to index
    %c0_14 = arith.constant 0 : index
    %c0_15 = arith.constant 0 : index
    %10 = vector.load %arg0[%9, %c0_14, %c0_15] : memref<7x8x16xf32, #tpu.memory_space<vmem>>, vector<1x8x16xf32>
    %11 = vector.shape_cast %10 : vector<1x8x16xf32> to vector<8x16xf32>
    %c0_16 = arith.constant 0 : index
    %c0_17 = arith.constant 0 : index
    %12 = vector.load %arg9[%c0_16, %c0_17] : memref<8x32xf32, #tpu.memory_space<vmem>>, vector<8x32xf32>
    %cst = arith.constant dense<0.000000e+00> : vector<8x128xf32>
    %13 = tpu.matmul %11, %2, %cst {dimension_numbers = #tpu.dot_dimension_numbers<[1], [0], [0], [1], [0, 0, 1, 1], [], []>} : vector<8x16xf32>, vector<16x128xf32>, vector<8x128xf32> -> vector<8x128xf32>
    %cst_18 = arith.constant dense<0.000000e+00> : vector<8x128xf32>
    %14 = tpu.matmul %12, %3, %cst_18 {dimension_numbers = #tpu.dot_dimension_numbers<[1], [0], [0], [1], [0, 0, 1, 1], [], []>} : vector<8x32xf32>, vector<32x128xf32>, vector<8x128xf32> -> vector<8x128xf32>
    %15 = arith.addf %13, %14 : vector<8x128xf32>
    %16 = vector.broadcast %4 : vector<1x128xf32> to vector<8x128xf32>
    %17 = arith.addf %15, %16 : vector<8x128xf32>
    %18 = vector.extract_strided_slice %17 {offsets = [0, 0], sizes = [8, 32], strides = [1, 1]} : vector<8x128xf32> to vector<8x32xf32>
    %19 = arith.negf %18 : vector<8x32xf32>
    %20 = math.exp %19 : vector<8x32xf32>
    %cst_19 = arith.constant 1.000000e+00 : f32
    %21 = vector.broadcast %cst_19 : f32 to vector<8x32xf32>
    %22 = arith.addf %21, %20 : vector<8x32xf32>
    %23 = arith.divf %21, %22 : vector<8x32xf32>
    %24 = vector.extract_strided_slice %17 {offsets = [0, 32], sizes = [8, 32], strides = [1, 1]} : vector<8x128xf32> to vector<8x32xf32>
    %25 = arith.negf %24 : vector<8x32xf32>
    %26 = math.exp %25 : vector<8x32xf32>
    %cst_20 = arith.constant 1.000000e+00 : f32
    %27 = vector.broadcast %cst_20 : f32 to vector<8x32xf32>
    %28 = arith.addf %27, %26 : vector<8x32xf32>
    %29 = arith.divf %27, %28 : vector<8x32xf32>
    %30 = vector.extract_strided_slice %17 {offsets = [0, 64], sizes = [8, 32], strides = [1, 1]} : vector<8x128xf32> to vector<8x32xf32>
    %31 = vector.extract_strided_slice %17 {offsets = [0, 96], sizes = [8, 32], strides = [1, 1]} : vector<8x128xf32> to vector<8x32xf32>
    %32 = arith.mulf %23, %31 : vector<8x32xf32>
    %33 = arith.addf %30, %32 : vector<8x32xf32>
    %34 = math.tanh %33 : vector<8x32xf32>
    %cst_21 = arith.constant 1.000000e+00 : f32
    %35 = vector.broadcast %cst_21 : f32 to vector<8x32xf32>
    %36 = arith.subf %35, %29 : vector<8x32xf32>
    %37 = arith.mulf %36, %34 : vector<8x32xf32>
    %38 = arith.mulf %29, %12 : vector<8x32xf32>
    %39 = arith.addf %37, %38 : vector<8x32xf32>
    %c0_22 = arith.constant 0 : index
    %c0_23 = arith.constant 0 : index
    %40 = vector.load %arg9[%c0_22, %c0_23] : memref<8x32xf32, #tpu.memory_space<vmem>>, vector<8x32xf32>
    tpu.vector_store %arg9[%c0_22, %c0_23], %39 {strides = array<i32>} : memref<8x32xf32, #tpu.memory_space<vmem>>, vector<8x32xf32>,
    %cst_24 = arith.constant dense<0.000000e+00> : vector<8x128xf32>
    %41 = tpu.matmul %39, %5, %cst_24 {dimension_numbers = #tpu.dot_dimension_numbers<[1], [0], [0], [1], [0, 0, 1, 1], [], []>} : vector<8x32xf32>, vector<32x128xf32>, vector<8x128xf32> -> vector<8x128xf32>
    %42 = vector.broadcast %6 : vector<1x128xf32> to vector<8x128xf32>
    %43 = arith.addf %41, %42 : vector<8x128xf32>
    %44 = arith.index_cast %8 : i32 to index
    %c0_25 = arith.constant 0 : index
    %c0_26 = arith.constant 0 : index
    %45 = vector.load %arg8[%44, %c0_25, %c0_26] : memref<7x8x128xf32, #tpu.memory_space<vmem>>, vector<1x8x128xf32>
    %46 = vector.shape_cast %45 : vector<1x8x128xf32> to vector<8x128xf32>
    %47 = vector.shape_cast %43 : vector<8x128xf32> to vector<1x8x128xf32>
    tpu.vector_store %arg8[%44, %c0_25, %c0_26], %47 {strides = array<i32>} : memref<7x8x128xf32, #tpu.memory_space<vmem>>, vector<1x8x128xf32>,
    %c1_i32_27 = arith.constant 1 : i32
    %c1_i32_28 = arith.constant 1 : i32
    %48 = arith.muli %c1_i32_27, %c1_i32_28 : i32
    %c0_i32_29 = arith.constant 0 : i32
    %49 = arith.addi %c0_i32_29, %48 : i32
    %50 = arith.index_cast %49 : i32 to index
    %c0_30 = arith.constant 0 : index
    %c0_31 = arith.constant 0 : index
    %51 = vector.load %arg0[%50, %c0_30, %c0_31] : memref<7x8x16xf32, #tpu.memory_space<vmem>>, vector<1x8x16xf32>
    %52 = vector.shape_cast %51 : vector<1x8x16xf32> to vector<8x16xf32>
    %c0_32 = arith.constant 0 : index
    %c0_33 = arith.constant 0 : index
    %53 = vector.load %arg9[%c0_32, %c0_33] : memref<8x32xf32, #tpu.memory_space<vmem>>, vector<8x32xf32>
    %cst_34 = arith.constant dense<0.000000e+00> : vector<8x128xf32>
    %54 = tpu.matmul %52, %2, %cst_34 {dimension_numbers = #tpu.dot_dimension_numbers<[1], [0], [0], [1], [0, 0, 1, 1], [], []>} : vector<8x16xf32>, vector<16x128xf32>, vector<8x128xf32> -> vector<8x128xf32>
    %cst_35 = arith.constant dense<0.000000e+00> : vector<8x128xf32>
    %55 = tpu.matmul %53, %3, %cst_35 {dimension_numbers = #tpu.dot_dimension_numbers<[1], [0], [0], [1], [0, 0, 1, 1], [], []>} : vector<8x32xf32>, vector<32x128xf32>, vector<8x128xf32> -> vector<8x128xf32>
    %56 = arith.addf %54, %55 : vector<8x128xf32>
    %57 = vector.broadcast %4 : vector<1x128xf32> to vector<8x128xf32>
    %58 = arith.addf %56, %57 : vector<8x128xf32>
    %59 = vector.extract_strided_slice %58 {offsets = [0, 0], sizes = [8, 32], strides = [1, 1]} : vector<8x128xf32> to vector<8x32xf32>
    %60 = arith.negf %59 : vector<8x32xf32>
    %61 = math.exp %60 : vector<8x32xf32>
    %cst_36 = arith.constant 1.000000e+00 : f32
    %62 = vector.broadcast %cst_36 : f32 to vector<8x32xf32>
    %63 = arith.addf %62, %61 : vector<8x32xf32>
    %64 = arith.divf %62, %63 : vector<8x32xf32>
    %65 = vector.extract_strided_slice %58 {offsets = [0, 32], sizes = [8, 32], strides = [1, 1]} : vector<8x128xf32> to vector<8x32xf32>
    %66 = arith.negf %65 : vector<8x32xf32>
    %67 = math.exp %66 : vector<8x32xf32>
    %cst_37 = arith.constant 1.000000e+00 : f32
    %68 = vector.broadcast %cst_37 : f32 to vector<8x32xf32>
    %69 = arith.addf %68, %67 : vector<8x32xf32>
    %70 = arith.divf %68, %69 : vector<8x32xf32>
    %71 = vector.extract_strided_slice %58 {offsets = [0, 64], sizes = [8, 32], strides = [1, 1]} : vector<8x128xf32> to vector<8x32xf32>
    %72 = vector.extract_strided_slice %58 {offsets = [0, 96], sizes = [8, 32], strides = [1, 1]} : vector<8x128xf32> to vector<8x32xf32>
    %73 = arith.mulf %64, %72 : vector<8x32xf32>
    %74 = arith.addf %71, %73 : vector<8x32xf32>
    %75 = math.tanh %74 : vector<8x32xf32>
    %cst_38 = arith.constant 1.000000e+00 : f32
    %76 = vector.broadcast %cst_38 : f32 to vector<8x32xf32>
    %77 = arith.subf %76, %70 : vector<8x32xf32>
    %78 = arith.mulf %77, %75 : vector<8x32xf32>
    %79 = arith.mulf %70, %53 : vector<8x32xf32>
    %80 = arith.addf %78, %79 : vector<8x32xf32>
    %c0_39 = arith.constant 0 : index
    %c0_40 = arith.constant 0 : index
    %81 = vector.load %arg9[%c0_39, %c0_40] : memref<8x32xf32, #tpu.memory_space<vmem>>, vector<8x32xf32>
    tpu.vector_store %arg9[%c0_39, %c0_40], %80 {strides = array<i32>} : memref<8x32xf32, #tpu.memory_space<vmem>>, vector<8x32xf32>,
    %cst_41 = arith.constant dense<0.000000e+00> : vector<8x128xf32>
    %82 = tpu.matmul %80, %5, %cst_41 {dimension_numbers = #tpu.dot_dimension_numbers<[1], [0], [0], [1], [0, 0, 1, 1], [], []>} : vector<8x32xf32>, vector<32x128xf32>, vector<8x128xf32> -> vector<8x128xf32>
    %83 = vector.broadcast %6 : vector<1x128xf32> to vector<8x128xf32>
    %84 = arith.addf %82, %83 : vector<8x128xf32>
    %85 = arith.index_cast %49 : i32 to index
    %c0_42 = arith.constant 0 : index
    %c0_43 = arith.constant 0 : index
    %86 = vector.load %arg8[%85, %c0_42, %c0_43] : memref<7x8x128xf32, #tpu.memory_space<vmem>>, vector<1x8x128xf32>
    %87 = vector.shape_cast %86 : vector<1x8x128xf32> to vector<8x128xf32>
    %88 = vector.shape_cast %84 : vector<8x128xf32> to vector<1x8x128xf32>
    tpu.vector_store %arg8[%85, %c0_42, %c0_43], %88 {strides = array<i32>} : memref<7x8x128xf32, #tpu.memory_space<vmem>>, vector<1x8x128xf32>,
    %c2_i32 = arith.constant 2 : i32
    %c1_i32_44 = arith.constant 1 : i32
    %89 = arith.muli %c2_i32, %c1_i32_44 : i32
    %c0_i32_45 = arith.constant 0 : i32
    %90 = arith.addi %c0_i32_45, %89 : i32
    %91 = arith.index_cast %90 : i32 to index
    %c0_46 = arith.constant 0 : index
    %c0_47 = arith.constant 0 : index
    %92 = vector.load %arg0[%91, %c0_46, %c0_47] : memref<7x8x16xf32, #tpu.memory_space<vmem>>, vector<1x8x16xf32>
    %93 = vector.shape_cast %92 : vector<1x8x16xf32> to vector<8x16xf32>
    %c0_48 = arith.constant 0 : index
    %c0_49 = arith.constant 0 : index
    %94 = vector.load %arg9[%c0_48, %c0_49] : memref<8x32xf32, #tpu.memory_space<vmem>>, vector<8x32xf32>
    %cst_50 = arith.constant dense<0.000000e+00> : vector<8x128xf32>
    %95 = tpu.matmul %93, %2, %cst_50 {dimension_numbers = #tpu.dot_dimension_numbers<[1], [0], [0], [1], [0, 0, 1, 1], [], []>} : vector<8x16xf32>, vector<16x128xf32>, vector<8x128xf32> -> vector<8x128xf32>
    %cst_51 = arith.constant dense<0.000000e+00> : vector<8x128xf32>
    %96 = tpu.matmul %94, %3, %cst_51 {dimension_numbers = #tpu.dot_dimension_numbers<[1], [0], [0], [1], [0, 0, 1, 1], [], []>} : vector<8x32xf32>, vector<32x128xf32>, vector<8x128xf32> -> vector<8x128xf32>
    %97 = arith.addf %95, %96 : vector<8x128xf32>
    %98 = vector.broadcast %4 : vector<1x128xf32> to vector<8x128xf32>
    %99 = arith.addf %97, %98 : vector<8x128xf32>
    %100 = vector.extract_strided_slice %99 {offsets = [0, 0], sizes = [8, 32], strides = [1, 1]} : vector<8x128xf32> to vector<8x32xf32>
    %101 = arith.negf %100 : vector<8x32xf32>
    %102 = math.exp %101 : vector<8x32xf32>
    %cst_52 = arith.constant 1.000000e+00 : f32
    %103 = vector.broadcast %cst_52 : f32 to vector<8x32xf32>
    %104 = arith.addf %103, %102 : vector<8x32xf32>
    %105 = arith.divf %103, %104 : vector<8x32xf32>
    %106 = vector.extract_strided_slice %99 {offsets = [0, 32], sizes = [8, 32], strides = [1, 1]} : vector<8x128xf32> to vector<8x32xf32>
    %107 = arith.negf %106 : vector<8x32xf32>
    %108 = math.exp %107 : vector<8x32xf32>
    %cst_53 = arith.constant 1.000000e+00 : f32
    %109 = vector.broadcast %cst_53 : f32 to vector<8x32xf32>
    %110 = arith.addf %109, %108 : vector<8x32xf32>
    %111 = arith.divf %109, %110 : vector<8x32xf32>
    %112 = vector.extract_strided_slice %99 {offsets = [0, 64], sizes = [8, 32], strides = [1, 1]} : vector<8x128xf32> to vector<8x32xf32>
    %113 = vector.extract_strided_slice %99 {offsets = [0, 96], sizes = [8, 32], strides = [1, 1]} : vector<8x128xf32> to vector<8x32xf32>
    %114 = arith.mulf %105, %113 : vector<8x32xf32>
    %115 = arith.addf %112, %114 : vector<8x32xf32>
    %116 = math.tanh %115 : vector<8x32xf32>
    %cst_54 = arith.constant 1.000000e+00 : f32
    %117 = vector.broadcast %cst_54 : f32 to vector<8x32xf32>
    %118 = arith.subf %117, %111 : vector<8x32xf32>
    %119 = arith.mulf %118, %116 : vector<8x32xf32>
    %120 = arith.mulf %111, %94 : vector<8x32xf32>
    %121 = arith.addf %119, %120 : vector<8x32xf32>
    %c0_55 = arith.constant 0 : index
    %c0_56 = arith.constant 0 : index
    %122 = vector.load %arg9[%c0_55, %c0_56] : memref<8x32xf32, #tpu.memory_space<vmem>>, vector<8x32xf32>
    tpu.vector_store %arg9[%c0_55, %c0_56], %121 {strides = array<i32>} : memref<8x32xf32, #tpu.memory_space<vmem>>, vector<8x32xf32>,
    %cst_57 = arith.constant dense<0.000000e+00> : vector<8x128xf32>
    %123 = tpu.matmul %121, %5, %cst_57 {dimension_numbers = #tpu.dot_dimension_numbers<[1], [0], [0], [1], [0, 0, 1, 1], [], []>} : vector<8x32xf32>, vector<32x128xf32>, vector<8x128xf32> -> vector<8x128xf32>
    %124 = vector.broadcast %6 : vector<1x128xf32> to vector<8x128xf32>
    %125 = arith.addf %123, %124 : vector<8x128xf32>
    %126 = arith.index_cast %90 : i32 to index
    %c0_58 = arith.constant 0 : index
    %c0_59 = arith.constant 0 : index
    %127 = vector.load %arg8[%126, %c0_58, %c0_59] : memref<7x8x128xf32, #tpu.memory_space<vmem>>, vector<1x8x128xf32>
    %128 = vector.shape_cast %127 : vector<1x8x128xf32> to vector<8x128xf32>
    %129 = vector.shape_cast %125 : vector<8x128xf32> to vector<1x8x128xf32>
    tpu.vector_store %arg8[%126, %c0_58, %c0_59], %129 {strides = array<i32>} : memref<7x8x128xf32, #tpu.memory_space<vmem>>, vector<1x8x128xf32>,
    %c3_i32 = arith.constant 3 : i32
    %c1_i32_60 = arith.constant 1 : i32
    %130 = arith.muli %c3_i32, %c1_i32_60 : i32
    %c0_i32_61 = arith.constant 0 : i32
    %131 = arith.addi %c0_i32_61, %130 : i32
    %132 = arith.index_cast %131 : i32 to index
    %c0_62 = arith.constant 0 : index
    %c0_63 = arith.constant 0 : index
    %133 = vector.load %arg0[%132, %c0_62, %c0_63] : memref<7x8x16xf32, #tpu.memory_space<vmem>>, vector<1x8x16xf32>
    %134 = vector.shape_cast %133 : vector<1x8x16xf32> to vector<8x16xf32>
    %c0_64 = arith.constant 0 : index
    %c0_65 = arith.constant 0 : index
    %135 = vector.load %arg9[%c0_64, %c0_65] : memref<8x32xf32, #tpu.memory_space<vmem>>, vector<8x32xf32>
    %cst_66 = arith.constant dense<0.000000e+00> : vector<8x128xf32>
    %136 = tpu.matmul %134, %2, %cst_66 {dimension_numbers = #tpu.dot_dimension_numbers<[1], [0], [0], [1], [0, 0, 1, 1], [], []>} : vector<8x16xf32>, vector<16x128xf32>, vector<8x128xf32> -> vector<8x128xf32>
    %cst_67 = arith.constant dense<0.000000e+00> : vector<8x128xf32>
    %137 = tpu.matmul %135, %3, %cst_67 {dimension_numbers = #tpu.dot_dimension_numbers<[1], [0], [0], [1], [0, 0, 1, 1], [], []>} : vector<8x32xf32>, vector<32x128xf32>, vector<8x128xf32> -> vector<8x128xf32>
    %138 = arith.addf %136, %137 : vector<8x128xf32>
    %139 = vector.broadcast %4 : vector<1x128xf32> to vector<8x128xf32>
    %140 = arith.addf %138, %139 : vector<8x128xf32>
    %141 = vector.extract_strided_slice %140 {offsets = [0, 0], sizes = [8, 32], strides = [1, 1]} : vector<8x128xf32> to vector<8x32xf32>
    %142 = arith.negf %141 : vector<8x32xf32>
    %143 = math.exp %142 : vector<8x32xf32>
    %cst_68 = arith.constant 1.000000e+00 : f32
    %144 = vector.broadcast %cst_68 : f32 to vector<8x32xf32>
    %145 = arith.addf %144, %143 : vector<8x32xf32>
    %146 = arith.divf %144, %145 : vector<8x32xf32>
    %147 = vector.extract_strided_slice %140 {offsets = [0, 32], sizes = [8, 32], strides = [1, 1]} : vector<8x128xf32> to vector<8x32xf32>
    %148 = arith.negf %147 : vector<8x32xf32>
    %149 = math.exp %148 : vector<8x32xf32>
    %cst_69 = arith.constant 1.000000e+00 : f32
    %150 = vector.broadcast %cst_69 : f32 to vector<8x32xf32>
    %151 = arith.addf %150, %149 : vector<8x32xf32>
    %152 = arith.divf %150, %151 : vector<8x32xf32>
    %153 = vector.extract_strided_slice %140 {offsets = [0, 64], sizes = [8, 32], strides = [1, 1]} : vector<8x128xf32> to vector<8x32xf32>
    %154 = vector.extract_strided_slice %140 {offsets = [0, 96], sizes = [8, 32], strides = [1, 1]} : vector<8x128xf32> to vector<8x32xf32>
    %155 = arith.mulf %146, %154 : vector<8x32xf32>
    %156 = arith.addf %153, %155 : vector<8x32xf32>
    %157 = math.tanh %156 : vector<8x32xf32>
    %cst_70 = arith.constant 1.000000e+00 : f32
    %158 = vector.broadcast %cst_70 : f32 to vector<8x32xf32>
    %159 = arith.subf %158, %152 : vector<8x32xf32>
    %160 = arith.mulf %159, %157 : vector<8x32xf32>
    %161 = arith.mulf %152, %135 : vector<8x32xf32>
    %162 = arith.addf %160, %161 : vector<8x32xf32>
    %c0_71 = arith.constant 0 : index
    %c0_72 = arith.constant 0 : index
    %163 = vector.load %arg9[%c0_71, %c0_72] : memref<8x32xf32, #tpu.memory_space<vmem>>, vector<8x32xf32>
    tpu.vector_store %arg9[%c0_71, %c0_72], %162 {strides = array<i32>} : memref<8x32xf32, #tpu.memory_space<vmem>>, vector<8x32xf32>,
    %cst_73 = arith.constant dense<0.000000e+00> : vector<8x128xf32>
    %164 = tpu.matmul %162, %5, %cst_73 {dimension_numbers = #tpu.dot_dimension_numbers<[1], [0], [0], [1], [0, 0, 1, 1], [], []>} : vector<8x32xf32>, vector<32x128xf32>, vector<8x128xf32> -> vector<8x128xf32>
    %165 = vector.broadcast %6 : vector<1x128xf32> to vector<8x128xf32>
    %166 = arith.addf %164, %165 : vector<8x128xf32>
    %167 = arith.index_cast %131 : i32 to index
    %c0_74 = arith.constant 0 : index
    %c0_75 = arith.constant 0 : index
    %168 = vector.load %arg8[%167, %c0_74, %c0_75] : memref<7x8x128xf32, #tpu.memory_space<vmem>>, vector<1x8x128xf32>
    %169 = vector.shape_cast %168 : vector<1x8x128xf32> to vector<8x128xf32>
    %170 = vector.shape_cast %166 : vector<8x128xf32> to vector<1x8x128xf32>
    tpu.vector_store %arg8[%167, %c0_74, %c0_75], %170 {strides = array<i32>} : memref<7x8x128xf32, #tpu.memory_space<vmem>>, vector<1x8x128xf32>,
    %c4_i32 = arith.constant 4 : i32
    %c1_i32_76 = arith.constant 1 : i32
    %171 = arith.muli %c4_i32, %c1_i32_76 : i32
    %c0_i32_77 = arith.constant 0 : i32
    %172 = arith.addi %c0_i32_77, %171 : i32
    %173 = arith.index_cast %172 : i32 to index
    %c0_78 = arith.constant 0 : index
    %c0_79 = arith.constant 0 : index
    %174 = vector.load %arg0[%173, %c0_78, %c0_79] : memref<7x8x16xf32, #tpu.memory_space<vmem>>, vector<1x8x16xf32>
    %175 = vector.shape_cast %174 : vector<1x8x16xf32> to vector<8x16xf32>
    %c0_80 = arith.constant 0 : index
    %c0_81 = arith.constant 0 : index
    %176 = vector.load %arg9[%c0_80, %c0_81] : memref<8x32xf32, #tpu.memory_space<vmem>>, vector<8x32xf32>
    %cst_82 = arith.constant dense<0.000000e+00> : vector<8x128xf32>
    %177 = tpu.matmul %175, %2, %cst_82 {dimension_numbers = #tpu.dot_dimension_numbers<[1], [0], [0], [1], [0, 0, 1, 1], [], []>} : vector<8x16xf32>, vector<16x128xf32>, vector<8x128xf32> -> vector<8x128xf32>
    %cst_83 = arith.constant dense<0.000000e+00> : vector<8x128xf32>
    %178 = tpu.matmul %176, %3, %cst_83 {dimension_numbers = #tpu.dot_dimension_numbers<[1], [0], [0], [1], [0, 0, 1, 1], [], []>} : vector<8x32xf32>, vector<32x128xf32>, vector<8x128xf32> -> vector<8x128xf32>
    %179 = arith.addf %177, %178 : vector<8x128xf32>
    %180 = vector.broadcast %4 : vector<1x128xf32> to vector<8x128xf32>
    %181 = arith.addf %179, %180 : vector<8x128xf32>
    %182 = vector.extract_strided_slice %181 {offsets = [0, 0], sizes = [8, 32], strides = [1, 1]} : vector<8x128xf32> to vector<8x32xf32>
    %183 = arith.negf %182 : vector<8x32xf32>
    %184 = math.exp %183 : vector<8x32xf32>
    %cst_84 = arith.constant 1.000000e+00 : f32
    %185 = vector.broadcast %cst_84 : f32 to vector<8x32xf32>
    %186 = arith.addf %185, %184 : vector<8x32xf32>
    %187 = arith.divf %185, %186 : vector<8x32xf32>
    %188 = vector.extract_strided_slice %181 {offsets = [0, 32], sizes = [8, 32], strides = [1, 1]} : vector<8x128xf32> to vector<8x32xf32>
    %189 = arith.negf %188 : vector<8x32xf32>
    %190 = math.exp %189 : vector<8x32xf32>
    %cst_85 = arith.constant 1.000000e+00 : f32
    %191 = vector.broadcast %cst_85 : f32 to vector<8x32xf32>
    %192 = arith.addf %191, %190 : vector<8x32xf32>
    %193 = arith.divf %191, %192 : vector<8x32xf32>
    %194 = vector.extract_strided_slice %181 {offsets = [0, 64], sizes = [8, 32], strides = [1, 1]} : vector<8x128xf32> to vector<8x32xf32>
    %195 = vector.extract_strided_slice %181 {offsets = [0, 96], sizes = [8, 32], strides = [1, 1]} : vector<8x128xf32> to vector<8x32xf32>
    %196 = arith.mulf %187, %195 : vector<8x32xf32>
    %197 = arith.addf %194, %196 : vector<8x32xf32>
    %198 = math.tanh %197 : vector<8x32xf32>
    %cst_86 = arith.constant 1.000000e+00 : f32
    %199 = vector.broadcast %cst_86 : f32 to vector<8x32xf32>
    %200 = arith.subf %199, %193 : vector<8x32xf32>
    %201 = arith.mulf %200, %198 : vector<8x32xf32>
    %202 = arith.mulf %193, %176 : vector<8x32xf32>
    %203 = arith.addf %201, %202 : vector<8x32xf32>
    %c0_87 = arith.constant 0 : index
    %c0_88 = arith.constant 0 : index
    %204 = vector.load %arg9[%c0_87, %c0_88] : memref<8x32xf32, #tpu.memory_space<vmem>>, vector<8x32xf32>
    tpu.vector_store %arg9[%c0_87, %c0_88], %203 {strides = array<i32>} : memref<8x32xf32, #tpu.memory_space<vmem>>, vector<8x32xf32>,
    %cst_89 = arith.constant dense<0.000000e+00> : vector<8x128xf32>
    %205 = tpu.matmul %203, %5, %cst_89 {dimension_numbers = #tpu.dot_dimension_numbers<[1], [0], [0], [1], [0, 0, 1, 1], [], []>} : vector<8x32xf32>, vector<32x128xf32>, vector<8x128xf32> -> vector<8x128xf32>
    %206 = vector.broadcast %6 : vector<1x128xf32> to vector<8x128xf32>
    %207 = arith.addf %205, %206 : vector<8x128xf32>
    %208 = arith.index_cast %172 : i32 to index
    %c0_90 = arith.constant 0 : index
    %c0_91 = arith.constant 0 : index
    %209 = vector.load %arg8[%208, %c0_90, %c0_91] : memref<7x8x128xf32, #tpu.memory_space<vmem>>, vector<1x8x128xf32>
    %210 = vector.shape_cast %209 : vector<1x8x128xf32> to vector<8x128xf32>
    %211 = vector.shape_cast %207 : vector<8x128xf32> to vector<1x8x128xf32>
    tpu.vector_store %arg8[%208, %c0_90, %c0_91], %211 {strides = array<i32>} : memref<7x8x128xf32, #tpu.memory_space<vmem>>, vector<1x8x128xf32>,
    %c5_i32 = arith.constant 5 : i32
    %c1_i32_92 = arith.constant 1 : i32
    %212 = arith.muli %c5_i32, %c1_i32_92 : i32
    %c0_i32_93 = arith.constant 0 : i32
    %213 = arith.addi %c0_i32_93, %212 : i32
    %214 = arith.index_cast %213 : i32 to index
    %c0_94 = arith.constant 0 : index
    %c0_95 = arith.constant 0 : index
    %215 = vector.load %arg0[%214, %c0_94, %c0_95] : memref<7x8x16xf32, #tpu.memory_space<vmem>>, vector<1x8x16xf32>
    %216 = vector.shape_cast %215 : vector<1x8x16xf32> to vector<8x16xf32>
    %c0_96 = arith.constant 0 : index
    %c0_97 = arith.constant 0 : index
    %217 = vector.load %arg9[%c0_96, %c0_97] : memref<8x32xf32, #tpu.memory_space<vmem>>, vector<8x32xf32>
    %cst_98 = arith.constant dense<0.000000e+00> : vector<8x128xf32>
    %218 = tpu.matmul %216, %2, %cst_98 {dimension_numbers = #tpu.dot_dimension_numbers<[1], [0], [0], [1], [0, 0, 1, 1], [], []>} : vector<8x16xf32>, vector<16x128xf32>, vector<8x128xf32> -> vector<8x128xf32>
    %cst_99 = arith.constant dense<0.000000e+00> : vector<8x128xf32>
    %219 = tpu.matmul %217, %3, %cst_99 {dimension_numbers = #tpu.dot_dimension_numbers<[1], [0], [0], [1], [0, 0, 1, 1], [], []>} : vector<8x32xf32>, vector<32x128xf32>, vector<8x128xf32> -> vector<8x128xf32>
    %220 = arith.addf %218, %219 : vector<8x128xf32>
    %221 = vector.broadcast %4 : vector<1x128xf32> to vector<8x128xf32>
    %222 = arith.addf %220, %221 : vector<8x128xf32>
    %223 = vector.extract_strided_slice %222 {offsets = [0, 0], sizes = [8, 32], strides = [1, 1]} : vector<8x128xf32> to vector<8x32xf32>
    %224 = arith.negf %223 : vector<8x32xf32>
    %225 = math.exp %224 : vector<8x32xf32>
    %cst_100 = arith.constant 1.000000e+00 : f32
    %226 = vector.broadcast %cst_100 : f32 to vector<8x32xf32>
    %227 = arith.addf %226, %225 : vector<8x32xf32>
    %228 = arith.divf %226, %227 : vector<8x32xf32>
    %229 = vector.extract_strided_slice %222 {offsets = [0, 32], sizes = [8, 32], strides = [1, 1]} : vector<8x128xf32> to vector<8x32xf32>
    %230 = arith.negf %229 : vector<8x32xf32>
    %231 = math.exp %230 : vector<8x32xf32>
    %cst_101 = arith.constant 1.000000e+00 : f32
    %232 = vector.broadcast %cst_101 : f32 to vector<8x32xf32>
    %233 = arith.addf %232, %231 : vector<8x32xf32>
    %234 = arith.divf %232, %233 : vector<8x32xf32>
    %235 = vector.extract_strided_slice %222 {offsets = [0, 64], sizes = [8, 32], strides = [1, 1]} : vector<8x128xf32> to vector<8x32xf32>
    %236 = vector.extract_strided_slice %222 {offsets = [0, 96], sizes = [8, 32], strides = [1, 1]} : vector<8x128xf32> to vector<8x32xf32>
    %237 = arith.mulf %228, %236 : vector<8x32xf32>
    %238 = arith.addf %235, %237 : vector<8x32xf32>
    %239 = math.tanh %238 : vector<8x32xf32>
    %cst_102 = arith.constant 1.000000e+00 : f32
    %240 = vector.broadcast %cst_102 : f32 to vector<8x32xf32>
    %241 = arith.subf %240, %234 : vector<8x32xf32>
    %242 = arith.mulf %241, %239 : vector<8x32xf32>
    %243 = arith.mulf %234, %217 : vector<8x32xf32>
    %244 = arith.addf %242, %243 : vector<8x32xf32>
    %c0_103 = arith.constant 0 : index
    %c0_104 = arith.constant 0 : index
    %245 = vector.load %arg9[%c0_103, %c0_104] : memref<8x32xf32, #tpu.memory_space<vmem>>, vector<8x32xf32>
    tpu.vector_store %arg9[%c0_103, %c0_104], %244 {strides = array<i32>} : memref<8x32xf32, #tpu.memory_space<vmem>>, vector<8x32xf32>,
    %cst_105 = arith.constant dense<0.000000e+00> : vector<8x128xf32>
    %246 = tpu.matmul %244, %5, %cst_105 {dimension_numbers = #tpu.dot_dimension_numbers<[1], [0], [0], [1], [0, 0, 1, 1], [], []>} : vector<8x32xf32>, vector<32x128xf32>, vector<8x128xf32> -> vector<8x128xf32>
    %247 = vector.broadcast %6 : vector<1x128xf32> to vector<8x128xf32>
    %248 = arith.addf %246, %247 : vector<8x128xf32>
    %249 = arith.index_cast %213 : i32 to index
    %c0_106 = arith.constant 0 : index
    %c0_107 = arith.constant 0 : index
    %250 = vector.load %arg8[%249, %c0_106, %c0_107] : memref<7x8x128xf32, #tpu.memory_space<vmem>>, vector<1x8x128xf32>
    %251 = vector.shape_cast %250 : vector<1x8x128xf32> to vector<8x128xf32>
    %252 = vector.shape_cast %248 : vector<8x128xf32> to vector<1x8x128xf32>
    tpu.vector_store %arg8[%249, %c0_106, %c0_107], %252 {strides = array<i32>} : memref<7x8x128xf32, #tpu.memory_space<vmem>>, vector<1x8x128xf32>,
    %c6_i32 = arith.constant 6 : i32
    %c1_i32_108 = arith.constant 1 : i32
    %253 = arith.muli %c6_i32, %c1_i32_108 : i32
    %c0_i32_109 = arith.constant 0 : i32
    %254 = arith.addi %c0_i32_109, %253 : i32
    %255 = arith.index_cast %254 : i32 to index
    %c0_110 = arith.constant 0 : index
    %c0_111 = arith.constant 0 : index
    %256 = vector.load %arg0[%255, %c0_110, %c0_111] : memref<7x8x16xf32, #tpu.memory_space<vmem>>, vector<1x8x16xf32>
    %257 = vector.shape_cast %256 : vector<1x8x16xf32> to vector<8x16xf32>
    %c0_112 = arith.constant 0 : index
    %c0_113 = arith.constant 0 : index
    %258 = vector.load %arg9[%c0_112, %c0_113] : memref<8x32xf32, #tpu.memory_space<vmem>>, vector<8x32xf32>
    %cst_114 = arith.constant dense<0.000000e+00> : vector<8x128xf32>
    %259 = tpu.matmul %257, %2, %cst_114 {dimension_numbers = #tpu.dot_dimension_numbers<[1], [0], [0], [1], [0, 0, 1, 1], [], []>} : vector<8x16xf32>, vector<16x128xf32>, vector<8x128xf32> -> vector<8x128xf32>
    %cst_115 = arith.constant dense<0.000000e+00> : vector<8x128xf32>
    %260 = tpu.matmul %258, %3, %cst_115 {dimension_numbers = #tpu.dot_dimension_numbers<[1], [0], [0], [1], [0, 0, 1, 1], [], []>} : vector<8x32xf32>, vector<32x128xf32>, vector<8x128xf32> -> vector<8x128xf32>
    %261 = arith.addf %259, %260 : vector<8x128xf32>
    %262 = vector.broadcast %4 : vector<1x128xf32> to vector<8x128xf32>
    %263 = arith.addf %261, %262 : vector<8x128xf32>
    %264 = vector.extract_strided_slice %263 {offsets = [0, 0], sizes = [8, 32], strides = [1, 1]} : vector<8x128xf32> to vector<8x32xf32>
    %265 = arith.negf %264 : vector<8x32xf32>
    %266 = math.exp %265 : vector<8x32xf32>
    %cst_116 = arith.constant 1.000000e+00 : f32
    %267 = vector.broadcast %cst_116 : f32 to vector<8x32xf32>
    %268 = arith.addf %267, %266 : vector<8x32xf32>
    %269 = arith.divf %267, %268 : vector<8x32xf32>
    %270 = vector.extract_strided_slice %263 {offsets = [0, 32], sizes = [8, 32], strides = [1, 1]} : vector<8x128xf32> to vector<8x32xf32>
    %271 = arith.negf %270 : vector<8x32xf32>
    %272 = math.exp %271 : vector<8x32xf32>
    %cst_117 = arith.constant 1.000000e+00 : f32
    %273 = vector.broadcast %cst_117 : f32 to vector<8x32xf32>
    %274 = arith.addf %273, %272 : vector<8x32xf32>
    %275 = arith.divf %273, %274 : vector<8x32xf32>
    %276 = vector.extract_strided_slice %263 {offsets = [0, 64], sizes = [8, 32], strides = [1, 1]} : vector<8x128xf32> to vector<8x32xf32>
    %277 = vector.extract_strided_slice %263 {offsets = [0, 96], sizes = [8, 32], strides = [1, 1]} : vector<8x128xf32> to vector<8x32xf32>
    %278 = arith.mulf %269, %277 : vector<8x32xf32>
    %279 = arith.addf %276, %278 : vector<8x32xf32>
    %280 = math.tanh %279 : vector<8x32xf32>
    %cst_118 = arith.constant 1.000000e+00 : f32
    %281 = vector.broadcast %cst_118 : f32 to vector<8x32xf32>
    %282 = arith.subf %281, %275 : vector<8x32xf32>
    %283 = arith.mulf %282, %280 : vector<8x32xf32>
    %284 = arith.mulf %275, %258 : vector<8x32xf32>
    %285 = arith.addf %283, %284 : vector<8x32xf32>
    %c0_119 = arith.constant 0 : index
    %c0_120 = arith.constant 0 : index
    %286 = vector.load %arg9[%c0_119, %c0_120] : memref<8x32xf32, #tpu.memory_space<vmem>>, vector<8x32xf32>
    tpu.vector_store %arg9[%c0_119, %c0_120], %285 {strides = array<i32>} : memref<8x32xf32, #tpu.memory_space<vmem>>, vector<8x32xf32>,
    %cst_121 = arith.constant dense<0.000000e+00> : vector<8x128xf32>
    %287 = tpu.matmul %285, %5, %cst_121 {dimension_numbers = #tpu.dot_dimension_numbers<[1], [0], [0], [1], [0, 0, 1, 1], [], []>} : vector<8x32xf32>, vector<32x128xf32>, vector<8x128xf32> -> vector<8x128xf32>
    %288 = vector.broadcast %6 : vector<1x128xf32> to vector<8x128xf32>
    %289 = arith.addf %287, %288 : vector<8x128xf32>
    %290 = arith.index_cast %254 : i32 to index
    %c0_122 = arith.constant 0 : index
    %c0_123 = arith.constant 0 : index
    %291 = vector.load %arg8[%290, %c0_122, %c0_123] : memref<7x8x128xf32, #tpu.memory_space<vmem>>, vector<1x8x128xf32>
    %292 = vector.shape_cast %291 : vector<1x8x128xf32> to vector<8x128xf32>
    %293 = vector.shape_cast %289 : vector<8x128xf32> to vector<1x8x128xf32>
    tpu.vector_store %arg8[%290, %c0_122, %c0_123], %293 {strides = array<i32>} : memref<7x8x128xf32, #tpu.memory_space<vmem>>, vector<1x8x128xf32>,
    %c7_i32 = arith.constant 7 : i32
    return
  }
}

</mosaic_0001>

<llo_original>
// kernel: encoder_decoder_forward.3
$region0: #{encoder_decoder_forward.3}
  #allocation0 [shape = 'u32[]', space=smem, size = 0x4, offset = 0x4, fixed_abs, tag = 'smem constant byte address 0x4 - core index']
  #allocation1 [shape = 'u32[72,128]{1,0:T(1,128)}', space=vmem, size = 0x9000, scoped, tag = 'internal scratch']
  #allocation2 [shape = 'f32[8,32]{1,0:T(8,128)}', space=vmem, size = 0x1000, scoped, tag = 'scratch operand']
  #allocation3 [shape = 'f32[8,16]{1,0:T(8,128)}', space=vmem, size = 0x1000, scoped, tag = 'scratch operand']
  %s0 = inlined_call_operand.vmem [shape: f32[7,8,16], index: 0, kind: input, shape index: {}]
  %s1 = inlined_call_operand.vmem [shape: f32[8,32], index: 1, kind: input, shape index: {}]
  %s2 = inlined_call_operand.vmem [shape: f32[128,16], index: 2, kind: input, shape index: {}]
  %s3 = inlined_call_operand.vmem [shape: f32[16,128], index: 3, kind: input, shape index: {}]
  %s4 = inlined_call_operand.vmem [shape: f32[32,128], index: 4, kind: input, shape index: {}]
  %s5 = inlined_call_operand.vmem [shape: f32[1,128], index: 5, kind: input, shape index: {}]
  %s6 = inlined_call_operand.vmem [shape: f32[32,128], index: 6, kind: input, shape index: {}]
  %s7 = inlined_call_operand.vmem [shape: f32[1,128], index: 7, kind: input, shape index: {}]
  %s8 = inlined_call_operand.vmem [shape: f32[7,8,128], index: 8, kind: output, shape index: {}]
  %s9 = sld [smem:[#allocation0]]
  $region42: #{encoder_decoder_forward.3} parent=0
    _
  %s11 = ssub.s32 1, %s9
  %s12 = scalar_select 0, %s11, %s9
  // Predicated region
  $region2: #{encoder_decoder_forward.3} parent=0 // pred_check
    _
  $region3: #{encoder_decoder_forward.3} parent=0 // pred_check_branch
    %14 = sbr.rel (0) target = $region5
  $region4: #{encoder_decoder_forward.3} parent=0 // pred_region
    _
  $region5: #{encoder_decoder_forward.3} parent=0 // pred_fallthru
    _
  // Predicated region
  $region6: #{encoder_decoder_forward.3} parent=0 // pred_check
    _
  $region7: #{encoder_decoder_forward.3} parent=0 // pred_check_branch
    %16 = sbr.rel (0) target = $region9
  $region8: #{encoder_decoder_forward.3} parent=0 // pred_region
    _
  $region9: #{encoder_decoder_forward.3} parent=0 // pred_fallthru
    _
  // Predicated region
  $region10: #{encoder_decoder_forward.3} parent=0 // pred_check
    _
  $region11: #{encoder_decoder_forward.3} parent=0 // pred_check_branch
    %18 = sbr.rel (0) target = $region13
  $region12: #{encoder_decoder_forward.3} parent=0 // pred_region
    _
  $region13: #{encoder_decoder_forward.3} parent=0 // pred_fallthru
    _
  // Predicated region
  $region14: #{encoder_decoder_forward.3} parent=0 // pred_check
    _
  $region15: #{encoder_decoder_forward.3} parent=0 // pred_check_branch
    %20 = sbr.rel (0) target = $region17
  $region16: #{encoder_decoder_forward.3} parent=0 // pred_region
    _
  $region17: #{encoder_decoder_forward.3} parent=0 // pred_fallthru
    _
  // Predicated region
  $region18: #{encoder_decoder_forward.3} parent=0 // pred_check
    _
  $region19: #{encoder_decoder_forward.3} parent=0 // pred_check_branch
    %22 = sbr.rel (0) target = $region21
  $region20: #{encoder_decoder_forward.3} parent=0 // pred_region
    _
  $region21: #{encoder_decoder_forward.3} parent=0 // pred_fallthru
    _
  // Predicated region
  $region22: #{encoder_decoder_forward.3} parent=0 // pred_check
    _
  $region23: #{encoder_decoder_forward.3} parent=0 // pred_check_branch
    %24 = sbr.rel (0) target = $region25
  $region24: #{encoder_decoder_forward.3} parent=0 // pred_region
    _
  $region25: #{encoder_decoder_forward.3} parent=0 // pred_fallthru
    _
  // Predicated region
  $region26: #{encoder_decoder_forward.3} parent=0 // pred_check
    _
  $region27: #{encoder_decoder_forward.3} parent=0 // pred_check_branch
    %26 = sbr.rel (0) target = $region29
  $region28: #{encoder_decoder_forward.3} parent=0 // pred_region
    _
  $region29: #{encoder_decoder_forward.3} parent=0 // pred_fallthru
    _
  // Predicated region
  $region30: #{encoder_decoder_forward.3} parent=0 // pred_check
    _
  $region31: #{encoder_decoder_forward.3} parent=0 // pred_check_branch
    %28 = sbr.rel (0) target = $region33
  $region32: #{encoder_decoder_forward.3} parent=0 // pred_region
    _
  $region33: #{encoder_decoder_forward.3} parent=0 // pred_fallthru
    _
  %v29 = vld [vmem:[%s1] sm:$0xff]
  %vm30 = vcmask 261120
  %31 = vst.msk [vmem:[#allocation2] sm:$0xff] %vm30, %v29
  %v32 = vld [vmem:[%s3] sm:$0xff]
  %v33 = vld [vmem:[%s3 + $0x8] sm:$0xff]
  %v34 = vld [vmem:[%s4] sm:$0xff]
  %v35 = vld [vmem:[%s4 + $0x8] sm:$0xff]
  %v36 = vld [vmem:[%s4 + $0x10] sm:$0xff]
  %v37 = vld [vmem:[%s4 + $0x18] sm:$0xff]
  %v38 = vld [vmem:[%s5] sm:$0x1]
  %v39 = vld [vmem:[%s6] sm:$0xff]
  %v40 = vld [vmem:[%s6 + $0x8] sm:$0xff]
  %v41 = vld [vmem:[%s6 + $0x10] sm:$0xff]
  %v42 = vld [vmem:[%s6 + $0x18] sm:$0xff]
  %v43 = vld [vmem:[%s7] sm:$0x1]
  %v44 = vld [vmem:[%s0] sm:$0xff]
  %v45 = vld [vmem:[#allocation2] sm:$0xff]
  %v47 = vsel %vm30, %v45, 0
  %49 = vmatpush.msra.mxu0 0.0
  %50 = vmatpush.msra.mxu0 0.0
  %51 = vmatpush.msra.mxu0 0.0
  %52 = vmatpush.msra.mxu0 0.0
  %53 = vmatpush.msra.mxu0 0.0
  %54 = vmatpush.msra.mxu0 0.0
  %55 = vmatpush.msra.mxu0 0.0
  %56 = vmatpush.msra.mxu0 0.0
  %57 = vmatpush.msra.mxu0 0.0
  %58 = vmatpush.msra.mxu0 0.0
  %59 = vmatpush.msra.mxu0 0.0
  %60 = vmatpush.msra.mxu0 0.0
  %61 = vmatpush.msra.mxu0 %v37
  %62 = vmatpush.msra.mxu0 %v36
  %63 = vmatpush.msra.mxu0 %v35
  %64 = vmatpush.msra.mxu0 %v34
  %65 = vmatmul.f32.gmra.mxu0 %v47
  %v66 = vpop.f32.mrf.mxu0
  %v67 = vadd.f32 0.0, %v66
  %68 = vdwg.mxu0
  %vm69 = vcmask 130048
  %v71 = vsel %vm69, %v44, 0
  %73 = vmatpush.msra.mxu0 0.0
  %74 = vmatpush.msra.mxu0 0.0
  %75 = vmatpush.msra.mxu0 0.0
  %76 = vmatpush.msra.mxu0 0.0
  %77 = vmatpush.msra.mxu0 0.0
  %78 = vmatpush.msra.mxu0 0.0
  %79 = vmatpush.msra.mxu0 0.0
  %80 = vmatpush.msra.mxu0 0.0
  %81 = vmatpush.msra.mxu0 0.0
  %82 = vmatpush.msra.mxu0 0.0
  %83 = vmatpush.msra.mxu0 0.0
  %84 = vmatpush.msra.mxu0 0.0
  %85 = vmatpush.msra.mxu0 0.0
  %86 = vmatpush.msra.mxu0 0.0
  %87 = vmatpush.msra.mxu0 %v33
  %88 = vmatpush.msra.mxu0 %v32
  %89 = vmatmul.f32.gmra.mxu0 %v71
  %v90 = vpop.f32.mrf.mxu0
  %v91 = vadd.f32 %v67, %v90
  %92 = vdwg.mxu0
  %v94 = vperm.slane %v38, 0
  %v96 = vadd.f32 %v91, %v94
  %v97 = vxor.u32 %v96, 2147483648
  %v98 = vmul.f32 %v97, 1.442695
  %v99 = vpow.pop %v98
  %v100 = vadd.f32 %v99, 1.0
  %v101 = vrcp.pop %v100
  %v102 = vmul.f32 %v100, %v101
  %v103 = vsub.f32 1.0, %v102
  %v104 = vmul.f32 %v101, %v103
  %v105 = vadd.f32 %v101, %v104
  %vm106 = vweird.f32 %v100
  %vm107 = vweird.f32 %v101
  %vm108 = vmor %vm106, %vm107
  %v109 = vsel %vm108, %v101, %v105
  %v110 = vand.u32 2147483647, %v100
  %vm111 = vcmp.eq.f32.partialorder %v110, 8.507059e+37
  %v112 = vand.u32 %v100, 2147483648
  %v113 = vor.u32 1.1754944e-38, %v112
  %v114 = vsel %vm111, %v113, %v109
  %v115 = vmul.f32 1.0, %v114
  %117 = vrot.lane.b32.xlu0 %v96, 32
  %v118 = vpop.permute.xlu0 %117
  %v120 = vmul.f32 %v115, %v118
  %122 = vrot.lane.b32.xlu0 %v120, 64
  %v123 = vpop.permute.xlu0 %122
  %v125 = vadd.f32 %v96, %v123
  %v126 = vtanh.pop %v125
  %v127 = vsub.f32 1.0, %v115
  %129 = vrot.lane.b32.xlu0 %v126, 96
  %v130 = vpop.permute.xlu0 %129
  %v132 = vmul.f32 %v127, %v130
  %133 = vrot.lane.b32.xlu0 %v45, 32
  %v134 = vpop.permute.xlu0 %133
  %v136 = vmul.f32 %v115, %v134
  %v137 = vadd.f32 %v132, %v136
  %139 = vrot.lane.b32.xlu0 %v137, 96
  %v140 = vpop.permute.xlu0 %139
  %142 = vst.msk [vmem:[#allocation2] sm:$0xff] %vm30, %v140
  %v144 = vperm.slane %v43, 0
  %v146 = vsel %vm30, %v140, 0
  %148 = vmatpush.msra.mxu0 0.0
  %149 = vmatpush.msra.mxu0 0.0
  %150 = vmatpush.msra.mxu0 0.0
  %151 = vmatpush.msra.mxu0 0.0
  %152 = vmatpush.msra.mxu0 0.0
  %153 = vmatpush.msra.mxu0 0.0
  %154 = vmatpush.msra.mxu0 0.0
  %155 = vmatpush.msra.mxu0 0.0
  %156 = vmatpush.msra.mxu0 0.0
  %157 = vmatpush.msra.mxu0 0.0
  %158 = vmatpush.msra.mxu0 0.0
  %159 = vmatpush.msra.mxu0 0.0
  %160 = vmatpush.msra.mxu0 %v42
  %161 = vmatpush.msra.mxu0 %v41
  %162 = vmatpush.msra.mxu0 %v40
  %163 = vmatpush.msra.mxu0 %v39
  %164 = vmatmul.f32.gmra.mxu0 %v146
  %v165 = vpop.f32.mrf.mxu0
  %v166 = vadd.f32 %v144, %v165
  %167 = vdwg.mxu0
  %168 = vst [vmem:[%s8] sm:$0xff] %v166
  %s169 = scalar_lea.vmem %s0, 8
  %v170 = vld [vmem:[%s169] sm:$0xff]
  %v171 = vld [vmem:[#allocation2] sm:$0xff]
  %v173 = vsel %vm30, %v171, 0
  %175 = vmatpush.msra.mxu0 0.0
  %176 = vmatpush.msra.mxu0 0.0
  %177 = vmatpush.msra.mxu0 0.0
  %178 = vmatpush.msra.mxu0 0.0
  %179 = vmatpush.msra.mxu0 0.0
  %180 = vmatpush.msra.mxu0 0.0
  %181 = vmatpush.msra.mxu0 0.0
  %182 = vmatpush.msra.mxu0 0.0
  %183 = vmatpush.msra.mxu0 0.0
  %184 = vmatpush.msra.mxu0 0.0
  %185 = vmatpush.msra.mxu0 0.0
  %186 = vmatpush.msra.mxu0 0.0
  %187 = vmatpush.msra.mxu0 %v37
  %188 = vmatpush.msra.mxu0 %v36
  %189 = vmatpush.msra.mxu0 %v35
  %190 = vmatpush.msra.mxu0 %v34
  %191 = vmatmul.f32.gmra.mxu0 %v173
  %v192 = vpop.f32.mrf.mxu0
  %v193 = vadd.f32 0.0, %v192
  %194 = vdwg.mxu0
  %v196 = vsel %vm69, %v170, 0
  %198 = vmatpush.msra.mxu0 0.0
  %199 = vmatpush.msra.mxu0 0.0
  %200 = vmatpush.msra.mxu0 0.0
  %201 = vmatpush.msra.mxu0 0.0
  %202 = vmatpush.msra.mxu0 0.0
  %203 = vmatpush.msra.mxu0 0.0
  %204 = vmatpush.msra.mxu0 0.0
  %205 = vmatpush.msra.mxu0 0.0
  %206 = vmatpush.msra.mxu0 0.0
  %207 = vmatpush.msra.mxu0 0.0
  %208 = vmatpush.msra.mxu0 0.0
  %209 = vmatpush.msra.mxu0 0.0
  %210 = vmatpush.msra.mxu0 0.0
  %211 = vmatpush.msra.mxu0 0.0
  %212 = vmatpush.msra.mxu0 %v33
  %213 = vmatpush.msra.mxu0 %v32
  %214 = vmatmul.f32.gmra.mxu0 %v196
  %v215 = vpop.f32.mrf.mxu0
  %v216 = vadd.f32 %v193, %v215
  %217 = vdwg.mxu0
  %v218 = vadd.f32 %v216, %v94
  %v219 = vxor.u32 %v218, 2147483648
  %v220 = vmul.f32 %v219, 1.442695
  %v221 = vpow.pop %v220
  %v222 = vadd.f32 %v221, 1.0
  %v223 = vrcp.pop %v222
  %v224 = vmul.f32 %v222, %v223
  %v225 = vsub.f32 1.0, %v224
  %v226 = vmul.f32 %v223, %v225
  %v227 = vadd.f32 %v223, %v226
  %vm228 = vweird.f32 %v222
  %vm229 = vweird.f32 %v223
  %vm230 = vmor %vm228, %vm229
  %v231 = vsel %vm230, %v223, %v227
  %v232 = vand.u32 2147483647, %v222
  %vm233 = vcmp.eq.f32.partialorder %v232, 8.507059e+37
  %v234 = vand.u32 %v222, 2147483648
  %v235 = vor.u32 1.1754944e-38, %v234
  %v236 = vsel %vm233, %v235, %v231
  %v237 = vmul.f32 1.0, %v236
  %239 = vrot.lane.b32.xlu0 %v218, 32
  %v240 = vpop.permute.xlu0 %239
  %v242 = vmul.f32 %v237, %v240
  %244 = vrot.lane.b32.xlu0 %v242, 64
  %v245 = vpop.permute.xlu0 %244
  %v247 = vadd.f32 %v218, %v245
  %v248 = vtanh.pop %v247
  %v249 = vsub.f32 1.0, %v237
  %251 = vrot.lane.b32.xlu0 %v248, 96
  %v252 = vpop.permute.xlu0 %251
  %v254 = vmul.f32 %v249, %v252
  %255 = vrot.lane.b32.xlu0 %v171, 32
  %v256 = vpop.permute.xlu0 %255
  %v258 = vmul.f32 %v237, %v256
  %v259 = vadd.f32 %v254, %v258
  %261 = vrot.lane.b32.xlu0 %v259, 96
  %v262 = vpop.permute.xlu0 %261
  %264 = vst.msk [vmem:[#allocation2] sm:$0xff] %vm30, %v262
  %v265 = vsel %vm30, %v262, 0
  %267 = vmatpush.msra.mxu0 0.0
  %268 = vmatpush.msra.mxu0 0.0
  %269 = vmatpush.msra.mxu0 0.0
  %270 = vmatpush.msra.mxu0 0.0
  %271 = vmatpush.msra.mxu0 0.0
  %272 = vmatpush.msra.mxu0 0.0
  %273 = vmatpush.msra.mxu0 0.0
  %274 = vmatpush.msra.mxu0 0.0
  %275 = vmatpush.msra.mxu0 0.0
  %276 = vmatpush.msra.mxu0 0.0
  %277 = vmatpush.msra.mxu0 0.0
  %278 = vmatpush.msra.mxu0 0.0
  %279 = vmatpush.msra.mxu0 %v42
  %280 = vmatpush.msra.mxu0 %v41
  %281 = vmatpush.msra.mxu0 %v40
  %282 = vmatpush.msra.mxu0 %v39
  %283 = vmatmul.f32.gmra.mxu0 %v265
  %v284 = vpop.f32.mrf.mxu0
  %v285 = vadd.f32 %v144, %v284
  %286 = vdwg.mxu0
  %s287 = scalar_lea.vmem %s8, 8
  %288 = vst [vmem:[%s287] sm:$0xff] %v285
  %s289 = scalar_lea.vmem %s0, 16
  %v290 = vld [vmem:[%s289] sm:$0xff]
  %v291 = vld [vmem:[#allocation2] sm:$0xff]
  %v293 = vsel %vm30, %v291, 0
  %295 = vmatpush.msra.mxu0 0.0
  %296 = vmatpush.msra.mxu0 0.0
  %297 = vmatpush.msra.mxu0 0.0
  %298 = vmatpush.msra.mxu0 0.0
  %299 = vmatpush.msra.mxu0 0.0
  %300 = vmatpush.msra.mxu0 0.0
  %301 = vmatpush.msra.mxu0 0.0
  %302 = vmatpush.msra.mxu0 0.0
  %303 = vmatpush.msra.mxu0 0.0
  %304 = vmatpush.msra.mxu0 0.0
  %305 = vmatpush.msra.mxu0 0.0
  %306 = vmatpush.msra.mxu0 0.0
  %307 = vmatpush.msra.mxu0 %v37
  %308 = vmatpush.msra.mxu0 %v36
  %309 = vmatpush.msra.mxu0 %v35
  %310 = vmatpush.msra.mxu0 %v34
  %311 = vmatmul.f32.gmra.mxu0 %v293
  %v312 = vpop.f32.mrf.mxu0
  %v313 = vadd.f32 0.0, %v312
  %314 = vdwg.mxu0
  %v316 = vsel %vm69, %v290, 0
  %318 = vmatpush.msra.mxu0 0.0
  %319 = vmatpush.msra.mxu0 0.0
  %320 = vmatpush.msra.mxu0 0.0
  %321 = vmatpush.msra.mxu0 0.0
  %322 = vmatpush.msra.mxu0 0.0
  %323 = vmatpush.msra.mxu0 0.0
  %324 = vmatpush.msra.mxu0 0.0
  %325 = vmatpush.msra.mxu0 0.0
  %326 = vmatpush.msra.mxu0 0.0
  %327 = vmatpush.msra.mxu0 0.0
  %328 = vmatpush.msra.mxu0 0.0
  %329 = vmatpush.msra.mxu0 0.0
  %330 = vmatpush.msra.mxu0 0.0
  %331 = vmatpush.msra.mxu0 0.0
  %332 = vmatpush.msra.mxu0 %v33
  %333 = vmatpush.msra.mxu0 %v32
  %334 = vmatmul.f32.gmra.mxu0 %v316
  %v335 = vpop.f32.mrf.mxu0
  %v336 = vadd.f32 %v313, %v335
  %337 = vdwg.mxu0
  %v338 = vadd.f32 %v336, %v94
  %v339 = vxor.u32 %v338, 2147483648
  %v340 = vmul.f32 %v339, 1.442695
  %v341 = vpow.pop %v340
  %v342 = vadd.f32 %v341, 1.0
  %v343 = vrcp.pop %v342
  %v344 = vmul.f32 %v342, %v343
  %v345 = vsub.f32 1.0, %v344
  %v346 = vmul.f32 %v343, %v345
  %v347 = vadd.f32 %v343, %v346
  %vm348 = vweird.f32 %v342
  %vm349 = vweird.f32 %v343
  %vm350 = vmor %vm348, %vm349
  %v351 = vsel %vm350, %v343, %v347
  %v352 = vand.u32 2147483647, %v342
  %vm353 = vcmp.eq.f32.partialorder %v352, 8.507059e+37
  %v354 = vand.u32 %v342, 2147483648
  %v355 = vor.u32 1.1754944e-38, %v354
  %v356 = vsel %vm353, %v355, %v351
  %v357 = vmul.f32 1.0, %v356
  %359 = vrot.lane.b32.xlu0 %v338, 32
  %v360 = vpop.permute.xlu0 %359
  %v362 = vmul.f32 %v357, %v360
  %364 = vrot.lane.b32.xlu0 %v362, 64
  %v365 = vpop.permute.xlu0 %364
  %v367 = vadd.f32 %v338, %v365
  %v368 = vtanh.pop %v367
  %v369 = vsub.f32 1.0, %v357
  %371 = vrot.lane.b32.xlu0 %v368, 96
  %v372 = vpop.permute.xlu0 %371
  %v374 = vmul.f32 %v369, %v372
  %375 = vrot.lane.b32.xlu0 %v291, 32
  %v376 = vpop.permute.xlu0 %375
  %v378 = vmul.f32 %v357, %v376
  %v379 = vadd.f32 %v374, %v378
  %381 = vrot.lane.b32.xlu0 %v379, 96
  %v382 = vpop.permute.xlu0 %381
  %384 = vst.msk [vmem:[#allocation2] sm:$0xff] %vm30, %v382
  %v385 = vsel %vm30, %v382, 0
  %387 = vmatpush.msra.mxu0 0.0
  %388 = vmatpush.msra.mxu0 0.0
  %389 = vmatpush.msra.mxu0 0.0
  %390 = vmatpush.msra.mxu0 0.0
  %391 = vmatpush.msra.mxu0 0.0
  %392 = vmatpush.msra.mxu0 0.0
  %393 = vmatpush.msra.mxu0 0.0
  %394 = vmatpush.msra.mxu0 0.0
  %395 = vmatpush.msra.mxu0 0.0
  %396 = vmatpush.msra.mxu0 0.0
  %397 = vmatpush.msra.mxu0 0.0
  %398 = vmatpush.msra.mxu0 0.0
  %399 = vmatpush.msra.mxu0 %v42
  %400 = vmatpush.msra.mxu0 %v41
  %401 = vmatpush.msra.mxu0 %v40
  %402 = vmatpush.msra.mxu0 %v39
  %403 = vmatmul.f32.gmra.mxu0 %v385
  %v404 = vpop.f32.mrf.mxu0
  %v405 = vadd.f32 %v144, %v404
  %406 = vdwg.mxu0
  %s407 = scalar_lea.vmem %s8, 16
  %408 = vst [vmem:[%s407] sm:$0xff] %v405
  %s409 = scalar_lea.vmem %s0, 24
  %v410 = vld [vmem:[%s409] sm:$0xff]
  %v411 = vld [vmem:[#allocation2] sm:$0xff]
  %v413 = vsel %vm30, %v411, 0
  %415 = vmatpush.msra.mxu0 0.0
  %416 = vmatpush.msra.mxu0 0.0
  %417 = vmatpush.msra.mxu0 0.0
  %418 = vmatpush.msra.mxu0 0.0
  %419 = vmatpush.msra.mxu0 0.0
  %420 = vmatpush.msra.mxu0 0.0
  %421 = vmatpush.msra.mxu0 0.0
  %422 = vmatpush.msra.mxu0 0.0
  %423 = vmatpush.msra.mxu0 0.0
  %424 = vmatpush.msra.mxu0 0.0
  %425 = vmatpush.msra.mxu0 0.0
  %426 = vmatpush.msra.mxu0 0.0
  %427 = vmatpush.msra.mxu0 %v37
  %428 = vmatpush.msra.mxu0 %v36
  %429 = vmatpush.msra.mxu0 %v35
  %430 = vmatpush.msra.mxu0 %v34
  %431 = vmatmul.f32.gmra.mxu0 %v413
  %v432 = vpop.f32.mrf.mxu0
  %v433 = vadd.f32 0.0, %v432
  %434 = vdwg.mxu0
  %v436 = vsel %vm69, %v410, 0
  %438 = vmatpush.msra.mxu0 0.0
  %439 = vmatpush.msra.mxu0 0.0
  %440 = vmatpush.msra.mxu0 0.0
  %441 = vmatpush.msra.mxu0 0.0
  %442 = vmatpush.msra.mxu0 0.0
  %443 = vmatpush.msra.mxu0 0.0
  %444 = vmatpush.msra.mxu0 0.0
  %445 = vmatpush.msra.mxu0 0.0
  %446 = vmatpush.msra.mxu0 0.0
  %447 = vmatpush.msra.mxu0 0.0
  %448 = vmatpush.msra.mxu0 0.0
  %449 = vmatpush.msra.mxu0 0.0
  %450 = vmatpush.msra.mxu0 0.0
  %451 = vmatpush.msra.mxu0 0.0
  %452 = vmatpush.msra.mxu0 %v33
  %453 = vmatpush.msra.mxu0 %v32
  %454 = vmatmul.f32.gmra.mxu0 %v436
  %v455 = vpop.f32.mrf.mxu0
  %v456 = vadd.f32 %v433, %v455
  %457 = vdwg.mxu0
  %v458 = vadd.f32 %v456, %v94
  %v459 = vxor.u32 %v458, 2147483648
  %v460 = vmul.f32 %v459, 1.442695
  %v461 = vpow.pop %v460
  %v462 = vadd.f32 %v461, 1.0
  %v463 = vrcp.pop %v462
  %v464 = vmul.f32 %v462, %v463
  %v465 = vsub.f32 1.0, %v464
  %v466 = vmul.f32 %v463, %v465
  %v467 = vadd.f32 %v463, %v466
  %vm468 = vweird.f32 %v462
  %vm469 = vweird.f32 %v463
  %vm470 = vmor %vm468, %vm469
  %v471 = vsel %vm470, %v463, %v467
  %v472 = vand.u32 2147483647, %v462
  %vm473 = vcmp.eq.f32.partialorder %v472, 8.507059e+37
  %v474 = vand.u32 %v462, 2147483648
  %v475 = vor.u32 1.1754944e-38, %v474
  %v476 = vsel %vm473, %v475, %v471
  %v477 = vmul.f32 1.0, %v476
  %479 = vrot.lane.b32.xlu0 %v458, 32
  %v480 = vpop.permute.xlu0 %479
  %v482 = vmul.f32 %v477, %v480
  %484 = vrot.lane.b32.xlu0 %v482, 64
  %v485 = vpop.permute.xlu0 %484
  %v487 = vadd.f32 %v458, %v485
  %v488 = vtanh.pop %v487
  %v489 = vsub.f32 1.0, %v477
  %491 = vrot.lane.b32.xlu0 %v488, 96
  %v492 = vpop.permute.xlu0 %491
  %v494 = vmul.f32 %v489, %v492
  %495 = vrot.lane.b32.xlu0 %v411, 32
  %v496 = vpop.permute.xlu0 %495
  %v498 = vmul.f32 %v477, %v496
  %v499 = vadd.f32 %v494, %v498
  %501 = vrot.lane.b32.xlu0 %v499, 96
  %v502 = vpop.permute.xlu0 %501
  %504 = vst.msk [vmem:[#allocation2] sm:$0xff] %vm30, %v502
  %v505 = vsel %vm30, %v502, 0
  %507 = vmatpush.msra.mxu0 0.0
  %508 = vmatpush.msra.mxu0 0.0
  %509 = vmatpush.msra.mxu0 0.0
  %510 = vmatpush.msra.mxu0 0.0
  %511 = vmatpush.msra.mxu0 0.0
  %512 = vmatpush.msra.mxu0 0.0
  %513 = vmatpush.msra.mxu0 0.0
  %514 = vmatpush.msra.mxu0 0.0
  %515 = vmatpush.msra.mxu0 0.0
  %516 = vmatpush.msra.mxu0 0.0
  %517 = vmatpush.msra.mxu0 0.0
  %518 = vmatpush.msra.mxu0 0.0
  %519 = vmatpush.msra.mxu0 %v42
  %520 = vmatpush.msra.mxu0 %v41
  %521 = vmatpush.msra.mxu0 %v40
  %522 = vmatpush.msra.mxu0 %v39
  %523 = vmatmul.f32.gmra.mxu0 %v505
  %v524 = vpop.f32.mrf.mxu0
  %v525 = vadd.f32 %v144, %v524
  %526 = vdwg.mxu0
  %s527 = scalar_lea.vmem %s8, 24
  %528 = vst [vmem:[%s527] sm:$0xff] %v525
  %s529 = scalar_lea.vmem %s0, 32
  %v530 = vld [vmem:[%s529] sm:$0xff]
  %v531 = vld [vmem:[#allocation2] sm:$0xff]
  %v533 = vsel %vm30, %v531, 0
  %535 = vmatpush.msra.mxu0 0.0
  %536 = vmatpush.msra.mxu0 0.0
  %537 = vmatpush.msra.mxu0 0.0
  %538 = vmatpush.msra.mxu0 0.0
  %539 = vmatpush.msra.mxu0 0.0
  %540 = vmatpush.msra.mxu0 0.0
  %541 = vmatpush.msra.mxu0 0.0
  %542 = vmatpush.msra.mxu0 0.0
  %543 = vmatpush.msra.mxu0 0.0
  %544 = vmatpush.msra.mxu0 0.0
  %545 = vmatpush.msra.mxu0 0.0
  %546 = vmatpush.msra.mxu0 0.0
  %547 = vmatpush.msra.mxu0 %v37
  %548 = vmatpush.msra.mxu0 %v36
  %549 = vmatpush.msra.mxu0 %v35
  %550 = vmatpush.msra.mxu0 %v34
  %551 = vmatmul.f32.gmra.mxu0 %v533
  %v552 = vpop.f32.mrf.mxu0
  %v553 = vadd.f32 0.0, %v552
  %554 = vdwg.mxu0
  %v556 = vsel %vm69, %v530, 0
  %558 = vmatpush.msra.mxu0 0.0
  %559 = vmatpush.msra.mxu0 0.0
  %560 = vmatpush.msra.mxu0 0.0
  %561 = vmatpush.msra.mxu0 0.0
  %562 = vmatpush.msra.mxu0 0.0
  %563 = vmatpush.msra.mxu0 0.0
  %564 = vmatpush.msra.mxu0 0.0
  %565 = vmatpush.msra.mxu0 0.0
  %566 = vmatpush.msra.mxu0 0.0
  %567 = vmatpush.msra.mxu0 0.0
  %568 = vmatpush.msra.mxu0 0.0
  %569 = vmatpush.msra.mxu0 0.0
  %570 = vmatpush.msra.mxu0 0.0
  %571 = vmatpush.msra.mxu0 0.0
  %572 = vmatpush.msra.mxu0 %v33
  %573 = vmatpush.msra.mxu0 %v32
  %574 = vmatmul.f32.gmra.mxu0 %v556
  %v575 = vpop.f32.mrf.mxu0
  %v576 = vadd.f32 %v553, %v575
  %577 = vdwg.mxu0
  %v578 = vadd.f32 %v576, %v94
  %v579 = vxor.u32 %v578, 2147483648
  %v580 = vmul.f32 %v579, 1.442695
  %v581 = vpow.pop %v580
  %v582 = vadd.f32 %v581, 1.0
  %v583 = vrcp.pop %v582
  %v584 = vmul.f32 %v582, %v583
  %v585 = vsub.f32 1.0, %v584
  %v586 = vmul.f32 %v583, %v585
  %v587 = vadd.f32 %v583, %v586
  %vm588 = vweird.f32 %v582
  %vm589 = vweird.f32 %v583
  %vm590 = vmor %vm588, %vm589
  %v591 = vsel %vm590, %v583, %v587
  %v592 = vand.u32 2147483647, %v582
  %vm593 = vcmp.eq.f32.partialorder %v592, 8.507059e+37
  %v594 = vand.u32 %v582, 2147483648
  %v595 = vor.u32 1.1754944e-38, %v594
  %v596 = vsel %vm593, %v595, %v591
  %v597 = vmul.f32 1.0, %v596
  %599 = vrot.lane.b32.xlu0 %v578, 32
  %v600 = vpop.permute.xlu0 %599
  %v602 = vmul.f32 %v597, %v600
  %604 = vrot.lane.b32.xlu0 %v602, 64
  %v605 = vpop.permute.xlu0 %604
  %v607 = vadd.f32 %v578, %v605
  %v608 = vtanh.pop %v607
  %v609 = vsub.f32 1.0, %v597
  %611 = vrot.lane.b32.xlu0 %v608, 96
  %v612 = vpop.permute.xlu0 %611
  %v614 = vmul.f32 %v609, %v612
  %615 = vrot.lane.b32.xlu0 %v531, 32
  %v616 = vpop.permute.xlu0 %615
  %v618 = vmul.f32 %v597, %v616
  %v619 = vadd.f32 %v614, %v618
  %621 = vrot.lane.b32.xlu0 %v619, 96
  %v622 = vpop.permute.xlu0 %621
  %624 = vst.msk [vmem:[#allocation2] sm:$0xff] %vm30, %v622
  %v625 = vsel %vm30, %v622, 0
  %627 = vmatpush.msra.mxu0 0.0
  %628 = vmatpush.msra.mxu0 0.0
  %629 = vmatpush.msra.mxu0 0.0
  %630 = vmatpush.msra.mxu0 0.0
  %631 = vmatpush.msra.mxu0 0.0
  %632 = vmatpush.msra.mxu0 0.0
  %633 = vmatpush.msra.mxu0 0.0
  %634 = vmatpush.msra.mxu0 0.0
  %635 = vmatpush.msra.mxu0 0.0
  %636 = vmatpush.msra.mxu0 0.0
  %637 = vmatpush.msra.mxu0 0.0
  %638 = vmatpush.msra.mxu0 0.0
  %639 = vmatpush.msra.mxu0 %v42
  %640 = vmatpush.msra.mxu0 %v41
  %641 = vmatpush.msra.mxu0 %v40
  %642 = vmatpush.msra.mxu0 %v39
  %643 = vmatmul.f32.gmra.mxu0 %v625
  %v644 = vpop.f32.mrf.mxu0
  %v645 = vadd.f32 %v144, %v644
  %646 = vdwg.mxu0
  %s647 = scalar_lea.vmem %s8, 32
  %648 = vst [vmem:[%s647] sm:$0xff] %v645
  %s649 = scalar_lea.vmem %s0, 40
  %v650 = vld [vmem:[%s649] sm:$0xff]
  %v651 = vld [vmem:[#allocation2] sm:$0xff]
  %v653 = vsel %vm30, %v651, 0
  %655 = vmatpush.msra.mxu0 0.0
  %656 = vmatpush.msra.mxu0 0.0
  %657 = vmatpush.msra.mxu0 0.0
  %658 = vmatpush.msra.mxu0 0.0
  %659 = vmatpush.msra.mxu0 0.0
  %660 = vmatpush.msra.mxu0 0.0
  %661 = vmatpush.msra.mxu0 0.0
  %662 = vmatpush.msra.mxu0 0.0
  %663 = vmatpush.msra.mxu0 0.0
  %664 = vmatpush.msra.mxu0 0.0
  %665 = vmatpush.msra.mxu0 0.0
  %666 = vmatpush.msra.mxu0 0.0
  %667 = vmatpush.msra.mxu0 %v37
  %668 = vmatpush.msra.mxu0 %v36
  %669 = vmatpush.msra.mxu0 %v35
  %670 = vmatpush.msra.mxu0 %v34
  %671 = vmatmul.f32.gmra.mxu0 %v653
  %v672 = vpop.f32.mrf.mxu0
  %v673 = vadd.f32 0.0, %v672
  %674 = vdwg.mxu0
  %v676 = vsel %vm69, %v650, 0
  %678 = vmatpush.msra.mxu0 0.0
  %679 = vmatpush.msra.mxu0 0.0
  %680 = vmatpush.msra.mxu0 0.0
  %681 = vmatpush.msra.mxu0 0.0
  %682 = vmatpush.msra.mxu0 0.0
  %683 = vmatpush.msra.mxu0 0.0
  %684 = vmatpush.msra.mxu0 0.0
  %685 = vmatpush.msra.mxu0 0.0
  %686 = vmatpush.msra.mxu0 0.0
  %687 = vmatpush.msra.mxu0 0.0
  %688 = vmatpush.msra.mxu0 0.0
  %689 = vmatpush.msra.mxu0 0.0
  %690 = vmatpush.msra.mxu0 0.0
  %691 = vmatpush.msra.mxu0 0.0
  %692 = vmatpush.msra.mxu0 %v33
  %693 = vmatpush.msra.mxu0 %v32
  %694 = vmatmul.f32.gmra.mxu0 %v676
  %v695 = vpop.f32.mrf.mxu0
  %v696 = vadd.f32 %v673, %v695
  %697 = vdwg.mxu0
  %v698 = vadd.f32 %v696, %v94
  %v699 = vxor.u32 %v698, 2147483648
  %v700 = vmul.f32 %v699, 1.442695
  %v701 = vpow.pop %v700
  %v702 = vadd.f32 %v701, 1.0
  %v703 = vrcp.pop %v702
  %v704 = vmul.f32 %v702, %v703
  %v705 = vsub.f32 1.0, %v704
  %v706 = vmul.f32 %v703, %v705
  %v707 = vadd.f32 %v703, %v706
  %vm708 = vweird.f32 %v702
  %vm709 = vweird.f32 %v703
  %vm710 = vmor %vm708, %vm709
  %v711 = vsel %vm710, %v703, %v707
  %v712 = vand.u32 2147483647, %v702
  %vm713 = vcmp.eq.f32.partialorder %v712, 8.507059e+37
  %v714 = vand.u32 %v702, 2147483648
  %v715 = vor.u32 1.1754944e-38, %v714
  %v716 = vsel %vm713, %v715, %v711
  %v717 = vmul.f32 1.0, %v716
  %719 = vrot.lane.b32.xlu0 %v698, 32
  %v720 = vpop.permute.xlu0 %719
  %v722 = vmul.f32 %v717, %v720
  %724 = vrot.lane.b32.xlu0 %v722, 64
  %v725 = vpop.permute.xlu0 %724
  %v727 = vadd.f32 %v698, %v725
  %v728 = vtanh.pop %v727
  %v729 = vsub.f32 1.0, %v717
  %731 = vrot.lane.b32.xlu0 %v728, 96
  %v732 = vpop.permute.xlu0 %731
  %v734 = vmul.f32 %v729, %v732
  %735 = vrot.lane.b32.xlu0 %v651, 32
  %v736 = vpop.permute.xlu0 %735
  %v738 = vmul.f32 %v717, %v736
  %v739 = vadd.f32 %v734, %v738
  %741 = vrot.lane.b32.xlu0 %v739, 96
  %v742 = vpop.permute.xlu0 %741
  %744 = vst.msk [vmem:[#allocation2] sm:$0xff] %vm30, %v742
  %v745 = vsel %vm30, %v742, 0
  %747 = vmatpush.msra.mxu0 0.0
  %748 = vmatpush.msra.mxu0 0.0
  %749 = vmatpush.msra.mxu0 0.0
  %750 = vmatpush.msra.mxu0 0.0
  %751 = vmatpush.msra.mxu0 0.0
  %752 = vmatpush.msra.mxu0 0.0
  %753 = vmatpush.msra.mxu0 0.0
  %754 = vmatpush.msra.mxu0 0.0
  %755 = vmatpush.msra.mxu0 0.0
  %756 = vmatpush.msra.mxu0 0.0
  %757 = vmatpush.msra.mxu0 0.0
  %758 = vmatpush.msra.mxu0 0.0
  %759 = vmatpush.msra.mxu0 %v42
  %760 = vmatpush.msra.mxu0 %v41
  %761 = vmatpush.msra.mxu0 %v40
  %762 = vmatpush.msra.mxu0 %v39
  %763 = vmatmul.f32.gmra.mxu0 %v745
  %v764 = vpop.f32.mrf.mxu0
  %v765 = vadd.f32 %v144, %v764
  %766 = vdwg.mxu0
  %s767 = scalar_lea.vmem %s8, 40
  %768 = vst [vmem:[%s767] sm:$0xff] %v765
  %s769 = scalar_lea.vmem %s0, 48
  %v770 = vld [vmem:[%s769] sm:$0xff]
  %v771 = vld [vmem:[#allocation2] sm:$0xff]
  %v773 = vsel %vm30, %v771, 0
  %775 = vmatpush.msra.mxu0 0.0
  %776 = vmatpush.msra.mxu0 0.0
  %777 = vmatpush.msra.mxu0 0.0
  %778 = vmatpush.msra.mxu0 0.0
  %779 = vmatpush.msra.mxu0 0.0
  %780 = vmatpush.msra.mxu0 0.0
  %781 = vmatpush.msra.mxu0 0.0
  %782 = vmatpush.msra.mxu0 0.0
  %783 = vmatpush.msra.mxu0 0.0
  %784 = vmatpush.msra.mxu0 0.0
  %785 = vmatpush.msra.mxu0 0.0
  %786 = vmatpush.msra.mxu0 0.0
  %787 = vmatpush.msra.mxu0 %v37
  %788 = vmatpush.msra.mxu0 %v36
  %789 = vmatpush.msra.mxu0 %v35
  %790 = vmatpush.msra.mxu0 %v34
  %791 = vmatmul.f32.gmra.mxu0 %v773
  %v792 = vpop.f32.mrf.mxu0
  %v793 = vadd.f32 0.0, %v792
  %794 = vdwg.mxu0
  %v796 = vsel %vm69, %v770, 0
  %798 = vmatpush.msra.mxu0 0.0
  %799 = vmatpush.msra.mxu0 0.0
  %800 = vmatpush.msra.mxu0 0.0
  %801 = vmatpush.msra.mxu0 0.0
  %802 = vmatpush.msra.mxu0 0.0
  %803 = vmatpush.msra.mxu0 0.0
  %804 = vmatpush.msra.mxu0 0.0
  %805 = vmatpush.msra.mxu0 0.0
  %806 = vmatpush.msra.mxu0 0.0
  %807 = vmatpush.msra.mxu0 0.0
  %808 = vmatpush.msra.mxu0 0.0
  %809 = vmatpush.msra.mxu0 0.0
  %810 = vmatpush.msra.mxu0 0.0
  %811 = vmatpush.msra.mxu0 0.0
  %812 = vmatpush.msra.mxu0 %v33
  %813 = vmatpush.msra.mxu0 %v32
  %814 = vmatmul.f32.gmra.mxu0 %v796
  %v815 = vpop.f32.mrf.mxu0
  %v816 = vadd.f32 %v793, %v815
  %817 = vdwg.mxu0
  %v818 = vadd.f32 %v816, %v94
  %v819 = vxor.u32 %v818, 2147483648
  %v820 = vmul.f32 %v819, 1.442695
  %v821 = vpow.pop %v820
  %v822 = vadd.f32 %v821, 1.0
  %v823 = vrcp.pop %v822
  %v824 = vmul.f32 %v822, %v823
  %v825 = vsub.f32 1.0, %v824
  %v826 = vmul.f32 %v823, %v825
  %v827 = vadd.f32 %v823, %v826
  %vm828 = vweird.f32 %v822
  %vm829 = vweird.f32 %v823
  %vm830 = vmor %vm828, %vm829
  %v831 = vsel %vm830, %v823, %v827
  %v832 = vand.u32 2147483647, %v822
  %vm833 = vcmp.eq.f32.partialorder %v832, 8.507059e+37
  %v834 = vand.u32 %v822, 2147483648
  %v835 = vor.u32 1.1754944e-38, %v834
  %v836 = vsel %vm833, %v835, %v831
  %v837 = vmul.f32 1.0, %v836
  %839 = vrot.lane.b32.xlu0 %v818, 32
  %v840 = vpop.permute.xlu0 %839
  %v842 = vmul.f32 %v837, %v840
  %844 = vrot.lane.b32.xlu0 %v842, 64
  %v845 = vpop.permute.xlu0 %844
  %v847 = vadd.f32 %v818, %v845
  %v848 = vtanh.pop %v847
  %v849 = vsub.f32 1.0, %v837
  %851 = vrot.lane.b32.xlu0 %v848, 96
  %v852 = vpop.permute.xlu0 %851
  %v854 = vmul.f32 %v849, %v852
  %855 = vrot.lane.b32.xlu0 %v771, 32
  %v856 = vpop.permute.xlu0 %855
  %v858 = vmul.f32 %v837, %v856
  %v859 = vadd.f32 %v854, %v858
  %861 = vrot.lane.b32.xlu0 %v859, 96
  %v862 = vpop.permute.xlu0 %861
  %864 = vst.msk [vmem:[#allocation2] sm:$0xff] %vm30, %v862
  %v865 = vsel %vm30, %v862, 0
  %867 = vmatpush.msra.mxu0 0.0
  %868 = vmatpush.msra.mxu0 0.0
  %869 = vmatpush.msra.mxu0 0.0
  %870 = vmatpush.msra.mxu0 0.0
  %871 = vmatpush.msra.mxu0 0.0
  %872 = vmatpush.msra.mxu0 0.0
  %873 = vmatpush.msra.mxu0 0.0
  %874 = vmatpush.msra.mxu0 0.0
  %875 = vmatpush.msra.mxu0 0.0
  %876 = vmatpush.msra.mxu0 0.0
  %877 = vmatpush.msra.mxu0 0.0
  %878 = vmatpush.msra.mxu0 0.0
  %879 = vmatpush.msra.mxu0 %v42
  %880 = vmatpush.msra.mxu0 %v41
  %881 = vmatpush.msra.mxu0 %v40
  %882 = vmatpush.msra.mxu0 %v39
  %883 = vmatmul.f32.gmra.mxu0 %v865
  %v884 = vpop.f32.mrf.mxu0
  %v885 = vadd.f32 %v144, %v884
  %886 = vdwg.mxu0
  %s887 = scalar_lea.vmem %s8, 48
  %888 = vst [vmem:[%s887] sm:$0xff] %v885
  // Predicated region
  $region34: #{encoder_decoder_forward.3} parent=0 // pred_check
    _
  $region35: #{encoder_decoder_forward.3} parent=0 // pred_check_branch
    %890 = sbr.rel (0) target = $region37
  $region36: #{encoder_decoder_forward.3} parent=0 // pred_region
    _
  $region37: #{encoder_decoder_forward.3} parent=0 // pred_fallthru
    _
  // Predicated region
  $region38: #{encoder_decoder_forward.3} parent=0 // pred_check
    _
  $region39: #{encoder_decoder_forward.3} parent=0 // pred_check_branch
    %892 = sbr.rel (0) target = $region41
  $region40: #{encoder_decoder_forward.3} parent=0 // pred_region
    _
  $region41: #{encoder_decoder_forward.3} parent=0 // pred_fallthru
    _

// kernel: encoder_decoder_forward.2
$region0: #{encoder_decoder_forward.2}
  #allocation0 [shape = 'u32[]', space=smem, size = 0x4, offset = 0x4, fixed_abs, tag = 'smem constant byte address 0x4 - core index']
  #allocation1 [shape = 'u32[72,128]{1,0:T(1,128)}', space=vmem, size = 0x9000, scoped, tag = 'internal scratch']
  %s0 = inlined_call_operand.vmem [shape: f32[2,10,8,16], index: 0, kind: input, shape index: {}]
  %s1 = inlined_call_operand.vmem [shape: f32[2,16,128], index: 1, kind: input, shape index: {}]
  %s2 = inlined_call_operand.vmem [shape: f32[2,32,128], index: 2, kind: input, shape index: {}]
  %s3 = inlined_call_operand.vmem [shape: f32[2,1,128], index: 3, kind: input, shape index: {}]
  %s4 = inlined_call_operand.vmem [shape: f32[2,8,32], index: 4, kind: output, shape index: {}]
  %s5 = sld [smem:[#allocation0]]
  $region49: #{encoder_decoder_forward.2} parent=0
    _
  %s7 = ssub.s32 1, %s5
  %s8 = scalar_select 0, %s7, %s5
  loop: start=0, step=1, limit=4
  $region2: #{encoder_decoder_forward.2} parent=0 // loop_pre_header
    _
  $region3: #{encoder_decoder_forward.2} parent=0 // loop_header
    %s10 = sphi 0, %s14
    %p11 = scmp.ge.s32.totalorder %s10, 4
    %s20 = sphi 0, %s22
    %s23 = sphi 0, %s20
    %s24 = sphi 0, %s23
    %s40 = sphi 0, %s24
    %s46 = sphi 0, %s48
    %s49 = sphi 0, %s46
    %s50 = sphi 0, %s49
    %s66 = sphi 0, %s50
    %s72 = sphi 0, %s74
    %s75 = sphi 0, %s72
    %s76 = sphi 0, %s75
    %s92 = sphi 0, %s76
    %s98 = sphi 0, %s100
    %s101 = sphi 0, %s98
    %s102 = sphi 0, %s101
    %s118 = sphi 0, %s102
    %s124 = sphi 0, %s126
    %s127 = sphi 0, %s124
    %s128 = sphi 0, %s127
    %s144 = sphi 0, %s128
  $region4: #{encoder_decoder_forward.2} parent=0 // loop_header_branch
    %13 = sbr.rel (%p11) target = $region8
  $region5: #{encoder_decoder_forward.2} parent=0 // loop_body
    %s15 = ssub.s32 %s10, 1
    %s16 = ssub.s32 %s10, 2
    %s17 = sadd.s32 %s10, 1
    %s18 = ssub.s32 %s10, %s17
    %p19 = scmp.eq.s32.totalorder %s18, 0
    %s21 = sadd.s32 %s20, 1
    %s22 = scalar_select %p19, %s20, %s21
    %p25 = pneg %p19
    %p26 = scmp.eq.s32.totalorder %s10, 1
    %p27 = por %p25, %p26
    %p28 = scmp.ne.s32.totalorder %s20, %s23
    %p29 = scmp.eq.s32.totalorder %s10, 0
    %p30 = por %p28, %p29
    %p31 = scmp.ne.s32.totalorder %s20, %s23
    %p32 = scmp.eq.s32.totalorder %s15, 1
    %p33 = por %p31, %p32
    %p34 = scmp.ne.s32.totalorder %s23, %s24
    %p35 = scmp.eq.s32.totalorder %s15, 0
    %p36 = por %p34, %p35
    %p37 = scmp.ne.s32.totalorder %s23, %s24
    %p38 = scmp.eq.s32.totalorder %s16, 1
    %p39 = por %p37, %p38
    %p41 = scmp.ne.s32.totalorder %s24, %s40
    %p42 = scmp.eq.s32.totalorder %s16, 0
    %p43 = por %p41, %p42
    %s44 = ssub.s32 %s10, %s17
    %p45 = scmp.eq.s32.totalorder %s44, 0
    %s47 = sadd.s32 %s46, 1
    %s48 = scalar_select %p45, %s46, %s47
    %p51 = pneg %p45
    %p52 = scmp.eq.s32.totalorder %s10, 1
    %p53 = por %p51, %p52
    %p54 = scmp.ne.s32.totalorder %s46, %s49
    %p55 = scmp.eq.s32.totalorder %s10, 0
    %p56 = por %p54, %p55
    %p57 = scmp.ne.s32.totalorder %s46, %s49
    %p58 = scmp.eq.s32.totalorder %s15, 1
    %p59 = por %p57, %p58
    %p60 = scmp.ne.s32.totalorder %s49, %s50
    %p61 = scmp.eq.s32.totalorder %s15, 0
    %p62 = por %p60, %p61
    %p63 = scmp.ne.s32.totalorder %s49, %s50
    %p64 = scmp.eq.s32.totalorder %s16, 1
    %p65 = por %p63, %p64
    %p67 = scmp.ne.s32.totalorder %s50, %s66
    %p68 = scmp.eq.s32.totalorder %s16, 0
    %p69 = por %p67, %p68
    %s70 = ssub.s32 %s10, %s17
    %p71 = scmp.eq.s32.totalorder %s70, 0
    %s73 = sadd.s32 %s72, 1
    %s74 = scalar_select %p71, %s72, %s73
    %p77 = pneg %p71
    %p78 = scmp.eq.s32.totalorder %s10, 1
    %p79 = por %p77, %p78
    %p80 = scmp.ne.s32.totalorder %s72, %s75
    %p81 = scmp.eq.s32.totalorder %s10, 0
    %p82 = por %p80, %p81
    %p83 = scmp.ne.s32.totalorder %s72, %s75
    %p84 = scmp.eq.s32.totalorder %s15, 1
    %p85 = por %p83, %p84
    %p86 = scmp.ne.s32.totalorder %s75, %s76
    %p87 = scmp.eq.s32.totalorder %s15, 0
    %p88 = por %p86, %p87
    %p89 = scmp.ne.s32.totalorder %s75, %s76
    %p90 = scmp.eq.s32.totalorder %s16, 1
    %p91 = por %p89, %p90
    %p93 = scmp.ne.s32.totalorder %s76, %s92
    %p94 = scmp.eq.s32.totalorder %s16, 0
    %p95 = por %p93, %p94
    %s96 = ssub.s32 %s10, %s17
    %p97 = scmp.eq.s32.totalorder %s96, 0
    %s99 = sadd.s32 %s98, 1
    %s100 = scalar_select %p97, %s98, %s99
    %p103 = pneg %p97
    %p104 = scmp.eq.s32.totalorder %s10, 1
    %p105 = por %p103, %p104
    %p106 = scmp.ne.s32.totalorder %s98, %s101
    %p107 = scmp.eq.s32.totalorder %s10, 0
    %p108 = por %p106, %p107
    %p109 = scmp.ne.s32.totalorder %s98, %s101
    %p110 = scmp.eq.s32.totalorder %s15, 1
    %p111 = por %p109, %p110
    %p112 = scmp.ne.s32.totalorder %s101, %s102
    %p113 = scmp.eq.s32.totalorder %s15, 0
    %p114 = por %p112, %p113
    %p115 = scmp.ne.s32.totalorder %s101, %s102
    %p116 = scmp.eq.s32.totalorder %s16, 1
    %p117 = por %p115, %p116
    %p119 = scmp.ne.s32.totalorder %s102, %s118
    %p120 = scmp.eq.s32.totalorder %s16, 0
    %p121 = por %p119, %p120
    %s122 = ssub.s32 %s10, %s17
    %p123 = scmp.eq.s32.totalorder %s122, 0
    %s125 = sadd.s32 %s124, 1
    %s126 = scalar_select %p123, %s124, %s125
    %p129 = pneg %p123
    %p130 = scmp.eq.s32.totalorder %s10, 1
    %p131 = por %p129, %p130
    %p132 = scmp.ne.s32.totalorder %s124, %s127
    %p133 = scmp.eq.s32.totalorder %s10, 0
    %p134 = por %p132, %p133
    %p135 = scmp.ne.s32.totalorder %s124, %s127
    %p136 = scmp.eq.s32.totalorder %s15, 1
    %p137 = por %p135, %p136
    %p138 = scmp.ne.s32.totalorder %s127, %s128
    %p139 = scmp.eq.s32.totalorder %s15, 0
    %p140 = por %p138, %p139
    %p141 = scmp.ne.s32.totalorder %s127, %s128
    %p142 = scmp.eq.s32.totalorder %s16, 1
    %p143 = por %p141, %p142
    %p145 = scmp.ne.s32.totalorder %s128, %s144
    %p146 = scmp.eq.s32.totalorder %s16, 0
    %p147 = por %p145, %p146
    %p148 = scmp.le.s32.totalorder 1, %s10
    %p149 = scmp.lt.s32.totalorder %s10, 3
    %p150 = pnand %p148, %p149
    %p151 = pneg %p150
    // Predicated region
    $region9: #{encoder_decoder_forward.2} parent=5 // pred_check
      _
    $region10: #{encoder_decoder_forward.2} parent=5 // pred_check_branch
      %153 = sbr.rel (%p150) target = $region12
    $region11: #{encoder_decoder_forward.2} parent=5 // pred_region
      %s154 = ssub.s32 %s10, 1
    $region12: #{encoder_decoder_forward.2} parent=5 // pred_fallthru
      _
    %p155 = scmp.lt.s32.totalorder %s10, 2
    // Predicated region
    $region13: #{encoder_decoder_forward.2} parent=5 // pred_check
      %p156 = pneg %p155
    $region14: #{encoder_decoder_forward.2} parent=5 // pred_check_branch
      %158 = sbr.rel (%p156) target = $region16
    $region15: #{encoder_decoder_forward.2} parent=5 // pred_region
      // Predicated region
      $region17: #{encoder_decoder_forward.2} parent=15 // pred_check
        %p159 = pneg %p30
      $region18: #{encoder_decoder_forward.2} parent=15 // pred_check_branch
        %161 = sbr.rel (%p159) target = $region20
      $region19: #{encoder_decoder_forward.2} parent=15 // pred_region
        %p162 = scmp.lt.s32.totalorder %s10, 1
        %s163 = scalar_select %p162, %s10, 1
        %s164 = smul.addr %s163, 10
        %s165 = smul.addr %s164, 8
        %s166 = scalar_lea.vmem %s0, %s165
      $region20: #{encoder_decoder_forward.2} parent=15 // pred_fallthru
        _
      // Predicated region
      $region21: #{encoder_decoder_forward.2} parent=15 // pred_check
        %p167 = pneg %p56
      $region22: #{encoder_decoder_forward.2} parent=15 // pred_check_branch
        %169 = sbr.rel (%p167) target = $region24
      $region23: #{encoder_decoder_forward.2} parent=15 // pred_region
        %p170 = scmp.lt.s32.totalorder %s10, 1
        %s171 = scalar_select %p170, %s10, 1
        %s172 = smul.addr %s171, 2
        %s173 = smul.addr %s172, 8
        %s174 = scalar_lea.vmem %s1, %s173
      $region24: #{encoder_decoder_forward.2} parent=15 // pred_fallthru
        _
      // Predicated region
      $region25: #{encoder_decoder_forward.2} parent=15 // pred_check
        %p175 = pneg %p82
      $region26: #{encoder_decoder_forward.2} parent=15 // pred_check_branch
        %177 = sbr.rel (%p175) target = $region28
      $region27: #{encoder_decoder_forward.2} parent=15 // pred_region
        %p178 = scmp.lt.s32.totalorder %s10, 1
        %s179 = scalar_select %p178, %s10, 1
        %s180 = smul.addr %s179, 4
        %s181 = smul.addr %s180, 8
        %s182 = scalar_lea.vmem %s2, %s181
      $region28: #{encoder_decoder_forward.2} parent=15 // pred_fallthru
        _
      // Predicated region
      $region29: #{encoder_decoder_forward.2} parent=15 // pred_check
        %p183 = pneg %p108
      $region30: #{encoder_decoder_forward.2} parent=15 // pred_check_branch
        %185 = sbr.rel (%p183) target = $region32
      $region31: #{encoder_decoder_forward.2} parent=15 // pred_region
        %p186 = scmp.lt.s32.totalorder %s10, 1
        %s187 = scalar_select %p186, %s10, 1
        %s188 = scalar_lea.vmem %s3, %s187
      $region32: #{encoder_decoder_forward.2} parent=15 // pred_fallthru
        _
    $region16: #{encoder_decoder_forward.2} parent=5 // pred_fallthru
      _
    %p189 = scmp.le.s32.totalorder 1, %s10
    %p190 = scmp.lt.s32.totalorder %s10, 3
    %p191 = pnand %p189, %p190
    %p192 = pneg %p191
    // Predicated region
    $region33: #{encoder_decoder_forward.2} parent=5 // pred_check
      _
    $region34: #{encoder_decoder_forward.2} parent=5 // pred_check_branch
      %194 = sbr.rel (%p191) target = $region36
    $region35: #{encoder_decoder_forward.2} parent=5 // pred_region
      %s195 = ssub.s32 %s10, 1
      %p196 = scmp.lt.s32.totalorder %s15, 1
      %s197 = scalar_select %p196, %s15, 1
      %s198 = smul.addr %s197, 10
      %s199 = smul.addr %s198, 8
      %s200 = scalar_lea.vmem %s0, %s199
      %p201 = pneg %p36
      %p202 = pneg %p33
      %p203 = scmp.lt.s32.totalorder %s15, 1
      %s204 = scalar_select %p203, %s15, 1
      %s205 = smul.addr %s204, 2
      %s206 = smul.addr %s205, 8
      %s207 = scalar_lea.vmem %s1, %s206
      %p208 = pneg %p62
      %p209 = pneg %p59
      %p210 = scmp.lt.s32.totalorder %s15, 1
      %s211 = scalar_select %p210, %s15, 1
      %s212 = smul.addr %s211, 4
      %s213 = smul.addr %s212, 8
      %s214 = scalar_lea.vmem %s2, %s213
      %p215 = pneg %p88
      %p216 = pneg %p85
      %p217 = scmp.lt.s32.totalorder %s15, 1
      %s218 = scalar_select %p217, %s15, 1
      %s219 = scalar_lea.vmem %s3, %s218
      %p220 = pneg %p114
      %p221 = pneg %p111
      %p222 = pneg %p140
      %p223 = pneg %p137
      %p224 = scmp.lt.s32.totalorder %s15, 1
      %s225 = scalar_select %p224, %s15, 1
      %s226 = smul.addr %s225, 8
      %s227 = scalar_lea.vmem %s4, %s226
      %p228 = scmp.lt.s32.totalorder %s15, 1
      %s229 = scalar_select %p228, %s15, 1
      %s230 = smul.addr %s229, 10
      %s231 = smul.addr %s230, 8
      %s232 = scalar_lea.vmem %s0, %s231
      %p233 = scmp.lt.s32.totalorder %s15, 1
      %s234 = scalar_select %p233, %s15, 1
      %s235 = smul.addr %s234, 2
      %s236 = smul.addr %s235, 8
      %s237 = scalar_lea.vmem %s1, %s236
      %p238 = scmp.lt.s32.totalorder %s15, 1
      %s239 = scalar_select %p238, %s15, 1
      %s240 = smul.addr %s239, 4
      %s241 = smul.addr %s240, 8
      %s242 = scalar_lea.vmem %s2, %s241
      %p243 = scmp.lt.s32.totalorder %s15, 1
      %s244 = scalar_select %p243, %s15, 1
      %s245 = scalar_lea.vmem %s3, %s244
      %p246 = scmp.lt.s32.totalorder %s15, 1
      %s247 = scalar_select %p246, %s15, 1
      %s248 = smul.addr %s247, 8
      %s249 = scalar_lea.vmem %s4, %s248
      %vm250 = vcmask 261120
      %251 = vst.msk [vmem:[%s249] sm:$0xff] %vm250, 0.0
      %v252 = vld [vmem:[%s237] sm:$0xff]
      %v253 = vld [vmem:[%s237 + $0x8] sm:$0xff]
      %v254 = vld [vmem:[%s242] sm:$0xff]
      %v255 = vld [vmem:[%s242 + $0x8] sm:$0xff]
      %v256 = vld [vmem:[%s242 + $0x10] sm:$0xff]
      %v257 = vld [vmem:[%s242 + $0x18] sm:$0xff]
      %v258 = vld [vmem:[%s245] sm:$0x1]
      %v259 = vld [vmem:[%s232] sm:$0xff]
      %v260 = vld [vmem:[%s249] sm:$0xff]
      %v262 = vsel %vm250, %v260, 0
      %264 = vmatpush.msra.mxu0 0.0
      %265 = vmatpush.msra.mxu0 0.0
      %266 = vmatpush.msra.mxu0 0.0
      %267 = vmatpush.msra.mxu0 0.0
      %268 = vmatpush.msra.mxu0 0.0
      %269 = vmatpush.msra.mxu0 0.0
      %270 = vmatpush.msra.mxu0 0.0
      %271 = vmatpush.msra.mxu0 0.0
      %272 = vmatpush.msra.mxu0 0.0
      %273 = vmatpush.msra.mxu0 0.0
      %274 = vmatpush.msra.mxu0 0.0
      %275 = vmatpush.msra.mxu0 0.0
      %276 = vmatpush.msra.mxu0 %v257
      %277 = vmatpush.msra.mxu0 %v256
      %278 = vmatpush.msra.mxu0 %v255
      %279 = vmatpush.msra.mxu0 %v254
      %280 = vmatmul.f32.gmra.mxu0 %v262
      %v281 = vpop.f32.mrf.mxu0
      %v282 = vadd.f32 0.0, %v281
      %283 = vdwg.mxu0
      %vm284 = vcmask 130048
      %v286 = vsel %vm284, %v259, 0
      %288 = vmatpush.msra.mxu0 0.0
      %289 = vmatpush.msra.mxu0 0.0
      %290 = vmatpush.msra.mxu0 0.0
      %291 = vmatpush.msra.mxu0 0.0
      %292 = vmatpush.msra.mxu0 0.0
      %293 = vmatpush.msra.mxu0 0.0
      %294 = vmatpush.msra.mxu0 0.0
      %295 = vmatpush.msra.mxu0 0.0
      %296 = vmatpush.msra.mxu0 0.0
      %297 = vmatpush.msra.mxu0 0.0
      %298 = vmatpush.msra.mxu0 0.0
      %299 = vmatpush.msra.mxu0 0.0
      %300 = vmatpush.msra.mxu0 0.0
      %301 = vmatpush.msra.mxu0 0.0
      %302 = vmatpush.msra.mxu0 %v253
      %303 = vmatpush.msra.mxu0 %v252
      %304 = vmatmul.f32.gmra.mxu0 %v286
      %v305 = vpop.f32.mrf.mxu0
      %v306 = vadd.f32 %v282, %v305
      %307 = vdwg.mxu0
      %v309 = vperm.slane %v258, 0
      %v311 = vadd.f32 %v306, %v309
      %v312 = vxor.u32 %v311, 2147483648
      %v313 = vmul.f32 %v312, 1.442695
      %v314 = vpow.pop %v313
      %v315 = vadd.f32 %v314, 1.0
      %v316 = vrcp.pop %v315
      %v317 = vmul.f32 %v315, %v316
      %v318 = vsub.f32 1.0, %v317
      %v319 = vmul.f32 %v316, %v318
      %v320 = vadd.f32 %v316, %v319
      %vm321 = vweird.f32 %v315
      %vm322 = vweird.f32 %v316
      %vm323 = vmor %vm321, %vm322
      %v324 = vsel %vm323, %v316, %v320
      %v325 = vand.u32 2147483647, %v315
      %vm326 = vcmp.eq.f32.partialorder %v325, 8.507059e+37
      %v327 = vand.u32 %v315, 2147483648
      %v328 = vor.u32 1.1754944e-38, %v327
      %v329 = vsel %vm326, %v328, %v324
      %v330 = vmul.f32 1.0, %v329
      %332 = vrot.lane.b32.xlu0 %v311, 32
      %v333 = vpop.permute.xlu0 %332
      %v335 = vmul.f32 %v330, %v333
      %337 = vrot.lane.b32.xlu0 %v335, 64
      %v338 = vpop.permute.xlu0 %337
      %v340 = vadd.f32 %v311, %v338
      %v341 = vtanh.pop %v340
      %v342 = vsub.f32 1.0, %v330
      %344 = vrot.lane.b32.xlu0 %v341, 96
      %v345 = vpop.permute.xlu0 %344
      %v347 = vmul.f32 %v342, %v345
      %348 = vrot.lane.b32.xlu0 %v260, 32
      %v349 = vpop.permute.xlu0 %348
      %v351 = vmul.f32 %v330, %v349
      %v352 = vadd.f32 %v347, %v351
      %354 = vrot.lane.b32.xlu0 %v352, 96
      %v355 = vpop.permute.xlu0 %354
      %357 = vst.msk [vmem:[%s249] sm:$0xff] %vm250, %v355
      %s358 = scalar_lea.vmem %s232, 8
      %v359 = vld [vmem:[%s358] sm:$0xff]
      %v360 = vld [vmem:[%s249] sm:$0xff]
      %v362 = vsel %vm250, %v360, 0
      %364 = vmatpush.msra.mxu0 0.0
      %365 = vmatpush.msra.mxu0 0.0
      %366 = vmatpush.msra.mxu0 0.0
      %367 = vmatpush.msra.mxu0 0.0
      %368 = vmatpush.msra.mxu0 0.0
      %369 = vmatpush.msra.mxu0 0.0
      %370 = vmatpush.msra.mxu0 0.0
      %371 = vmatpush.msra.mxu0 0.0
      %372 = vmatpush.msra.mxu0 0.0
      %373 = vmatpush.msra.mxu0 0.0
      %374 = vmatpush.msra.mxu0 0.0
      %375 = vmatpush.msra.mxu0 0.0
      %376 = vmatpush.msra.mxu0 %v257
      %377 = vmatpush.msra.mxu0 %v256
      %378 = vmatpush.msra.mxu0 %v255
      %379 = vmatpush.msra.mxu0 %v254
      %380 = vmatmul.f32.gmra.mxu0 %v362
      %v381 = vpop.f32.mrf.mxu0
      %v382 = vadd.f32 0.0, %v381
      %383 = vdwg.mxu0
      %v385 = vsel %vm284, %v359, 0
      %387 = vmatpush.msra.mxu0 0.0
      %388 = vmatpush.msra.mxu0 0.0
      %389 = vmatpush.msra.mxu0 0.0
      %390 = vmatpush.msra.mxu0 0.0
      %391 = vmatpush.msra.mxu0 0.0
      %392 = vmatpush.msra.mxu0 0.0
      %393 = vmatpush.msra.mxu0 0.0
      %394 = vmatpush.msra.mxu0 0.0
      %395 = vmatpush.msra.mxu0 0.0
      %396 = vmatpush.msra.mxu0 0.0
      %397 = vmatpush.msra.mxu0 0.0
      %398 = vmatpush.msra.mxu0 0.0
      %399 = vmatpush.msra.mxu0 0.0
      %400 = vmatpush.msra.mxu0 0.0
      %401 = vmatpush.msra.mxu0 %v253
      %402 = vmatpush.msra.mxu0 %v252
      %403 = vmatmul.f32.gmra.mxu0 %v385
      %v404 = vpop.f32.mrf.mxu0
      %v405 = vadd.f32 %v382, %v404
      %406 = vdwg.mxu0
      %v407 = vadd.f32 %v405, %v309
      %v408 = vxor.u32 %v407, 2147483648
      %v409 = vmul.f32 %v408, 1.442695
      %v410 = vpow.pop %v409
      %v411 = vadd.f32 %v410, 1.0
      %v412 = vrcp.pop %v411
      %v413 = vmul.f32 %v411, %v412
      %v414 = vsub.f32 1.0, %v413
      %v415 = vmul.f32 %v412, %v414
      %v416 = vadd.f32 %v412, %v415
      %vm417 = vweird.f32 %v411
      %vm418 = vweird.f32 %v412
      %vm419 = vmor %vm417, %vm418
      %v420 = vsel %vm419, %v412, %v416
      %v421 = vand.u32 2147483647, %v411
      %vm422 = vcmp.eq.f32.partialorder %v421, 8.507059e+37
      %v423 = vand.u32 %v411, 2147483648
      %v424 = vor.u32 1.1754944e-38, %v423
      %v425 = vsel %vm422, %v424, %v420
      %v426 = vmul.f32 1.0, %v425
      %428 = vrot.lane.b32.xlu0 %v407, 32
      %v429 = vpop.permute.xlu0 %428
      %v431 = vmul.f32 %v426, %v429
      %433 = vrot.lane.b32.xlu0 %v431, 64
      %v434 = vpop.permute.xlu0 %433
      %v436 = vadd.f32 %v407, %v434
      %v437 = vtanh.pop %v436
      %v438 = vsub.f32 1.0, %v426
      %440 = vrot.lane.b32.xlu0 %v437, 96
      %v441 = vpop.permute.xlu0 %440
      %v443 = vmul.f32 %v438, %v441
      %444 = vrot.lane.b32.xlu0 %v360, 32
      %v445 = vpop.permute.xlu0 %444
      %v447 = vmul.f32 %v426, %v445
      %v448 = vadd.f32 %v443, %v447
      %450 = vrot.lane.b32.xlu0 %v448, 96
      %v451 = vpop.permute.xlu0 %450
      %453 = vst.msk [vmem:[%s249] sm:$0xff] %vm250, %v451
      %s454 = scalar_lea.vmem %s232, 16
      %v455 = vld [vmem:[%s454] sm:$0xff]
      %v456 = vld [vmem:[%s249] sm:$0xff]
      %v458 = vsel %vm250, %v456, 0
      %460 = vmatpush.msra.mxu0 0.0
      %461 = vmatpush.msra.mxu0 0.0
      %462 = vmatpush.msra.mxu0 0.0
      %463 = vmatpush.msra.mxu0 0.0
      %464 = vmatpush.msra.mxu0 0.0
      %465 = vmatpush.msra.mxu0 0.0
      %466 = vmatpush.msra.mxu0 0.0
      %467 = vmatpush.msra.mxu0 0.0
      %468 = vmatpush.msra.mxu0 0.0
      %469 = vmatpush.msra.mxu0 0.0
      %470 = vmatpush.msra.mxu0 0.0
      %471 = vmatpush.msra.mxu0 0.0
      %472 = vmatpush.msra.mxu0 %v257
      %473 = vmatpush.msra.mxu0 %v256
      %474 = vmatpush.msra.mxu0 %v255
      %475 = vmatpush.msra.mxu0 %v254
      %476 = vmatmul.f32.gmra.mxu0 %v458
      %v477 = vpop.f32.mrf.mxu0
      %v478 = vadd.f32 0.0, %v477
      %479 = vdwg.mxu0
      %v481 = vsel %vm284, %v455, 0
      %483 = vmatpush.msra.mxu0 0.0
      %484 = vmatpush.msra.mxu0 0.0
      %485 = vmatpush.msra.mxu0 0.0
      %486 = vmatpush.msra.mxu0 0.0
      %487 = vmatpush.msra.mxu0 0.0
      %488 = vmatpush.msra.mxu0 0.0
      %489 = vmatpush.msra.mxu0 0.0
      %490 = vmatpush.msra.mxu0 0.0
      %491 = vmatpush.msra.mxu0 0.0
      %492 = vmatpush.msra.mxu0 0.0
      %493 = vmatpush.msra.mxu0 0.0
      %494 = vmatpush.msra.mxu0 0.0
      %495 = vmatpush.msra.mxu0 0.0
      %496 = vmatpush.msra.mxu0 0.0
      %497 = vmatpush.msra.mxu0 %v253
      %498 = vmatpush.msra.mxu0 %v252
      %499 = vmatmul.f32.gmra.mxu0 %v481
      %v500 = vpop.f32.mrf.mxu0
      %v501 = vadd.f32 %v478, %v500
      %502 = vdwg.mxu0
      %v503 = vadd.f32 %v501, %v309
      %v504 = vxor.u32 %v503, 2147483648
      %v505 = vmul.f32 %v504, 1.442695
      %v506 = vpow.pop %v505
      %v507 = vadd.f32 %v506, 1.0
      %v508 = vrcp.pop %v507
      %v509 = vmul.f32 %v507, %v508
      %v510 = vsub.f32 1.0, %v509
      %v511 = vmul.f32 %v508, %v510
      %v512 = vadd.f32 %v508, %v511
      %vm513 = vweird.f32 %v507
      %vm514 = vweird.f32 %v508
      %vm515 = vmor %vm513, %vm514
      %v516 = vsel %vm515, %v508, %v512
      %v517 = vand.u32 2147483647, %v507
      %vm518 = vcmp.eq.f32.partialorder %v517, 8.507059e+37
      %v519 = vand.u32 %v507, 2147483648
      %v520 = vor.u32 1.1754944e-38, %v519
      %v521 = vsel %vm518, %v520, %v516
      %v522 = vmul.f32 1.0, %v521
      %524 = vrot.lane.b32.xlu0 %v503, 32
      %v525 = vpop.permute.xlu0 %524
      %v527 = vmul.f32 %v522, %v525
      %529 = vrot.lane.b32.xlu0 %v527, 64
      %v530 = vpop.permute.xlu0 %529
      %v532 = vadd.f32 %v503, %v530
      %v533 = vtanh.pop %v532
      %v534 = vsub.f32 1.0, %v522
      %536 = vrot.lane.b32.xlu0 %v533, 96
      %v537 = vpop.permute.xlu0 %536
      %v539 = vmul.f32 %v534, %v537
      %540 = vrot.lane.b32.xlu0 %v456, 32
      %v541 = vpop.permute.xlu0 %540
      %v543 = vmul.f32 %v522, %v541
      %v544 = vadd.f32 %v539, %v543
      %546 = vrot.lane.b32.xlu0 %v544, 96
      %v547 = vpop.permute.xlu0 %546
      %549 = vst.msk [vmem:[%s249] sm:$0xff] %vm250, %v547
      %s550 = scalar_lea.vmem %s232, 24
      %v551 = vld [vmem:[%s550] sm:$0xff]
      %v552 = vld [vmem:[%s249] sm:$0xff]
      %v554 = vsel %vm250, %v552, 0
      %556 = vmatpush.msra.mxu0 0.0
      %557 = vmatpush.msra.mxu0 0.0
      %558 = vmatpush.msra.mxu0 0.0
      %559 = vmatpush.msra.mxu0 0.0
      %560 = vmatpush.msra.mxu0 0.0
      %561 = vmatpush.msra.mxu0 0.0
      %562 = vmatpush.msra.mxu0 0.0
      %563 = vmatpush.msra.mxu0 0.0
      %564 = vmatpush.msra.mxu0 0.0
      %565 = vmatpush.msra.mxu0 0.0
      %566 = vmatpush.msra.mxu0 0.0
      %567 = vmatpush.msra.mxu0 0.0
      %568 = vmatpush.msra.mxu0 %v257
      %569 = vmatpush.msra.mxu0 %v256
      %570 = vmatpush.msra.mxu0 %v255
      %571 = vmatpush.msra.mxu0 %v254
      %572 = vmatmul.f32.gmra.mxu0 %v554
      %v573 = vpop.f32.mrf.mxu0
      %v574 = vadd.f32 0.0, %v573
      %575 = vdwg.mxu0
      %v577 = vsel %vm284, %v551, 0
      %579 = vmatpush.msra.mxu0 0.0
      %580 = vmatpush.msra.mxu0 0.0
      %581 = vmatpush.msra.mxu0 0.0
      %582 = vmatpush.msra.mxu0 0.0
      %583 = vmatpush.msra.mxu0 0.0
      %584 = vmatpush.msra.mxu0 0.0
      %585 = vmatpush.msra.mxu0 0.0
      %586 = vmatpush.msra.mxu0 0.0
      %587 = vmatpush.msra.mxu0 0.0
      %588 = vmatpush.msra.mxu0 0.0
      %589 = vmatpush.msra.mxu0 0.0
      %590 = vmatpush.msra.mxu0 0.0
      %591 = vmatpush.msra.mxu0 0.0
      %592 = vmatpush.msra.mxu0 0.0
      %593 = vmatpush.msra.mxu0 %v253
      %594 = vmatpush.msra.mxu0 %v252
      %595 = vmatmul.f32.gmra.mxu0 %v577
      %v596 = vpop.f32.mrf.mxu0
      %v597 = vadd.f32 %v574, %v596
      %598 = vdwg.mxu0
      %v599 = vadd.f32 %v597, %v309
      %v600 = vxor.u32 %v599, 2147483648
      %v601 = vmul.f32 %v600, 1.442695
      %v602 = vpow.pop %v601
      %v603 = vadd.f32 %v602, 1.0
      %v604 = vrcp.pop %v603
      %v605 = vmul.f32 %v603, %v604
      %v606 = vsub.f32 1.0, %v605
      %v607 = vmul.f32 %v604, %v606
      %v608 = vadd.f32 %v604, %v607
      %vm609 = vweird.f32 %v603
      %vm610 = vweird.f32 %v604
      %vm611 = vmor %vm609, %vm610
      %v612 = vsel %vm611, %v604, %v608
      %v613 = vand.u32 2147483647, %v603
      %vm614 = vcmp.eq.f32.partialorder %v613, 8.507059e+37
      %v615 = vand.u32 %v603, 2147483648
      %v616 = vor.u32 1.1754944e-38, %v615
      %v617 = vsel %vm614, %v616, %v612
      %v618 = vmul.f32 1.0, %v617
      %620 = vrot.lane.b32.xlu0 %v599, 32
      %v621 = vpop.permute.xlu0 %620
      %v623 = vmul.f32 %v618, %v621
      %625 = vrot.lane.b32.xlu0 %v623, 64
      %v626 = vpop.permute.xlu0 %625
      %v628 = vadd.f32 %v599, %v626
      %v629 = vtanh.pop %v628
      %v630 = vsub.f32 1.0, %v618
      %632 = vrot.lane.b32.xlu0 %v629, 96
      %v633 = vpop.permute.xlu0 %632
      %v635 = vmul.f32 %v630, %v633
      %636 = vrot.lane.b32.xlu0 %v552, 32
      %v637 = vpop.permute.xlu0 %636
      %v639 = vmul.f32 %v618, %v637
      %v640 = vadd.f32 %v635, %v639
      %642 = vrot.lane.b32.xlu0 %v640, 96
      %v643 = vpop.permute.xlu0 %642
      %645 = vst.msk [vmem:[%s249] sm:$0xff] %vm250, %v643
      %s646 = scalar_lea.vmem %s232, 32
      %v647 = vld [vmem:[%s646] sm:$0xff]
      %v648 = vld [vmem:[%s249] sm:$0xff]
      %v650 = vsel %vm250, %v648, 0
      %652 = vmatpush.msra.mxu0 0.0
      %653 = vmatpush.msra.mxu0 0.0
      %654 = vmatpush.msra.mxu0 0.0
      %655 = vmatpush.msra.mxu0 0.0
      %656 = vmatpush.msra.mxu0 0.0
      %657 = vmatpush.msra.mxu0 0.0
      %658 = vmatpush.msra.mxu0 0.0
      %659 = vmatpush.msra.mxu0 0.0
      %660 = vmatpush.msra.mxu0 0.0
      %661 = vmatpush.msra.mxu0 0.0
      %662 = vmatpush.msra.mxu0 0.0
      %663 = vmatpush.msra.mxu0 0.0
      %664 = vmatpush.msra.mxu0 %v257
      %665 = vmatpush.msra.mxu0 %v256
      %666 = vmatpush.msra.mxu0 %v255
      %667 = vmatpush.msra.mxu0 %v254
      %668 = vmatmul.f32.gmra.mxu0 %v650
      %v669 = vpop.f32.mrf.mxu0
      %v670 = vadd.f32 0.0, %v669
      %671 = vdwg.mxu0
      %v673 = vsel %vm284, %v647, 0
      %675 = vmatpush.msra.mxu0 0.0
      %676 = vmatpush.msra.mxu0 0.0
      %677 = vmatpush.msra.mxu0 0.0
      %678 = vmatpush.msra.mxu0 0.0
      %679 = vmatpush.msra.mxu0 0.0
      %680 = vmatpush.msra.mxu0 0.0
      %681 = vmatpush.msra.mxu0 0.0
      %682 = vmatpush.msra.mxu0 0.0
      %683 = vmatpush.msra.mxu0 0.0
      %684 = vmatpush.msra.mxu0 0.0
      %685 = vmatpush.msra.mxu0 0.0
      %686 = vmatpush.msra.mxu0 0.0
      %687 = vmatpush.msra.mxu0 0.0
      %688 = vmatpush.msra.mxu0 0.0
      %689 = vmatpush.msra.mxu0 %v253
      %690 = vmatpush.msra.mxu0 %v252
      %691 = vmatmul.f32.gmra.mxu0 %v673
      %v692 = vpop.f32.mrf.mxu0
      %v693 = vadd.f32 %v670, %v692
      %694 = vdwg.mxu0
      %v695 = vadd.f32 %v693, %v309
      %v696 = vxor.u32 %v695, 2147483648
      %v697 = vmul.f32 %v696, 1.442695
      %v698 = vpow.pop %v697
      %v699 = vadd.f32 %v698, 1.0
      %v700 = vrcp.pop %v699
      %v701 = vmul.f32 %v699, %v700
      %v702 = vsub.f32 1.0, %v701
      %v703 = vmul.f32 %v700, %v702
      %v704 = vadd.f32 %v700, %v703
      %vm705 = vweird.f32 %v699
      %vm706 = vweird.f32 %v700
      %vm707 = vmor %vm705, %vm706
      %v708 = vsel %vm707, %v700, %v704
      %v709 = vand.u32 2147483647, %v699
      %vm710 = vcmp.eq.f32.partialorder %v709, 8.507059e+37
      %v711 = vand.u32 %v699, 2147483648
      %v712 = vor.u32 1.1754944e-38, %v711
      %v713 = vsel %vm710, %v712, %v708
      %v714 = vmul.f32 1.0, %v713
      %716 = vrot.lane.b32.xlu0 %v695, 32
      %v717 = vpop.permute.xlu0 %716
      %v719 = vmul.f32 %v714, %v717
      %721 = vrot.lane.b32.xlu0 %v719, 64
      %v722 = vpop.permute.xlu0 %721
      %v724 = vadd.f32 %v695, %v722
      %v725 = vtanh.pop %v724
      %v726 = vsub.f32 1.0, %v714
      %728 = vrot.lane.b32.xlu0 %v725, 96
      %v729 = vpop.permute.xlu0 %728
      %v731 = vmul.f32 %v726, %v729
      %732 = vrot.lane.b32.xlu0 %v648, 32
      %v733 = vpop.permute.xlu0 %732
      %v735 = vmul.f32 %v714, %v733
      %v736 = vadd.f32 %v731, %v735
      %738 = vrot.lane.b32.xlu0 %v736, 96
      %v739 = vpop.permute.xlu0 %738
      %741 = vst.msk [vmem:[%s249] sm:$0xff] %vm250, %v739
      %s742 = scalar_lea.vmem %s232, 40
      %v743 = vld [vmem:[%s742] sm:$0xff]
      %v744 = vld [vmem:[%s249] sm:$0xff]
      %v746 = vsel %vm250, %v744, 0
      %748 = vmatpush.msra.mxu0 0.0
      %749 = vmatpush.msra.mxu0 0.0
      %750 = vmatpush.msra.mxu0 0.0
      %751 = vmatpush.msra.mxu0 0.0
      %752 = vmatpush.msra.mxu0 0.0
      %753 = vmatpush.msra.mxu0 0.0
      %754 = vmatpush.msra.mxu0 0.0
      %755 = vmatpush.msra.mxu0 0.0
      %756 = vmatpush.msra.mxu0 0.0
      %757 = vmatpush.msra.mxu0 0.0
      %758 = vmatpush.msra.mxu0 0.0
      %759 = vmatpush.msra.mxu0 0.0
      %760 = vmatpush.msra.mxu0 %v257
      %761 = vmatpush.msra.mxu0 %v256
      %762 = vmatpush.msra.mxu0 %v255
      %763 = vmatpush.msra.mxu0 %v254
      %764 = vmatmul.f32.gmra.mxu0 %v746
      %v765 = vpop.f32.mrf.mxu0
      %v766 = vadd.f32 0.0, %v765
      %767 = vdwg.mxu0
      %v769 = vsel %vm284, %v743, 0
      %771 = vmatpush.msra.mxu0 0.0
      %772 = vmatpush.msra.mxu0 0.0
      %773 = vmatpush.msra.mxu0 0.0
      %774 = vmatpush.msra.mxu0 0.0
      %775 = vmatpush.msra.mxu0 0.0
      %776 = vmatpush.msra.mxu0 0.0
      %777 = vmatpush.msra.mxu0 0.0
      %778 = vmatpush.msra.mxu0 0.0
      %779 = vmatpush.msra.mxu0 0.0
      %780 = vmatpush.msra.mxu0 0.0
      %781 = vmatpush.msra.mxu0 0.0
      %782 = vmatpush.msra.mxu0 0.0
      %783 = vmatpush.msra.mxu0 0.0
      %784 = vmatpush.msra.mxu0 0.0
      %785 = vmatpush.msra.mxu0 %v253
      %786 = vmatpush.msra.mxu0 %v252
      %787 = vmatmul.f32.gmra.mxu0 %v769
      %v788 = vpop.f32.mrf.mxu0
      %v789 = vadd.f32 %v766, %v788
      %790 = vdwg.mxu0
      %v791 = vadd.f32 %v789, %v309
      %v792 = vxor.u32 %v791, 2147483648
      %v793 = vmul.f32 %v792, 1.442695
      %v794 = vpow.pop %v793
      %v795 = vadd.f32 %v794, 1.0
      %v796 = vrcp.pop %v795
      %v797 = vmul.f32 %v795, %v796
      %v798 = vsub.f32 1.0, %v797
      %v799 = vmul.f32 %v796, %v798
      %v800 = vadd.f32 %v796, %v799
      %vm801 = vweird.f32 %v795
      %vm802 = vweird.f32 %v796
      %vm803 = vmor %vm801, %vm802
      %v804 = vsel %vm803, %v796, %v800
      %v805 = vand.u32 2147483647, %v795
      %vm806 = vcmp.eq.f32.partialorder %v805, 8.507059e+37
      %v807 = vand.u32 %v795, 2147483648
      %v808 = vor.u32 1.1754944e-38, %v807
      %v809 = vsel %vm806, %v808, %v804
      %v810 = vmul.f32 1.0, %v809
      %812 = vrot.lane.b32.xlu0 %v791, 32
      %v813 = vpop.permute.xlu0 %812
      %v815 = vmul.f32 %v810, %v813
      %817 = vrot.lane.b32.xlu0 %v815, 64
      %v818 = vpop.permute.xlu0 %817
      %v820 = vadd.f32 %v791, %v818
      %v821 = vtanh.pop %v820
      %v822 = vsub.f32 1.0, %v810
      %824 = vrot.lane.b32.xlu0 %v821, 96
      %v825 = vpop.permute.xlu0 %824
      %v827 = vmul.f32 %v822, %v825
      %828 = vrot.lane.b32.xlu0 %v744, 32
      %v829 = vpop.permute.xlu0 %828
      %v831 = vmul.f32 %v810, %v829
      %v832 = vadd.f32 %v827, %v831
      %834 = vrot.lane.b32.xlu0 %v832, 96
      %v835 = vpop.permute.xlu0 %834
      %837 = vst.msk [vmem:[%s249] sm:$0xff] %vm250, %v835
      %s838 = scalar_lea.vmem %s232, 48
      %v839 = vld [vmem:[%s838] sm:$0xff]
      %v840 = vld [vmem:[%s249] sm:$0xff]
      %v842 = vsel %vm250, %v840, 0
      %844 = vmatpush.msra.mxu0 0.0
      %845 = vmatpush.msra.mxu0 0.0
      %846 = vmatpush.msra.mxu0 0.0
      %847 = vmatpush.msra.mxu0 0.0
      %848 = vmatpush.msra.mxu0 0.0
      %849 = vmatpush.msra.mxu0 0.0
      %850 = vmatpush.msra.mxu0 0.0
      %851 = vmatpush.msra.mxu0 0.0
      %852 = vmatpush.msra.mxu0 0.0
      %853 = vmatpush.msra.mxu0 0.0
      %854 = vmatpush.msra.mxu0 0.0
      %855 = vmatpush.msra.mxu0 0.0
      %856 = vmatpush.msra.mxu0 %v257
      %857 = vmatpush.msra.mxu0 %v256
      %858 = vmatpush.msra.mxu0 %v255
      %859 = vmatpush.msra.mxu0 %v254
      %860 = vmatmul.f32.gmra.mxu0 %v842
      %v861 = vpop.f32.mrf.mxu0
      %v862 = vadd.f32 0.0, %v861
      %863 = vdwg.mxu0
      %v865 = vsel %vm284, %v839, 0
      %867 = vmatpush.msra.mxu0 0.0
      %868 = vmatpush.msra.mxu0 0.0
      %869 = vmatpush.msra.mxu0 0.0
      %870 = vmatpush.msra.mxu0 0.0
      %871 = vmatpush.msra.mxu0 0.0
      %872 = vmatpush.msra.mxu0 0.0
      %873 = vmatpush.msra.mxu0 0.0
      %874 = vmatpush.msra.mxu0 0.0
      %875 = vmatpush.msra.mxu0 0.0
      %876 = vmatpush.msra.mxu0 0.0
      %877 = vmatpush.msra.mxu0 0.0
      %878 = vmatpush.msra.mxu0 0.0
      %879 = vmatpush.msra.mxu0 0.0
      %880 = vmatpush.msra.mxu0 0.0
      %881 = vmatpush.msra.mxu0 %v253
      %882 = vmatpush.msra.mxu0 %v252
      %883 = vmatmul.f32.gmra.mxu0 %v865
      %v884 = vpop.f32.mrf.mxu0
      %v885 = vadd.f32 %v862, %v884
      %886 = vdwg.mxu0
      %v887 = vadd.f32 %v885, %v309
      %v888 = vxor.u32 %v887, 2147483648
      %v889 = vmul.f32 %v888, 1.442695
      %v890 = vpow.pop %v889
      %v891 = vadd.f32 %v890, 1.0
      %v892 = vrcp.pop %v891
      %v893 = vmul.f32 %v891, %v892
      %v894 = vsub.f32 1.0, %v893
      %v895 = vmul.f32 %v892, %v894
      %v896 = vadd.f32 %v892, %v895
      %vm897 = vweird.f32 %v891
      %vm898 = vweird.f32 %v892
      %vm899 = vmor %vm897, %vm898
      %v900 = vsel %vm899, %v892, %v896
      %v901 = vand.u32 2147483647, %v891
      %vm902 = vcmp.eq.f32.partialorder %v901, 8.507059e+37
      %v903 = vand.u32 %v891, 2147483648
      %v904 = vor.u32 1.1754944e-38, %v903
      %v905 = vsel %vm902, %v904, %v900
      %v906 = vmul.f32 1.0, %v905
      %908 = vrot.lane.b32.xlu0 %v887, 32
      %v909 = vpop.permute.xlu0 %908
      %v911 = vmul.f32 %v906, %v909
      %913 = vrot.lane.b32.xlu0 %v911, 64
      %v914 = vpop.permute.xlu0 %913
      %v916 = vadd.f32 %v887, %v914
      %v917 = vtanh.pop %v916
      %v918 = vsub.f32 1.0, %v906
      %920 = vrot.lane.b32.xlu0 %v917, 96
      %v921 = vpop.permute.xlu0 %920
      %v923 = vmul.f32 %v918, %v921
      %924 = vrot.lane.b32.xlu0 %v840, 32
      %v925 = vpop.permute.xlu0 %924
      %v927 = vmul.f32 %v906, %v925
      %v928 = vadd.f32 %v923, %v927
      %930 = vrot.lane.b32.xlu0 %v928, 96
      %v931 = vpop.permute.xlu0 %930
      %933 = vst.msk [vmem:[%s249] sm:$0xff] %vm250, %v931
      %s934 = scalar_lea.vmem %s232, 56
      %v935 = vld [vmem:[%s934] sm:$0xff]
      %v936 = vld [vmem:[%s249] sm:$0xff]
      %v938 = vsel %vm250, %v936, 0
      %940 = vmatpush.msra.mxu0 0.0
      %941 = vmatpush.msra.mxu0 0.0
      %942 = vmatpush.msra.mxu0 0.0
      %943 = vmatpush.msra.mxu0 0.0
      %944 = vmatpush.msra.mxu0 0.0
      %945 = vmatpush.msra.mxu0 0.0
      %946 = vmatpush.msra.mxu0 0.0
      %947 = vmatpush.msra.mxu0 0.0
      %948 = vmatpush.msra.mxu0 0.0
      %949 = vmatpush.msra.mxu0 0.0
      %950 = vmatpush.msra.mxu0 0.0
      %951 = vmatpush.msra.mxu0 0.0
      %952 = vmatpush.msra.mxu0 %v257
      %953 = vmatpush.msra.mxu0 %v256
      %954 = vmatpush.msra.mxu0 %v255
      %955 = vmatpush.msra.mxu0 %v254
      %956 = vmatmul.f32.gmra.mxu0 %v938
      %v957 = vpop.f32.mrf.mxu0
      %v958 = vadd.f32 0.0, %v957
      %959 = vdwg.mxu0
      %v961 = vsel %vm284, %v935, 0
      %963 = vmatpush.msra.mxu0 0.0
      %964 = vmatpush.msra.mxu0 0.0
      %965 = vmatpush.msra.mxu0 0.0
      %966 = vmatpush.msra.mxu0 0.0
      %967 = vmatpush.msra.mxu0 0.0
      %968 = vmatpush.msra.mxu0 0.0
      %969 = vmatpush.msra.mxu0 0.0
      %970 = vmatpush.msra.mxu0 0.0
      %971 = vmatpush.msra.mxu0 0.0
      %972 = vmatpush.msra.mxu0 0.0
      %973 = vmatpush.msra.mxu0 0.0
      %974 = vmatpush.msra.mxu0 0.0
      %975 = vmatpush.msra.mxu0 0.0
      %976 = vmatpush.msra.mxu0 0.0
      %977 = vmatpush.msra.mxu0 %v253
      %978 = vmatpush.msra.mxu0 %v252
      %979 = vmatmul.f32.gmra.mxu0 %v961
      %v980 = vpop.f32.mrf.mxu0
      %v981 = vadd.f32 %v958, %v980
      %982 = vdwg.mxu0
      %v983 = vadd.f32 %v981, %v309
      %v984 = vxor.u32 %v983, 2147483648
      %v985 = vmul.f32 %v984, 1.442695
      %v986 = vpow.pop %v985
      %v987 = vadd.f32 %v986, 1.0
      %v988 = vrcp.pop %v987
      %v989 = vmul.f32 %v987, %v988
      %v990 = vsub.f32 1.0, %v989
      %v991 = vmul.f32 %v988, %v990
      %v992 = vadd.f32 %v988, %v991
      %vm993 = vweird.f32 %v987
      %vm994 = vweird.f32 %v988
      %vm995 = vmor %vm993, %vm994
      %v996 = vsel %vm995, %v988, %v992
      %v997 = vand.u32 2147483647, %v987
      %vm998 = vcmp.eq.f32.partialorder %v997, 8.507059e+37
      %v999 = vand.u32 %v987, 2147483648
      %v1000 = vor.u32 1.1754944e-38, %v999
      %v1001 = vsel %vm998, %v1000, %v996
      %v1002 = vmul.f32 1.0, %v1001
      %1004 = vrot.lane.b32.xlu0 %v983, 32
      %v1005 = vpop.permute.xlu0 %1004
      %v1007 = vmul.f32 %v1002, %v1005
      %1009 = vrot.lane.b32.xlu0 %v1007, 64
      %v1010 = vpop.permute.xlu0 %1009
      %v1012 = vadd.f32 %v983, %v1010
      %v1013 = vtanh.pop %v1012
      %v1014 = vsub.f32 1.0, %v1002
      %1016 = vrot.lane.b32.xlu0 %v1013, 96
      %v1017 = vpop.permute.xlu0 %1016
      %v1019 = vmul.f32 %v1014, %v1017
      %1020 = vrot.lane.b32.xlu0 %v936, 32
      %v1021 = vpop.permute.xlu0 %1020
      %v1023 = vmul.f32 %v1002, %v1021
      %v1024 = vadd.f32 %v1019, %v1023
      %1026 = vrot.lane.b32.xlu0 %v1024, 96
      %v1027 = vpop.permute.xlu0 %1026
      %1029 = vst.msk [vmem:[%s249] sm:$0xff] %vm250, %v1027
      %s1030 = scalar_lea.vmem %s232, 64
      %v1031 = vld [vmem:[%s1030] sm:$0xff]
      %v1032 = vld [vmem:[%s249] sm:$0xff]
      %v1034 = vsel %vm250, %v1032, 0
      %1036 = vmatpush.msra.mxu0 0.0
      %1037 = vmatpush.msra.mxu0 0.0
      %1038 = vmatpush.msra.mxu0 0.0
      %1039 = vmatpush.msra.mxu0 0.0
      %1040 = vmatpush.msra.mxu0 0.0
      %1041 = vmatpush.msra.mxu0 0.0
      %1042 = vmatpush.msra.mxu0 0.0
      %1043 = vmatpush.msra.mxu0 0.0
      %1044 = vmatpush.msra.mxu0 0.0
      %1045 = vmatpush.msra.mxu0 0.0
      %1046 = vmatpush.msra.mxu0 0.0
      %1047 = vmatpush.msra.mxu0 0.0
      %1048 = vmatpush.msra.mxu0 %v257
      %1049 = vmatpush.msra.mxu0 %v256
      %1050 = vmatpush.msra.mxu0 %v255
      %1051 = vmatpush.msra.mxu0 %v254
      %1052 = vmatmul.f32.gmra.mxu0 %v1034
      %v1053 = vpop.f32.mrf.mxu0
      %v1054 = vadd.f32 0.0, %v1053
      %1055 = vdwg.mxu0
      %v1057 = vsel %vm284, %v1031, 0
      %1059 = vmatpush.msra.mxu0 0.0
      %1060 = vmatpush.msra.mxu0 0.0
      %1061 = vmatpush.msra.mxu0 0.0
      %1062 = vmatpush.msra.mxu0 0.0
      %1063 = vmatpush.msra.mxu0 0.0
      %1064 = vmatpush.msra.mxu0 0.0
      %1065 = vmatpush.msra.mxu0 0.0
      %1066 = vmatpush.msra.mxu0 0.0
      %1067 = vmatpush.msra.mxu0 0.0
      %1068 = vmatpush.msra.mxu0 0.0
      %1069 = vmatpush.msra.mxu0 0.0
      %1070 = vmatpush.msra.mxu0 0.0
      %1071 = vmatpush.msra.mxu0 0.0
      %1072 = vmatpush.msra.mxu0 0.0
      %1073 = vmatpush.msra.mxu0 %v253
      %1074 = vmatpush.msra.mxu0 %v252
      %1075 = vmatmul.f32.gmra.mxu0 %v1057
      %v1076 = vpop.f32.mrf.mxu0
      %v1077 = vadd.f32 %v1054, %v1076
      %1078 = vdwg.mxu0
      %v1079 = vadd.f32 %v1077, %v309
      %v1080 = vxor.u32 %v1079, 2147483648
      %v1081 = vmul.f32 %v1080, 1.442695
      %v1082 = vpow.pop %v1081
      %v1083 = vadd.f32 %v1082, 1.0
      %v1084 = vrcp.pop %v1083
      %v1085 = vmul.f32 %v1083, %v1084
      %v1086 = vsub.f32 1.0, %v1085
      %v1087 = vmul.f32 %v1084, %v1086
      %v1088 = vadd.f32 %v1084, %v1087
      %vm1089 = vweird.f32 %v1083
      %vm1090 = vweird.f32 %v1084
      %vm1091 = vmor %vm1089, %vm1090
      %v1092 = vsel %vm1091, %v1084, %v1088
      %v1093 = vand.u32 2147483647, %v1083
      %vm1094 = vcmp.eq.f32.partialorder %v1093, 8.507059e+37
      %v1095 = vand.u32 %v1083, 2147483648
      %v1096 = vor.u32 1.1754944e-38, %v1095
      %v1097 = vsel %vm1094, %v1096, %v1092
      %v1098 = vmul.f32 1.0, %v1097
      %1100 = vrot.lane.b32.xlu0 %v1079, 32
      %v1101 = vpop.permute.xlu0 %1100
      %v1103 = vmul.f32 %v1098, %v1101
      %1105 = vrot.lane.b32.xlu0 %v1103, 64
      %v1106 = vpop.permute.xlu0 %1105
      %v1108 = vadd.f32 %v1079, %v1106
      %v1109 = vtanh.pop %v1108
      %v1110 = vsub.f32 1.0, %v1098
      %1112 = vrot.lane.b32.xlu0 %v1109, 96
      %v1113 = vpop.permute.xlu0 %1112
      %v1115 = vmul.f32 %v1110, %v1113
      %1116 = vrot.lane.b32.xlu0 %v1032, 32
      %v1117 = vpop.permute.xlu0 %1116
      %v1119 = vmul.f32 %v1098, %v1117
      %v1120 = vadd.f32 %v1115, %v1119
      %1122 = vrot.lane.b32.xlu0 %v1120, 96
      %v1123 = vpop.permute.xlu0 %1122
      %1125 = vst.msk [vmem:[%s249] sm:$0xff] %vm250, %v1123
      %s1126 = scalar_lea.vmem %s232, 72
      %v1127 = vld [vmem:[%s1126] sm:$0xff]
      %v1128 = vld [vmem:[%s249] sm:$0xff]
      %v1130 = vsel %vm250, %v1128, 0
      %1132 = vmatpush.msra.mxu0 0.0
      %1133 = vmatpush.msra.mxu0 0.0
      %1134 = vmatpush.msra.mxu0 0.0
      %1135 = vmatpush.msra.mxu0 0.0
      %1136 = vmatpush.msra.mxu0 0.0
      %1137 = vmatpush.msra.mxu0 0.0
      %1138 = vmatpush.msra.mxu0 0.0
      %1139 = vmatpush.msra.mxu0 0.0
      %1140 = vmatpush.msra.mxu0 0.0
      %1141 = vmatpush.msra.mxu0 0.0
      %1142 = vmatpush.msra.mxu0 0.0
      %1143 = vmatpush.msra.mxu0 0.0
      %1144 = vmatpush.msra.mxu0 %v257
      %1145 = vmatpush.msra.mxu0 %v256
      %1146 = vmatpush.msra.mxu0 %v255
      %1147 = vmatpush.msra.mxu0 %v254
      %1148 = vmatmul.f32.gmra.mxu0 %v1130
      %v1149 = vpop.f32.mrf.mxu0
      %v1150 = vadd.f32 0.0, %v1149
      %1151 = vdwg.mxu0
      %v1153 = vsel %vm284, %v1127, 0
      %1155 = vmatpush.msra.mxu0 0.0
      %1156 = vmatpush.msra.mxu0 0.0
      %1157 = vmatpush.msra.mxu0 0.0
      %1158 = vmatpush.msra.mxu0 0.0
      %1159 = vmatpush.msra.mxu0 0.0
      %1160 = vmatpush.msra.mxu0 0.0
      %1161 = vmatpush.msra.mxu0 0.0
      %1162 = vmatpush.msra.mxu0 0.0
      %1163 = vmatpush.msra.mxu0 0.0
      %1164 = vmatpush.msra.mxu0 0.0
      %1165 = vmatpush.msra.mxu0 0.0
      %1166 = vmatpush.msra.mxu0 0.0
      %1167 = vmatpush.msra.mxu0 0.0
      %1168 = vmatpush.msra.mxu0 0.0
      %1169 = vmatpush.msra.mxu0 %v253
      %1170 = vmatpush.msra.mxu0 %v252
      %1171 = vmatmul.f32.gmra.mxu0 %v1153
      %v1172 = vpop.f32.mrf.mxu0
      %v1173 = vadd.f32 %v1150, %v1172
      %1174 = vdwg.mxu0
      %v1175 = vadd.f32 %v1173, %v309
      %v1176 = vxor.u32 %v1175, 2147483648
      %v1177 = vmul.f32 %v1176, 1.442695
      %v1178 = vpow.pop %v1177
      %v1179 = vadd.f32 %v1178, 1.0
      %v1180 = vrcp.pop %v1179
      %v1181 = vmul.f32 %v1179, %v1180
      %v1182 = vsub.f32 1.0, %v1181
      %v1183 = vmul.f32 %v1180, %v1182
      %v1184 = vadd.f32 %v1180, %v1183
      %vm1185 = vweird.f32 %v1179
      %vm1186 = vweird.f32 %v1180
      %vm1187 = vmor %vm1185, %vm1186
      %v1188 = vsel %vm1187, %v1180, %v1184
      %v1189 = vand.u32 2147483647, %v1179
      %vm1190 = vcmp.eq.f32.partialorder %v1189, 8.507059e+37
      %v1191 = vand.u32 %v1179, 2147483648
      %v1192 = vor.u32 1.1754944e-38, %v1191
      %v1193 = vsel %vm1190, %v1192, %v1188
      %v1194 = vmul.f32 1.0, %v1193
      %1196 = vrot.lane.b32.xlu0 %v1175, 32
      %v1197 = vpop.permute.xlu0 %1196
      %v1199 = vmul.f32 %v1194, %v1197
      %1201 = vrot.lane.b32.xlu0 %v1199, 64
      %v1202 = vpop.permute.xlu0 %1201
      %v1204 = vadd.f32 %v1175, %v1202
      %v1205 = vtanh.pop %v1204
      %v1206 = vsub.f32 1.0, %v1194
      %1208 = vrot.lane.b32.xlu0 %v1205, 96
      %v1209 = vpop.permute.xlu0 %1208
      %v1211 = vmul.f32 %v1206, %v1209
      %1212 = vrot.lane.b32.xlu0 %v1128, 32
      %v1213 = vpop.permute.xlu0 %1212
      %v1215 = vmul.f32 %v1194, %v1213
      %v1216 = vadd.f32 %v1211, %v1215
      %1218 = vrot.lane.b32.xlu0 %v1216, 96
      %v1219 = vpop.permute.xlu0 %1218
      %1221 = vst.msk [vmem:[%s249] sm:$0xff] %vm250, %v1219
      %p1222 = scmp.lt.s32.totalorder %s15, 1
      %s1223 = scalar_select %p1222, %s15, 1
      %s1224 = smul.addr %s1223, 8
      %s1225 = scalar_lea.vmem %s4, %s1224
      // Predicated region
      $region37: #{encoder_decoder_forward.2} parent=35 // pred_check
        %p1226 = pneg %p137
      $region38: #{encoder_decoder_forward.2} parent=35 // pred_check_branch
        %1228 = sbr.rel (%p1226) target = $region40
      $region39: #{encoder_decoder_forward.2} parent=35 // pred_region
        _
      $region40: #{encoder_decoder_forward.2} parent=35 // pred_fallthru
        _
    $region36: #{encoder_decoder_forward.2} parent=5 // pred_fallthru
      _
    %p1229 = scmp.le.s32.totalorder 2, %s10
    // Predicated region
    $region41: #{encoder_decoder_forward.2} parent=5 // pred_check
      %p1230 = pneg %p1229
    $region42: #{encoder_decoder_forward.2} parent=5 // pred_check_branch
      %1232 = sbr.rel (%p1230) target = $region44
    $region43: #{encoder_decoder_forward.2} parent=5 // pred_region
      %s1233 = ssub.s32 %s10, 2
      // Predicated region
      $region45: #{encoder_decoder_forward.2} parent=43 // pred_check
        %p1234 = pneg %p143
      $region46: #{encoder_decoder_forward.2} parent=43 // pred_check_branch
        %1236 = sbr.rel (%p1234) target = $region48
      $region47: #{encoder_decoder_forward.2} parent=43 // pred_region
        %p1237 = scmp.lt.s32.totalorder %s16, 1
        %s1238 = scalar_select %p1237, %s16, 1
        %s1239 = smul.addr %s1238, 8
        %s1240 = scalar_lea.vmem %s4, %s1239
      $region48: #{encoder_decoder_forward.2} parent=43 // pred_fallthru
        _
    $region44: #{encoder_decoder_forward.2} parent=5 // pred_fallthru
      _
  $region6: #{encoder_decoder_forward.2} parent=0 // loop_footer
    %s14 = sadd.s32 1, %s10
  $region7: #{encoder_decoder_forward.2} parent=0 // loop_footer_branch
    %9 = sbr.rel target = $region3
  $region8: #{encoder_decoder_forward.2} parent=0 // loop_exit
    _

</llo_original>
